<compile_context>
chip_gen: v7x
topology: tpu7x:2x2x1
jax: 0.10.0
libtpu: 0.0.40
codegen_flags: <defaults>
</compile_context>

<pallas_src>
import math

import jax
import jax.numpy as jnp
from jax import lax
from jax.experimental import pallas as pl
from jax.experimental.pallas import tpu as pltpu

# ----------------------------- physical constants ---------------------------
mm = 1e-3
um = 1e-6
nm = 1e-9

N_GRID = 64                  # square simulation grid (small, fits VMEM whole)
DELTA_X = 8.0 * um           # SLM / grid pixel pitch
WAVELENGTH = 1550.0 * nm     # source wavelength
Z_PROP = 37.0 * mm           # ASM propagation distance (37 * mm in the module)
TARGET_MODE = 2              # target_mode_nb=2 -> mode_parity == 'even'
PARITY_OFFSET = 0.0 if TARGET_MODE % 2 == 0 else math.pi

# TODO(synk): SLM.apply_phase_modulation_sigmoid / Source / ASMPropagation are
# external classes not shown in the module; the SLM modulation here is the
# standard sigmoid-binarized phase theta = pi*sigmoid(steepness*phi) (+ parity
# half-wave offset, num_terms=1, spacing=1) and ASM is the textbook angular
# spectrum transfer function with evanescent cutoff.


# ------------------------------ Pallas kernel -------------------------------
def _optical_kernel(steep_ref,           # SMEM (1,)       : steepness scalar
                    phase_ref,           # VMEM (N, 2N)    : SLM phase tiled [phi|phi]
                    field_ref,           # VMEM (1, N, 2N) : packed source [Fr|Fi]
                    aw_ref,              # VMEM (2N, N) bf16 : packed DFT LHS [Wr;Wi]
                    bw_ref,              # VMEM (N, 2N) bf16 : packed DFT RHS [Wr|Wi]
                    hr_ref, hi_ref,      # VMEM (N, N)     : ASM transfer fn * 1/N^2
                    out_ref):            # VMEM (1, N, 2N) : packed output [Or|Oi]
    n = N_GRID
    s = steep_ref[0]

    # --- SLM sigmoid phase modulation (lane-dense packed elementwise) ---
    phi = phase_ref[...]                                    # (N, 2N)
    sig = pl.reciprocal(1.0 + jnp.exp(-s * phi), approx=True)   # EUP, not VALU div
    theta = jnp.float32(math.pi) * sig + jnp.float32(PARITY_OFFSET)
    c = jnp.cos(theta)
    sn = jnp.sin(theta)

    f = field_ref[0]                                        # (N, 2N) = [Fr | Fi]
    f_swap = pltpu.roll(f, shift=n, axis=1)                 # [Fi | Fr]
    lane = lax.broadcasted_iota(jnp.int32, f.shape, 1)
    sign = jnp.where(lane < n, jnp.float32(-1.0), jnp.float32(1.0))
    # [Mr | Mi] : Mr = Fr*c - Fi*sn, Mi = Fr*sn + Fi*c   (field * exp(i*theta))
    m_packed = f * c + sign * f_swap * sn

    aw = aw_ref[...]                                        # (2N, N)  bf16
    bw = bw_ref[...]                                        # (N, 2N)  bf16

    def combine(cm):
        # cm = [[Ar@Br, Ar@Bi], [Ai@Br, Ai@Bi]]  (2N, 2N) f32
        tl = cm[:n, :n]
        tr = cm[:n, n:]
        bl = cm[n:, :n]
        br = cm[n:, n:]
        return tl - br, tr + bl                             # (real, imag)

    def dft2(x_packed_bf16):
        # 2-D DFT  W @ X @ W  as two fused complex matmuls (one MXU dot each).
        c1 = jnp.dot(aw, x_packed_bf16, preferred_element_type=jnp.float32)
        tr_, ti_ = combine(c1)
        a_t = jnp.concatenate([tr_, ti_], axis=0).astype(jnp.bfloat16)
        c2 = jnp.dot(a_t, bw, preferred_element_type=jnp.float32)
        return combine(c2)

    # --- forward 2-D DFT of the modulated field ---
    ur, ui = dft2(m_packed.astype(jnp.bfloat16))

    # --- ASM transfer function (1/N^2 IFFT normalization pre-folded into H) ---
    hr = hr_ref[...]
    hi = hi_ref[...]
    pr = ur * hr - ui * hi
    pi_ = ur * hi + ui * hr

    # --- inverse 2-D DFT via conjugation: IDFT2(P) = conj(DFT2(conj(P)))/N^2 ---
    q_packed = jnp.concatenate([pr, -pi_], axis=1).astype(jnp.bfloat16)
    sr, si = dft2(q_packed)

    # lane-dense packed output [Re | Im]  -> unmasked 128-wide stores
    out_ref[0] = jnp.concatenate([sr, -si], axis=1)


# ------------------------------ JAX wrapper ----------------------------------
_CONSTS = None


def _constants():
    """Packed bf16 DFT matrices and ASM transfer fn (1/N^2 folded in). Built once."""
    global _CONSTS
    if _CONSTS is None:
        n = N_GRID
        idx = jnp.arange(n, dtype=jnp.float32)
        ang = (-2.0 * math.pi / n) * jnp.outer(idx, idx)
        w_r = jnp.cos(ang).astype(jnp.float32)
        w_i = jnp.sin(ang).astype(jnp.float32)
        a_w = jnp.concatenate([w_r, w_i], axis=0).astype(jnp.bfloat16)   # (2N, N)
        b_w = jnp.concatenate([w_r, w_i], axis=1).astype(jnp.bfloat16)   # (N, 2N)

        fx = jnp.fft.fftfreq(n, d=DELTA_X)                   # fft-ordered freqs
        FX, FY = jnp.meshgrid(fx, fx, indexing="xy")
        k = 2.0 * math.pi / WAVELENGTH
        kz2 = k * k - (2.0 * math.pi * FX) ** 2 - (2.0 * math.pi * FY) ** 2
        mask = (kz2 > 0).astype(jnp.float32)                 # evanescent cutoff
        kz = jnp.sqrt(jnp.maximum(kz2, 0.0))
        scale = 1.0 / (n * n)                                # IFFT norm (exact pow2)
        h_r = (jnp.cos(kz * Z_PROP) * mask * scale).astype(jnp.float32)
        h_i = (jnp.sin(kz * Z_PROP) * mask * scale).astype(jnp.float32)
        _CONSTS = (a_w, b_w, h_r, h_i)
    return _CONSTS


def optical_system_forward(source_real, source_imag, slm_phase, epoch):
    """OpticalSystem.forward: SLM sigmoid modulation + ASM propagation.

    Accepts a single (N, N) field or a batch (B, N, N); batch elements run on a
    "parallel" grid axis (both TensorCores on v7x).
    """
    squeeze = source_real.ndim == 2
    if squeeze:
        source_real = source_real[None]
        source_imag = source_imag[None]
    b, n = source_real.shape[0], N_GRID

    a_w, b_w, h_r, h_i = _constants()
    steep = jnp.asarray([2.0 + epoch / 200.0], dtype=jnp.float32)
    field_packed = jnp.concatenate(
        [source_real, source_imag], axis=-1).astype(jnp.float32)       # (B, N, 2N)
    phase_packed = jnp.concatenate(
        [slm_phase, slm_phase], axis=-1).astype(jnp.float32)           # (N, 2N)

    out_packed = pl.pallas_call(
        _optical_kernel,
        out_shape=jax.ShapeDtypeStruct((b, n, 2 * n), jnp.float32),
        grid=(b,),
        in_specs=[
            pl.BlockSpec(memory_space=pltpu.MemorySpace.SMEM),          # steepness
            pl.BlockSpec((n, 2 * n), lambda i: (0, 0)),                 # phase
            pl.BlockSpec((1, n, 2 * n), lambda i: (i, 0, 0)),           # field batch
            pl.BlockSpec((2 * n, n), lambda i: (0, 0)),                 # packed W (LHS)
            pl.BlockSpec((n, 2 * n), lambda i: (0, 0)),                 # packed W (RHS)
            pl.BlockSpec((n, n), lambda i: (0, 0)),                     # H real
            pl.BlockSpec((n, n), lambda i: (0, 0)),                     # H imag
        ],
        out_specs=pl.BlockSpec((1, n, 2 * n), lambda i: (i, 0, 0)),
        compiler_params=pltpu.CompilerParams(
            dimension_semantics=("parallel",)),
    )(steep, phase_packed, field_packed, a_w, b_w, h_r, h_i)

    out = lax.complex(out_packed[..., :n], out_packed[..., n:])
    return out[0] if squeeze else out


# pure-JAX reference (FFT-based) for a sanity check
def _reference_forward(source_real, source_imag, slm_phase, epoch):
    _, _, h_r, h_i = _constants()
    H = lax.complex(h_r, h_i) * float(N_GRID * N_GRID)    # undo folded 1/N^2 (exact)
    s = 2.0 + epoch / 200.0
    theta = math.pi / (1.0 + jnp.exp(-s * slm_phase)) + PARITY_OFFSET
    field = lax.complex(source_real, source_imag) * jnp.exp(1j * theta)
    return jnp.fft.ifft2(jnp.fft.fft2(field) * H)


if __name__ == "__main__":
    key = jax.random.PRNGKey(0)
    k_phase, _ = jax.random.split(key)
    n = N_GRID

    # deterministic Gaussian source beams on the simulation XY grid (batch of 2)
    x = (jnp.arange(n, dtype=jnp.float32) - (n - 1) / 2.0) * DELTA_X
    X, Y = jnp.meshgrid(x, x, indexing="xy")
    w0 = 0.12 * n * DELTA_X
    beam0 = jnp.exp(-(X ** 2 + Y ** 2) / (w0 ** 2))
    beam1 = jnp.exp(-((X - 2.0 * DELTA_X) ** 2 + Y ** 2) / (w0 ** 2))
    source_real = jnp.stack([beam0, beam1], axis=0).astype(jnp.float32)   # (2, N, N)
    source_imag = jnp.zeros((2, n, n), dtype=jnp.float32)

    # deterministic SLM phase parameter init (nn.Parameter in the module)
    slm_phase = 0.1 * jax.random.normal(k_phase, (n, n), dtype=jnp.float32)

    out = optical_system_forward(source_real, source_imag, slm_phase, epoch=0)
    out = jax.block_until_ready(out)

    # loose sanity check against FFT reference (bf16 DFT-matmul vs f32 FFT)
    ref = _reference_forward(source_real, source_imag, slm_phase, epoch=0)
    rel_err = jnp.linalg.norm(out - ref) / (jnp.linalg.norm(ref) + 1e-12)
    assert float(rel_err) < 5e-2, f"relative error too large: {float(rel_err)}"

    print("KERNEL_OK")
</pallas_src>

<mosaic_0001>
module attributes {stable_mosaic.version = 11 : i64} {
  func.func @_optical_kernel(%arg0: i32, %arg1: memref<1xf32, #tpu.memory_space<smem>>, %arg2: memref<64x128xf32, #tpu.memory_space<vmem>>, %arg3: memref<1x64x128xf32, #tpu.memory_space<vmem>>, %arg4: memref<128x64xbf16, #tpu.memory_space<vmem>>, %arg5: memref<64x128xbf16, #tpu.memory_space<vmem>>, %arg6: memref<64x64xf32, #tpu.memory_space<vmem>>, %arg7: memref<64x64xf32, #tpu.memory_space<vmem>>, %arg8: memref<1x64x128xf32, #tpu.memory_space<vmem>>) attributes {dimension_semantics = [#tpu.dimension_semantics<parallel>], iteration_bounds = array<i64: 2>, scalar_prefetch = 0 : i64, scratch_operands = 0 : i64, tpu.core_type = #tpu.core_type<tc>, window_params = [{transform_indices = @transform_0, window_bounds = array<i64: 1>}, {pipeline_mode = #tpu.pipeline_mode<synchronous>, transform_indices = @transform_1, window_bounds = array<i64: 64, 128>}, {transform_indices = @transform_2, window_bounds = array<i64: 1, 64, 128>}, {pipeline_mode = #tpu.pipeline_mode<synchronous>, transform_indices = @transform_3, window_bounds = array<i64: 128, 64>}, {pipeline_mode = #tpu.pipeline_mode<synchronous>, transform_indices = @transform_4, window_bounds = array<i64: 64, 128>}, {pipeline_mode = #tpu.pipeline_mode<synchronous>, transform_indices = @transform_5, window_bounds = array<i64: 64, 64>}, {pipeline_mode = #tpu.pipeline_mode<synchronous>, transform_indices = @transform_6, window_bounds = array<i64: 64, 64>}, {transform_indices = @transform_7, window_bounds = array<i64: 1, 64, 128>}]} {
    %c0 = arith.constant 0 : index
    %0 = memref.load %arg1[%c0] : memref<1xf32, #tpu.memory_space<smem>>
    %c0_0 = arith.constant 0 : index
    %c0_1 = arith.constant 0 : index
    %1 = vector.load %arg2[%c0_0, %c0_1] : memref<64x128xf32, #tpu.memory_space<vmem>>, vector<64x128xf32>
    %cst = arith.constant 0.000000e+00 : f32
    %2 = arith.subf %cst, %0 : f32
    %3 = vector.broadcast %2 : f32 to vector<64x128xf32>
    %4 = arith.mulf %3, %1 : vector<64x128xf32>
    %5 = math.exp %4 : vector<64x128xf32>
    %cst_2 = arith.constant 1.000000e+00 : f32
    %6 = vector.broadcast %cst_2 : f32 to vector<64x128xf32>
    %7 = arith.addf %6, %5 : vector<64x128xf32>
    %8 = tpu.reciprocal %7 {approx = true} : vector<64x128xf32> -> vector<64x128xf32>
    %cst_3 = arith.constant 3.14159274 : f32
    %9 = vector.broadcast %cst_3 : f32 to vector<64x128xf32>
    %10 = arith.mulf %9, %8 : vector<64x128xf32>
    %cst_4 = arith.constant 0.000000e+00 : f32
    %11 = vector.broadcast %cst_4 : f32 to vector<64x128xf32>
    %12 = arith.addf %10, %11 : vector<64x128xf32>
    %13 = math.cos %12 : vector<64x128xf32>
    %14 = math.sin %12 : vector<64x128xf32>
    %c0_5 = arith.constant 0 : index
    %c0_6 = arith.constant 0 : index
    %c0_7 = arith.constant 0 : index
    %15 = vector.load %arg3[%c0_5, %c0_6, %c0_7] : memref<1x64x128xf32, #tpu.memory_space<vmem>>, vector<1x64x128xf32>
    %16 = vector.shape_cast %15 : vector<1x64x128xf32> to vector<64x128xf32>
    %c64_i32 = arith.constant 64 : i32
    %17 = tpu.dynamic_rotate %16 by %c64_i32 dim 1 : vector<64x128xf32>, i32 -> vector<64x128xf32>
    %18 = tpu.iota {dimensions = array<i32: 1>} : vector<64x128xi32>
    %c64_i32_8 = arith.constant 64 : i32
    %19 = vector.broadcast %c64_i32_8 : i32 to vector<64x128xi32>
    %20 = arith.cmpi slt, %18, %19 : vector<64x128xi32>
    %cst_9 = arith.constant -1.000000e+00 : f32
    %cst_10 = arith.constant 1.000000e+00 : f32
    %21 = vector.broadcast %cst_9 : f32 to vector<64x128xf32>
    %22 = vector.broadcast %cst_10 : f32 to vector<64x128xf32>
    %23 = arith.select %20, %21, %22 : vector<64x128xi1>, vector<64x128xf32>
    %24 = arith.mulf %16, %13 : vector<64x128xf32>
    %25 = arith.mulf %23, %17 : vector<64x128xf32>
    %26 = arith.mulf %25, %14 : vector<64x128xf32>
    %27 = arith.addf %24, %26 : vector<64x128xf32>
    %c0_11 = arith.constant 0 : index
    %c0_12 = arith.constant 0 : index
    %28 = vector.load %arg4[%c0_11, %c0_12] : memref<128x64xbf16, #tpu.memory_space<vmem>>, vector<128x64xbf16>
    %c0_13 = arith.constant 0 : index
    %c0_14 = arith.constant 0 : index
    %29 = vector.load %arg5[%c0_13, %c0_14] : memref<64x128xbf16, #tpu.memory_space<vmem>>, vector<64x128xbf16>
    %30 = arith.truncf %27 : vector<64x128xf32> to vector<64x128xbf16>
    %cst_15 = arith.constant dense<0.000000e+00> : vector<128x128xf32>
    %31 = tpu.matmul %28, %30, %cst_15 {dimension_numbers = #tpu.dot_dimension_numbers<[1], [0], [0], [1], [0, 0, 1, 1], [], []>} : vector<128x64xbf16>, vector<64x128xbf16>, vector<128x128xf32> -> vector<128x128xf32>
    %32 = vector.extract_strided_slice %31 {offsets = [0, 0], sizes = [64, 64], strides = [1, 1]} : vector<128x128xf32> to vector<64x64xf32>
    %33 = vector.extract_strided_slice %31 {offsets = [0, 64], sizes = [64, 64], strides = [1, 1]} : vector<128x128xf32> to vector<64x64xf32>
    %34 = vector.extract_strided_slice %31 {offsets = [64, 0], sizes = [64, 64], strides = [1, 1]} : vector<128x128xf32> to vector<64x64xf32>
    %35 = vector.extract_strided_slice %31 {offsets = [64, 64], sizes = [64, 64], strides = [1, 1]} : vector<128x128xf32> to vector<64x64xf32>
    %36 = arith.subf %32, %35 : vector<64x64xf32>
    %37 = arith.addf %33, %34 : vector<64x64xf32>
    %38 = tpu.concatenate %36, %37 in 0 : vector<64x64xf32>, vector<64x64xf32> -> vector<128x64xf32>
    %39 = arith.truncf %38 : vector<128x64xf32> to vector<128x64xbf16>
    %cst_16 = arith.constant dense<0.000000e+00> : vector<128x128xf32>
    %40 = tpu.matmul %39, %29, %cst_16 {dimension_numbers = #tpu.dot_dimension_numbers<[1], [0], [0], [1], [0, 0, 1, 1], [], []>} : vector<128x64xbf16>, vector<64x128xbf16>, vector<128x128xf32> -> vector<128x128xf32>
    %41 = vector.extract_strided_slice %40 {offsets = [0, 0], sizes = [64, 64], strides = [1, 1]} : vector<128x128xf32> to vector<64x64xf32>
    %42 = vector.extract_strided_slice %40 {offsets = [0, 64], sizes = [64, 64], strides = [1, 1]} : vector<128x128xf32> to vector<64x64xf32>
    %43 = vector.extract_strided_slice %40 {offsets = [64, 0], sizes = [64, 64], strides = [1, 1]} : vector<128x128xf32> to vector<64x64xf32>
    %44 = vector.extract_strided_slice %40 {offsets = [64, 64], sizes = [64, 64], strides = [1, 1]} : vector<128x128xf32> to vector<64x64xf32>
    %45 = arith.subf %41, %44 : vector<64x64xf32>
    %46 = arith.addf %42, %43 : vector<64x64xf32>
    %c0_17 = arith.constant 0 : index
    %c0_18 = arith.constant 0 : index
    %47 = vector.load %arg6[%c0_17, %c0_18] : memref<64x64xf32, #tpu.memory_space<vmem>>, vector<64x64xf32>
    %c0_19 = arith.constant 0 : index
    %c0_20 = arith.constant 0 : index
    %48 = vector.load %arg7[%c0_19, %c0_20] : memref<64x64xf32, #tpu.memory_space<vmem>>, vector<64x64xf32>
    %49 = arith.mulf %45, %47 : vector<64x64xf32>
    %50 = arith.mulf %46, %48 : vector<64x64xf32>
    %51 = arith.subf %49, %50 : vector<64x64xf32>
    %52 = arith.mulf %45, %48 : vector<64x64xf32>
    %53 = arith.mulf %46, %47 : vector<64x64xf32>
    %54 = arith.addf %52, %53 : vector<64x64xf32>
    %cst_21 = arith.constant 0.000000e+00 : f32
    %55 = vector.broadcast %cst_21 : f32 to vector<64x64xf32>
    %56 = arith.subf %55, %54 : vector<64x64xf32>
    %57 = tpu.concatenate %51, %56 in 1 : vector<64x64xf32>, vector<64x64xf32> -> vector<64x128xf32>
    %58 = arith.truncf %57 : vector<64x128xf32> to vector<64x128xbf16>
    %cst_22 = arith.constant dense<0.000000e+00> : vector<128x128xf32>
    %59 = tpu.matmul %28, %58, %cst_22 {dimension_numbers = #tpu.dot_dimension_numbers<[1], [0], [0], [1], [0, 0, 1, 1], [], []>} : vector<128x64xbf16>, vector<64x128xbf16>, vector<128x128xf32> -> vector<128x128xf32>
    %60 = vector.extract_strided_slice %59 {offsets = [0, 0], sizes = [64, 64], strides = [1, 1]} : vector<128x128xf32> to vector<64x64xf32>
    %61 = vector.extract_strided_slice %59 {offsets = [0, 64], sizes = [64, 64], strides = [1, 1]} : vector<128x128xf32> to vector<64x64xf32>
    %62 = vector.extract_strided_slice %59 {offsets = [64, 0], sizes = [64, 64], strides = [1, 1]} : vector<128x128xf32> to vector<64x64xf32>
    %63 = vector.extract_strided_slice %59 {offsets = [64, 64], sizes = [64, 64], strides = [1, 1]} : vector<128x128xf32> to vector<64x64xf32>
    %64 = arith.subf %60, %63 : vector<64x64xf32>
    %65 = arith.addf %61, %62 : vector<64x64xf32>
    %66 = tpu.concatenate %64, %65 in 0 : vector<64x64xf32>, vector<64x64xf32> -> vector<128x64xf32>
    %67 = arith.truncf %66 : vector<128x64xf32> to vector<128x64xbf16>
    %cst_23 = arith.constant dense<0.000000e+00> : vector<128x128xf32>
    %68 = tpu.matmul %67, %29, %cst_23 {dimension_numbers = #tpu.dot_dimension_numbers<[1], [0], [0], [1], [0, 0, 1, 1], [], []>} : vector<128x64xbf16>, vector<64x128xbf16>, vector<128x128xf32> -> vector<128x128xf32>
    %69 = vector.extract_strided_slice %68 {offsets = [0, 0], sizes = [64, 64], strides = [1, 1]} : vector<128x128xf32> to vector<64x64xf32>
    %70 = vector.extract_strided_slice %68 {offsets = [0, 64], sizes = [64, 64], strides = [1, 1]} : vector<128x128xf32> to vector<64x64xf32>
    %71 = vector.extract_strided_slice %68 {offsets = [64, 0], sizes = [64, 64], strides = [1, 1]} : vector<128x128xf32> to vector<64x64xf32>
    %72 = vector.extract_strided_slice %68 {offsets = [64, 64], sizes = [64, 64], strides = [1, 1]} : vector<128x128xf32> to vector<64x64xf32>
    %73 = arith.subf %69, %72 : vector<64x64xf32>
    %74 = arith.addf %70, %71 : vector<64x64xf32>
    %cst_24 = arith.constant 0.000000e+00 : f32
    %75 = vector.broadcast %cst_24 : f32 to vector<64x64xf32>
    %76 = arith.subf %75, %74 : vector<64x64xf32>
    %77 = tpu.concatenate %73, %76 in 1 : vector<64x64xf32>, vector<64x64xf32> -> vector<64x128xf32>
    %c0_25 = arith.constant 0 : index
    %c0_26 = arith.constant 0 : index
    %c0_27 = arith.constant 0 : index
    %78 = vector.load %arg8[%c0_25, %c0_26, %c0_27] : memref<1x64x128xf32, #tpu.memory_space<vmem>>, vector<1x64x128xf32>
    %79 = vector.shape_cast %78 : vector<1x64x128xf32> to vector<64x128xf32>
    %80 = vector.shape_cast %77 : vector<64x128xf32> to vector<1x64x128xf32>
    tpu.vector_store %arg8[%c0_25, %c0_26, %c0_27], %80 {strides = array<i32>} : memref<1x64x128xf32, #tpu.memory_space<vmem>>, vector<1x64x128xf32>,
    return
  }
  func.func @transform_0(%arg0: i32) -> i32 {
    %c0_i32 = arith.constant 0 : i32
    %c0_i32_0 = arith.constant 0 : i32
    return %c0_i32 : i32
  }
  func.func @transform_1(%arg0: i32) -> (i32, i32) {
    %c0_i32 = arith.constant 0 : i32
    %c0_i32_0 = arith.constant 0 : i32
    %c0_i32_1 = arith.constant 0 : i32
    return %c0_i32, %c0_i32_0 : i32, i32
  }
  func.func @transform_2(%arg0: i32) -> (i32, i32, i32) {
    %c0_i32 = arith.constant 0 : i32
    %c0_i32_0 = arith.constant 0 : i32
    %c0_i32_1 = arith.constant 0 : i32
    return %arg0, %c0_i32, %c0_i32_0 : i32, i32, i32
  }
  func.func @transform_3(%arg0: i32) -> (i32, i32) {
    %c0_i32 = arith.constant 0 : i32
    %c0_i32_0 = arith.constant 0 : i32
    %c0_i32_1 = arith.constant 0 : i32
    return %c0_i32, %c0_i32_0 : i32, i32
  }
  func.func @transform_4(%arg0: i32) -> (i32, i32) {
    %c0_i32 = arith.constant 0 : i32
    %c0_i32_0 = arith.constant 0 : i32
    %c0_i32_1 = arith.constant 0 : i32
    return %c0_i32, %c0_i32_0 : i32, i32
  }
  func.func @transform_5(%arg0: i32) -> (i32, i32) {
    %c0_i32 = arith.constant 0 : i32
    %c0_i32_0 = arith.constant 0 : i32
    %c0_i32_1 = arith.constant 0 : i32
    return %c0_i32, %c0_i32_0 : i32, i32
  }
  func.func @transform_6(%arg0: i32) -> (i32, i32) {
    %c0_i32 = arith.constant 0 : i32
    %c0_i32_0 = arith.constant 0 : i32
    %c0_i32_1 = arith.constant 0 : i32
    return %c0_i32, %c0_i32_0 : i32, i32
  }
  func.func @transform_7(%arg0: i32) -> (i32, i32, i32) {
    %c0_i32 = arith.constant 0 : i32
    %c0_i32_0 = arith.constant 0 : i32
    %c0_i32_1 = arith.constant 0 : i32
    return %arg0, %c0_i32, %c0_i32_0 : i32, i32, i32
  }
}

</mosaic_0001>

<llo_original>
// kernel: tpu_custom_call.1
$region0: #{tpu_custom_call.1}
  #allocation0 [shape = 'u32[]', space=smem, size = 0x4, offset = 0x4, fixed_abs, tag = 'smem constant byte address 0x4 - core index']
  #allocation1 [shape = 'u32[144,128]{1,0:T(1,128)}', space=vmem, size = 0x12000, scoped, tag = 'internal scratch']
  #allocation2 [shape = 'f32[1]{0:T(128)S(6)}', space=smem, size = 0x200, scoped, tag = 'scoped memory for tpu_custom_call.1']
  %s0 = inlined_call_operand.<no memory space> [shape: f32[1], index: 0, kind: input, shape index: {}]
  %s1 = inlined_call_operand.vmem [shape: f32[64,128], index: 1, kind: input, shape index: {}]
  %s2 = inlined_call_operand.hbm [shape: f32[2,64,128], index: 2, kind: input, shape index: {}]
  %s3 = inlined_call_operand.vmem [shape: bf16[128,64], index: 3, kind: input, shape index: {}]
  %s4 = inlined_call_operand.vmem [shape: bf16[64,128], index: 4, kind: input, shape index: {}]
  %s5 = inlined_call_operand.hbm [shape: f32[64,64], index: 5, kind: input, shape index: {}]
  %s6 = inlined_call_operand.hbm [shape: f32[64,64], index: 6, kind: input, shape index: {}]
  %s7 = inlined_call_operand.hbm [shape: f32[2,64,128], index: 7, kind: output, shape index: {}]
  %s8 = sld [smem:[#allocation0]]
  $region73: #{tpu_custom_call.1} parent=0
    _
  %s10 = ssub.s32 1, %s8
  %s11 = scalar_select 0, %s10, %s8
  %12 = sst [smem:[#allocation2]] %s0
  $region1: #{tpu_custom_call.1} parent=0
    #allocation3 [shape = 'u8[65536]{0}', space=vmem, size = 0x10000, scoped, tag = 'input window, operand 2']
    #allocation4 [shape = 's32[2]{0}', space=sflag, size = 0x8, scoped, tag = 'scoped memory for tpu_custom_call.1']
    #allocation5 [shape = 's32[2]{0}', space=sflag, size = 0x8, scoped, tag = 'scoped memory for tpu_custom_call.1']
    #allocation6 [shape = 'u8[32768]{0}', space=vmem, size = 0x8000, scoped, tag = 'input window, operand 5, single buffered']
    #allocation7 [shape = 's32[1]{0}', space=sflag, size = 0x4, scoped, tag = 'scoped memory for tpu_custom_call.1']
    #allocation8 [shape = 'u8[32768]{0}', space=vmem, size = 0x8000, scoped, tag = 'input window, operand 6, single buffered']
    #allocation9 [shape = 'u8[65536]{0}', space=vmem, size = 0x10000, scoped, tag = 'output window, operand 0']
    %13 = vsyncpa [#allocation4], 0
    %s14 = scalar_lea.sflag [#allocation4], 1
    %15 = vsyncpa %s14, 0
    %16 = vsyncpa [#allocation7], 0
    %17 = vsyncpa [#allocation5], 0
    %s18 = scalar_lea.sflag [#allocation5], 1
    %19 = vsyncpa %s18, 0
    loop: start=0, step=1, limit=4
    $region2: #{tpu_custom_call.1} parent=1 // loop_pre_header
      _
    $region3: #{tpu_custom_call.1} parent=1 // loop_header
      %s21 = sphi 0, %s25
      %p22 = scmp.ge.s32.totalorder %s21, 4
      %s29 = sphi 0, %s29
      %s31 = sphi 0, %s29
      %s32 = sphi 0, %s31
      %s46 = sphi 0, %s32
      %s50 = sphi 0, %s50
      %s52 = sphi 0, %s50
      %s53 = sphi 0, %s52
      %s67 = sphi 0, %s53
      %s73 = sphi 0, %s75
      %s76 = sphi 0, %s73
      %s77 = sphi 0, %s76
      %s93 = sphi 0, %s77
      %s97 = sphi 0, %s97
      %s99 = sphi 0, %s97
      %s100 = sphi 0, %s99
      %s114 = sphi 0, %s100
      %s118 = sphi 0, %s118
      %s120 = sphi 0, %s118
      %s121 = sphi 0, %s120
      %s135 = sphi 0, %s121
      %s139 = sphi 0, %s139
      %s141 = sphi 0, %s139
      %s142 = sphi 0, %s141
      %s156 = sphi 0, %s142
      %s160 = sphi 0, %s160
      %s162 = sphi 0, %s160
      %s163 = sphi 0, %s162
      %s177 = sphi 0, %s163
      %s183 = sphi 0, %s185
      %s186 = sphi 0, %s183
      %s187 = sphi 0, %s186
      %s203 = sphi 0, %s187
    $region4: #{tpu_custom_call.1} parent=1 // loop_header_branch
      %24 = sbr.rel (%p22) target = $region8
    $region5: #{tpu_custom_call.1} parent=1 // loop_body
      %s26 = ssub.s32 %s21, 1
      %s27 = ssub.s32 %s21, 2
      %s28 = sadd.s32 %s21, 1
      %s30 = sadd.s32 %s29, 1
      %p33 = scmp.eq.s32.totalorder %s21, 1
      %p34 = scmp.ne.s32.totalorder %s29, %s31
      %p35 = scmp.eq.s32.totalorder %s21, 0
      %p36 = por %p34, %p35
      %p37 = scmp.ne.s32.totalorder %s29, %s31
      %p38 = scmp.eq.s32.totalorder %s26, 1
      %p39 = por %p37, %p38
      %p40 = scmp.ne.s32.totalorder %s31, %s32
      %p41 = scmp.eq.s32.totalorder %s26, 0
      %p42 = por %p40, %p41
      %p43 = scmp.ne.s32.totalorder %s31, %s32
      %p44 = scmp.eq.s32.totalorder %s27, 1
      %p45 = por %p43, %p44
      %p47 = scmp.ne.s32.totalorder %s32, %s46
      %p48 = scmp.eq.s32.totalorder %s27, 0
      %p49 = por %p47, %p48
      %s51 = sadd.s32 %s50, 1
      %p54 = scmp.eq.s32.totalorder %s21, 1
      %p55 = scmp.ne.s32.totalorder %s50, %s52
      %p56 = scmp.eq.s32.totalorder %s21, 0
      %p57 = por %p55, %p56
      %p58 = scmp.ne.s32.totalorder %s50, %s52
      %p59 = scmp.eq.s32.totalorder %s26, 1
      %p60 = por %p58, %p59
      %p61 = scmp.ne.s32.totalorder %s52, %s53
      %p62 = scmp.eq.s32.totalorder %s26, 0
      %p63 = por %p61, %p62
      %p64 = scmp.ne.s32.totalorder %s52, %s53
      %p65 = scmp.eq.s32.totalorder %s27, 1
      %p66 = por %p64, %p65
      %p68 = scmp.ne.s32.totalorder %s53, %s67
      %p69 = scmp.eq.s32.totalorder %s27, 0
      %p70 = por %p68, %p69
      %s71 = ssub.s32 %s21, %s28
      %p72 = scmp.eq.s32.totalorder %s71, 0
      %s74 = sadd.s32 %s73, 1
      %s75 = scalar_select %p72, %s73, %s74
      %p78 = pneg %p72
      %p79 = scmp.eq.s32.totalorder %s21, 1
      %p80 = por %p78, %p79
      %p81 = scmp.ne.s32.totalorder %s73, %s76
      %p82 = scmp.eq.s32.totalorder %s21, 0
      %p83 = por %p81, %p82
      %p84 = scmp.ne.s32.totalorder %s73, %s76
      %p85 = scmp.eq.s32.totalorder %s26, 1
      %p86 = por %p84, %p85
      %p87 = scmp.ne.s32.totalorder %s76, %s77
      %p88 = scmp.eq.s32.totalorder %s26, 0
      %p89 = por %p87, %p88
      %p90 = scmp.ne.s32.totalorder %s76, %s77
      %p91 = scmp.eq.s32.totalorder %s27, 1
      %p92 = por %p90, %p91
      %p94 = scmp.ne.s32.totalorder %s77, %s93
      %p95 = scmp.eq.s32.totalorder %s27, 0
      %p96 = por %p94, %p95
      %s98 = sadd.s32 %s97, 1
      %p101 = scmp.eq.s32.totalorder %s21, 1
      %p102 = scmp.ne.s32.totalorder %s97, %s99
      %p103 = scmp.eq.s32.totalorder %s21, 0
      %p104 = por %p102, %p103
      %p105 = scmp.ne.s32.totalorder %s97, %s99
      %p106 = scmp.eq.s32.totalorder %s26, 1
      %p107 = por %p105, %p106
      %p108 = scmp.ne.s32.totalorder %s99, %s100
      %p109 = scmp.eq.s32.totalorder %s26, 0
      %p110 = por %p108, %p109
      %p111 = scmp.ne.s32.totalorder %s99, %s100
      %p112 = scmp.eq.s32.totalorder %s27, 1
      %p113 = por %p111, %p112
      %p115 = scmp.ne.s32.totalorder %s100, %s114
      %p116 = scmp.eq.s32.totalorder %s27, 0
      %p117 = por %p115, %p116
      %s119 = sadd.s32 %s118, 1
      %p122 = scmp.eq.s32.totalorder %s21, 1
      %p123 = scmp.ne.s32.totalorder %s118, %s120
      %p124 = scmp.eq.s32.totalorder %s21, 0
      %p125 = por %p123, %p124
      %p126 = scmp.ne.s32.totalorder %s118, %s120
      %p127 = scmp.eq.s32.totalorder %s26, 1
      %p128 = por %p126, %p127
      %p129 = scmp.ne.s32.totalorder %s120, %s121
      %p130 = scmp.eq.s32.totalorder %s26, 0
      %p131 = por %p129, %p130
      %p132 = scmp.ne.s32.totalorder %s120, %s121
      %p133 = scmp.eq.s32.totalorder %s27, 1
      %p134 = por %p132, %p133
      %p136 = scmp.ne.s32.totalorder %s121, %s135
      %p137 = scmp.eq.s32.totalorder %s27, 0
      %p138 = por %p136, %p137
      %s140 = sadd.s32 %s139, 1
      %p143 = scmp.eq.s32.totalorder %s21, 1
      %p144 = scmp.ne.s32.totalorder %s139, %s141
      %p145 = scmp.eq.s32.totalorder %s21, 0
      %p146 = por %p144, %p145
      %p147 = scmp.ne.s32.totalorder %s139, %s141
      %p148 = scmp.eq.s32.totalorder %s26, 1
      %p149 = por %p147, %p148
      %p150 = scmp.ne.s32.totalorder %s141, %s142
      %p151 = scmp.eq.s32.totalorder %s26, 0
      %p152 = por %p150, %p151
      %p153 = scmp.ne.s32.totalorder %s141, %s142
      %p154 = scmp.eq.s32.totalorder %s27, 1
      %p155 = por %p153, %p154
      %p157 = scmp.ne.s32.totalorder %s142, %s156
      %p158 = scmp.eq.s32.totalorder %s27, 0
      %p159 = por %p157, %p158
      %s161 = sadd.s32 %s160, 1
      %p164 = scmp.eq.s32.totalorder %s21, 1
      %p165 = scmp.ne.s32.totalorder %s160, %s162
      %p166 = scmp.eq.s32.totalorder %s21, 0
      %p167 = por %p165, %p166
      %p168 = scmp.ne.s32.totalorder %s160, %s162
      %p169 = scmp.eq.s32.totalorder %s26, 1
      %p170 = por %p168, %p169
      %p171 = scmp.ne.s32.totalorder %s162, %s163
      %p172 = scmp.eq.s32.totalorder %s26, 0
      %p173 = por %p171, %p172
      %p174 = scmp.ne.s32.totalorder %s162, %s163
      %p175 = scmp.eq.s32.totalorder %s27, 1
      %p176 = por %p174, %p175
      %p178 = scmp.ne.s32.totalorder %s163, %s177
      %p179 = scmp.eq.s32.totalorder %s27, 0
      %p180 = por %p178, %p179
      %s181 = ssub.s32 %s21, %s28
      %p182 = scmp.eq.s32.totalorder %s181, 0
      %s184 = sadd.s32 %s183, 1
      %s185 = scalar_select %p182, %s183, %s184
      %p188 = pneg %p182
      %p189 = scmp.eq.s32.totalorder %s21, 1
      %p190 = por %p188, %p189
      %p191 = scmp.ne.s32.totalorder %s183, %s186
      %p192 = scmp.eq.s32.totalorder %s21, 0
      %p193 = por %p191, %p192
      %p194 = scmp.ne.s32.totalorder %s183, %s186
      %p195 = scmp.eq.s32.totalorder %s26, 1
      %p196 = por %p194, %p195
      %p197 = scmp.ne.s32.totalorder %s186, %s187
      %p198 = scmp.eq.s32.totalorder %s26, 0
      %p199 = por %p197, %p198
      %p200 = scmp.ne.s32.totalorder %s186, %s187
      %p201 = scmp.eq.s32.totalorder %s27, 1
      %p202 = por %p200, %p201
      %p204 = scmp.ne.s32.totalorder %s187, %s203
      %p205 = scmp.eq.s32.totalorder %s27, 0
      %p206 = por %p204, %p205
      %p207 = scmp.le.s32.totalorder 1, %s21
      %p208 = scmp.lt.s32.totalorder %s21, 3
      %p209 = pnand %p207, %p208
      %p210 = pneg %p209
      // Predicated region
      $region9: #{tpu_custom_call.1} parent=5 // pred_check
        _
      $region10: #{tpu_custom_call.1} parent=5 // pred_check_branch
        %212 = sbr.rel (%p209) target = $region12
      $region11: #{tpu_custom_call.1} parent=5 // pred_region
        %s213 = ssub.s32 %s21, 1
        // Predicated region
        $region13: #{tpu_custom_call.1} parent=11 // pred_check
          %p214 = pneg %p42
        $region14: #{tpu_custom_call.1} parent=11 // pred_check_branch
          %216 = sbr.rel (%p214) target = $region16
        $region15: #{tpu_custom_call.1} parent=11 // pred_region
          _
        $region16: #{tpu_custom_call.1} parent=11 // pred_fallthru
          _
        // Predicated region
        $region17: #{tpu_custom_call.1} parent=11 // pred_check
          %p217 = pneg %p63
        $region18: #{tpu_custom_call.1} parent=11 // pred_check_branch
          %219 = sbr.rel (%p217) target = $region20
        $region19: #{tpu_custom_call.1} parent=11 // pred_region
          _
        $region20: #{tpu_custom_call.1} parent=11 // pred_fallthru
          _
        // Predicated region
        $region21: #{tpu_custom_call.1} parent=11 // pred_check
          %p220 = pneg %p110
        $region22: #{tpu_custom_call.1} parent=11 // pred_check_branch
          %222 = sbr.rel (%p220) target = $region24
        $region23: #{tpu_custom_call.1} parent=11 // pred_region
          _
        $region24: #{tpu_custom_call.1} parent=11 // pred_fallthru
          _
        // Predicated region
        $region25: #{tpu_custom_call.1} parent=11 // pred_check
          %p223 = pneg %p131
        $region26: #{tpu_custom_call.1} parent=11 // pred_check_branch
          %225 = sbr.rel (%p223) target = $region28
        $region27: #{tpu_custom_call.1} parent=11 // pred_region
          _
        $region28: #{tpu_custom_call.1} parent=11 // pred_fallthru
          _
        // Predicated region
        $region29: #{tpu_custom_call.1} parent=11 // pred_check
          %p226 = pneg %p152
        $region30: #{tpu_custom_call.1} parent=11 // pred_check_branch
          %228 = sbr.rel (%p226) target = $region32
        $region31: #{tpu_custom_call.1} parent=11 // pred_region
          %s230 = ssub.s32 1024, 1024
          %231 = vsyncadd [#allocation7], %s230
          %s232 = sshll.u32 [#allocation6], 4
          %s233 = int_to_ptr.vmem [resolvable:$true] %s232
          %238 = dma.hbm_to_vmem [thread:$0]  %s5, 1024, %s233, [#allocation7], 128, 128, 8
        $region32: #{tpu_custom_call.1} parent=11 // pred_fallthru
          _
        // Predicated region
        $region33: #{tpu_custom_call.1} parent=11 // pred_check
          %p239 = pneg %p173
        $region34: #{tpu_custom_call.1} parent=11 // pred_check_branch
          %241 = sbr.rel (%p239) target = $region36
        $region35: #{tpu_custom_call.1} parent=11 // pred_region
          %s243 = ssub.s32 1024, 1024
          %244 = vsyncadd [#allocation7], %s243
          %s245 = sshll.u32 [#allocation8], 4
          %s246 = int_to_ptr.vmem [resolvable:$true] %s245
          %251 = dma.hbm_to_vmem [thread:$0]  %s6, 1024, %s246, [#allocation7], 128, 128, 8
        $region36: #{tpu_custom_call.1} parent=11 // pred_fallthru
          _
      $region12: #{tpu_custom_call.1} parent=5 // pred_fallthru
        _
      %p252 = scmp.lt.s32.totalorder %s21, 2
      // Predicated region
      $region37: #{tpu_custom_call.1} parent=5 // pred_check
        %p253 = pneg %p252
      $region38: #{tpu_custom_call.1} parent=5 // pred_check_branch
        %255 = sbr.rel (%p253) target = $region40
      $region39: #{tpu_custom_call.1} parent=5 // pred_region
        // Predicated region
        $region41: #{tpu_custom_call.1} parent=39 // pred_check
          %p256 = pneg %p83
        $region42: #{tpu_custom_call.1} parent=39 // pred_check_branch
          %258 = sbr.rel (%p256) target = $region44
        $region43: #{tpu_custom_call.1} parent=39 // pred_region
          %s259 = sand.u32 %s73, 1
          %s260 = scalar_lea.sflag [#allocation4], %s259
          %s261 = sand.u32 %s73, 1
          %s262 = smul.addr %s261, 64
          %s263 = scalar_lea.vmem [#allocation3], %s262
          %s265 = ssub.s32 1024, 1024
          %266 = vsyncadd %s260, %s265
          %s267 = smul.addr %s21, 8
          %s268 = smul.addr %s267, 128
          %s269 = scalar_lea.hbm %s2, %s268
          %s270 = sshll.u32 %s263, 4
          %s271 = int_to_ptr.vmem [resolvable:$true] %s270
          %276 = dma.hbm_to_vmem [thread:$0]  %s269, 1024, %s271, %s260, 128, 128, 8
        $region44: #{tpu_custom_call.1} parent=39 // pred_fallthru
          _
      $region40: #{tpu_custom_call.1} parent=5 // pred_fallthru
        _
      %p277 = scmp.le.s32.totalorder 1, %s21
      %p278 = scmp.lt.s32.totalorder %s21, 3
      %p279 = pnand %p277, %p278
      %p280 = pneg %p279
      // Predicated region
      $region45: #{tpu_custom_call.1} parent=5 // pred_check
        _
      $region46: #{tpu_custom_call.1} parent=5 // pred_check_branch
        %282 = sbr.rel (%p279) target = $region48
      $region47: #{tpu_custom_call.1} parent=5 // pred_region
        %s283 = ssub.s32 %s21, 1
        %s284 = sand.u32 %s76, 1
        %s285 = scalar_lea.sflag [#allocation4], %s284
        %s286 = sand.u32 %s76, 1
        %s287 = smul.addr %s286, 64
        %s288 = scalar_lea.vmem [#allocation3], %s287
        // Predicated region
        $region49: #{tpu_custom_call.1} parent=47 // pred_check
          %p289 = pneg %p89
        $region50: #{tpu_custom_call.1} parent=47 // pred_check_branch
          %291 = sbr.rel (%p289) target = $region52
        $region51: #{tpu_custom_call.1} parent=47 // pred_region
          %292 = dma.done %s285, 1024
        $region52: #{tpu_custom_call.1} parent=47 // pred_fallthru
          _
        // Predicated region
        $region53: #{tpu_custom_call.1} parent=47 // pred_check
          %p293 = pneg %p152
        $region54: #{tpu_custom_call.1} parent=47 // pred_check_branch
          %295 = sbr.rel (%p293) target = $region56
        $region55: #{tpu_custom_call.1} parent=47 // pred_region
          %296 = dma.done [#allocation7], 1024
        $region56: #{tpu_custom_call.1} parent=47 // pred_fallthru
          _
        // Predicated region
        $region57: #{tpu_custom_call.1} parent=47 // pred_check
          %p297 = pneg %p173
        $region58: #{tpu_custom_call.1} parent=47 // pred_check_branch
          %299 = sbr.rel (%p297) target = $region60
        $region59: #{tpu_custom_call.1} parent=47 // pred_region
          %300 = dma.done [#allocation7], 1024
        $region60: #{tpu_custom_call.1} parent=47 // pred_fallthru
          _
        %p301 = pneg %p42
        %p302 = pneg %p39
        %p303 = pneg %p63
        %p304 = pneg %p60
        %s305 = sand.u32 %s76, 1
        %s306 = scalar_lea.sflag [#allocation4], %s305
        %s307 = sand.u32 %s76, 1
        %s308 = smul.addr %s307, 64
        %s309 = scalar_lea.vmem [#allocation3], %s308
        %p310 = pneg %p89
        %p311 = pneg %p86
        %p312 = pneg %p110
        %p313 = pneg %p107
        %p314 = pneg %p131
        %p315 = pneg %p128
        %p316 = pneg %p152
        %p317 = pneg %p149
        %p318 = pneg %p173
        %p319 = pneg %p170
        %p320 = pneg %p199
        %p321 = pneg %p196
        %s322 = sand.u32 %s186, 1
        %s323 = scalar_lea.sflag [#allocation5], %s322
        %s324 = sand.u32 %s186, 1
        %s325 = smul.addr %s324, 64
        %s326 = scalar_lea.vmem [#allocation9], %s325
        %s328 = sld [smem:[#allocation2]]
        %v329 = vld [vmem:[%s1] sm:$0xff]
        %v330 = vld [vmem:[%s1 + $0x8] sm:$0xff]
        %v331 = vld [vmem:[%s1 + $0x10] sm:$0xff]
        %v332 = vld [vmem:[%s1 + $0x18] sm:$0xff]
        %v333 = vld [vmem:[%s1 + $0x20] sm:$0xff]
        %v334 = vld [vmem:[%s1 + $0x28] sm:$0xff]
        %v335 = vld [vmem:[%s1 + $0x30] sm:$0xff]
        %v336 = vld [vmem:[%s1 + $0x38] sm:$0xff]
        %s337 = ssub.f32 0.0, %s328
        %v338 = vstv %s337
        %v339 = vmul.f32 %v338, %v329
        %v340 = vmul.f32 %v338, %v330
        %v341 = vmul.f32 %v338, %v331
        %v342 = vmul.f32 %v338, %v332
        %v343 = vmul.f32 %v338, %v333
        %v344 = vmul.f32 %v338, %v334
        %v345 = vmul.f32 %v338, %v335
        %v346 = vmul.f32 %v338, %v336
        %v347 = vmul.f32 %v339, 1.442695
        %v348 = vpow.pop %v347
        %v349 = vmul.f32 %v340, 1.442695
        %v350 = vpow.pop %v349
        %v351 = vmul.f32 %v341, 1.442695
        %v352 = vpow.pop %v351
        %v353 = vmul.f32 %v342, 1.442695
        %v354 = vpow.pop %v353
        %v355 = vmul.f32 %v343, 1.442695
        %v356 = vpow.pop %v355
        %v357 = vmul.f32 %v344, 1.442695
        %v358 = vpow.pop %v357
        %v359 = vmul.f32 %v345, 1.442695
        %v360 = vpow.pop %v359
        %v361 = vmul.f32 %v346, 1.442695
        %v362 = vpow.pop %v361
        %v363 = vadd.f32 %v348, 1.0
        %v364 = vadd.f32 %v350, 1.0
        %v365 = vadd.f32 %v352, 1.0
        %v366 = vadd.f32 %v354, 1.0
        %v367 = vadd.f32 %v356, 1.0
        %v368 = vadd.f32 %v358, 1.0
        %v369 = vadd.f32 %v360, 1.0
        %v370 = vadd.f32 %v362, 1.0
        %v371 = vrcp.pop %v363
        %v372 = vrcp.pop %v364
        %v373 = vrcp.pop %v365
        %v374 = vrcp.pop %v366
        %v375 = vrcp.pop %v367
        %v376 = vrcp.pop %v368
        %v377 = vrcp.pop %v369
        %v378 = vrcp.pop %v370
        %v379 = vmul.f32 %v371, 3.1415927
        %v380 = vmul.f32 %v372, 3.1415927
        %v381 = vmul.f32 %v373, 3.1415927
        %v382 = vmul.f32 %v374, 3.1415927
        %v383 = vmul.f32 %v375, 3.1415927
        %v384 = vmul.f32 %v376, 3.1415927
        %v385 = vmul.f32 %v377, 3.1415927
        %v386 = vmul.f32 %v378, 3.1415927
        %v387 = vadd.f32 %v379, 0.0
        %v388 = vadd.f32 %v380, 0.0
        %v389 = vadd.f32 %v381, 0.0
        %v390 = vadd.f32 %v382, 0.0
        %v391 = vadd.f32 %v383, 0.0
        %v392 = vadd.f32 %v384, 0.0
        %v393 = vadd.f32 %v385, 0.0
        %v394 = vadd.f32 %v386, 0.0
        %v395 = vand.u32 2147483647, %v387
        %vm396 = vcmp.le.f32.partialorder %v395, 0.7853982
        %vm397 = vcmp.lt.s32.totalorder %v387, 0
        %v398 = vand.u32 %v387, 2139095040
        %v399 = vshrl.u32 %v398, 23
        %v400 = vsub.s32 %v399, 127
        %v401 = vand.u32 2147483647, %v387
        %v402 = vand.u32 %v401, 8388607
        %v403 = vor.u32 %v402, 8388608
        %v404 = vsub.s32 0, %v403
        %v405 = vadd.s32 %v400, 1
        %vm406 = vcmp.gt.s32.totalorder %v405, 0
        %v407 = vsel %vm406, %v405, 0
        %v408 = vshrl.u32 %v407, 5
        %v409 = vand.u32 %v407, 31
        %v410 = vsub.s32 32, %v409
        %v411 = vshrl.u32 683565275, %v410
        %v412 = vshll.u32 683565275, %v409
        %v413 = vshrl.u32 2475754826, %v410
        %v414 = vor.u32 %v412, %v413
        %v415 = vshll.u32 2475754826, %v409
        %v416 = vshrl.u32 2131351028, %v410
        %v417 = vor.u32 %v415, %v416
        %v418 = vshll.u32 2131351028, %v409
        %v419 = vshrl.u32 2102212464, %v410
        %v420 = vor.u32 %v418, %v419
        %v421 = vshll.u32 2102212464, %v409
        %v422 = vshrl.u32 920167782, %v410
        %v423 = vor.u32 %v421, %v422
        %v424 = vshll.u32 920167782, %v409
        %v425 = vshrl.u32 1326507024, %v410
        %v426 = vor.u32 %v424, %v425
        %vm427 = vcmp.lt.s32.totalorder %v408, 1
        %vm428 = vcmp.lt.s32.totalorder %v408, 2
        %vm429 = vcmp.lt.s32.totalorder %v408, 3
        %vm430 = vcmp.lt.s32.totalorder %v408, 4
        %v431 = vsel %vm427, %v411, %v414
        %v432 = vsel %vm430, %v420, 2102212464
        %v433 = vsel %vm429, %v417, %v432
        %v434 = vsel %vm428, %v431, %v433
        %v435 = vsel %vm427, %v414, %v417
        %v436 = vsel %vm430, %v423, 920167782
        %v437 = vsel %vm429, %v420, %v436
        %v438 = vsel %vm428, %v435, %v437
        %v439 = vsel %vm427, %v417, %v420
        %v440 = vsel %vm430, %v426, 1326507024
        %v441 = vsel %vm429, %v423, %v440
        %v442 = vsel %vm428, %v439, %v441
        %v443 = vshll.u32 %v403, 8
        %v444 = vmul.u32.u64.compose %v443, %v442
        %v445 = vextract.low.u32 %v444
        %v446 = vextract.high.u32 %v444
        %v447 = vmul.u32.u64.compose %v443, %v438
        %v448 = vextract.low.u32 %v447
        %v449 = vextract.high.u32 %v447
        %v450 = vmul.u32 %v443, %v434
        %v451 = vadd.s32 %v446, %v448
        %vm452 = vc.u32 %v446, %v448
        %v453 = vadd.s32 %v449, 1
        %v454 = vsel %vm452, %v453, %v449
        %v455 = vadd.s32 %v450, %v454
        %v456 = vadd.s32 %v455, 536870912
        %v457 = vshrl.u32 %v456, 30
        %v458 = vshll.u32 %v457, 30
        %v459 = vsub.s32 %v455, %v458
        %vm460 = vcmp.lt.s32.totalorder %v459, 0
        %v461 = vsub.s32 0, %v459
        %v462 = vsel %vm460, %v461, %v459
        %v463 = vclz %v462
        %v464 = vsub.s32 %v463, 2
        %vm465 = vcmp.gt.s32.totalorder 0, %v464
        %v466 = vsel %vm465, 0, %v464
        %v467 = vsub.s32 32, %v466
        %v468 = vshll.u32 %v459, %v466
        %v469 = vshrl.u32 %v451, %v467
        %v470 = vor.u32 %v468, %v469
        %v471 = vsub.s32 4294967266, %v466
        %v472 = vadd.s32 %v471, 127
        %v473 = vshll.u32 %v472, 23
        %v474 = vor.u32 4788187, %v473
        %v475 = vand.u32 2147483647, %v474
        %v477 = vcvt.s32.f32 %v470
        %v478 = vmul.f32 %v477, %v475
        %v479 = vxor.u32 %v478, 2147483648
        %v480 = vsel %vm397, %v479, %v478
        %v481 = vsub.s32 4, %v457
        %v482 = vsel %vm397, %v481, %v457
        %v483 = vsel %vm396, %v387, %v480
        %v484 = vsel %vm396, 0, %v482
        %v485 = vcosq.f32.pop %v483
        %v486 = vsinq.f32.pop %v483
        %vm487 = vweird.f32 %v387
        %v488 = vand.u32 %v484, 3
        %vm489 = vcmp.lt.s32.totalorder %v488, 2
        %vm490 = vcmp.eq.s32.totalorder %v488, 0
        %v491 = vxor.u32 %v486, 2147483648
        %v492 = vsel %vm490, %v485, %v491
        %vm493 = vcmp.eq.s32.totalorder %v488, 2
        %v494 = vxor.u32 %v485, 2147483648
        %v495 = vsel %vm493, %v494, %v486
        %v496 = vsel %vm489, %v492, %v495
        %v497 = vsel %vm487, nan, %v496
        %v498 = vand.u32 2147483647, %v388
        %vm499 = vcmp.le.f32.partialorder %v498, 0.7853982
        %vm500 = vcmp.lt.s32.totalorder %v388, 0
        %v501 = vand.u32 %v388, 2139095040
        %v502 = vshrl.u32 %v501, 23
        %v503 = vsub.s32 %v502, 127
        %v504 = vand.u32 2147483647, %v388
        %v505 = vand.u32 %v504, 8388607
        %v506 = vor.u32 %v505, 8388608
        %v507 = vsub.s32 0, %v506
        %v508 = vadd.s32 %v503, 1
        %vm509 = vcmp.gt.s32.totalorder %v508, 0
        %v510 = vsel %vm509, %v508, 0
        %v511 = vshrl.u32 %v510, 5
        %v512 = vand.u32 %v510, 31
        %v513 = vsub.s32 32, %v512
        %v514 = vshrl.u32 683565275, %v513
        %v515 = vshll.u32 683565275, %v512
        %v516 = vshrl.u32 2475754826, %v513
        %v517 = vor.u32 %v515, %v516
        %v518 = vshll.u32 2475754826, %v512
        %v519 = vshrl.u32 2131351028, %v513
        %v520 = vor.u32 %v518, %v519
        %v521 = vshll.u32 2131351028, %v512
        %v522 = vshrl.u32 2102212464, %v513
        %v523 = vor.u32 %v521, %v522
        %v524 = vshll.u32 2102212464, %v512
        %v525 = vshrl.u32 920167782, %v513
        %v526 = vor.u32 %v524, %v525
        %v527 = vshll.u32 920167782, %v512
        %v528 = vshrl.u32 1326507024, %v513
        %v529 = vor.u32 %v527, %v528
        %vm530 = vcmp.lt.s32.totalorder %v511, 1
        %vm531 = vcmp.lt.s32.totalorder %v511, 2
        %vm532 = vcmp.lt.s32.totalorder %v511, 3
        %vm533 = vcmp.lt.s32.totalorder %v511, 4
        %v534 = vsel %vm530, %v514, %v517
        %v535 = vsel %vm533, %v523, 2102212464
        %v536 = vsel %vm532, %v520, %v535
        %v537 = vsel %vm531, %v534, %v536
        %v538 = vsel %vm530, %v517, %v520
        %v539 = vsel %vm533, %v526, 920167782
        %v540 = vsel %vm532, %v523, %v539
        %v541 = vsel %vm531, %v538, %v540
        %v542 = vsel %vm530, %v520, %v523
        %v543 = vsel %vm533, %v529, 1326507024
        %v544 = vsel %vm532, %v526, %v543
        %v545 = vsel %vm531, %v542, %v544
        %v546 = vshll.u32 %v506, 8
        %v547 = vmul.u32.u64.compose %v546, %v545
        %v548 = vextract.low.u32 %v547
        %v549 = vextract.high.u32 %v547
        %v550 = vmul.u32.u64.compose %v546, %v541
        %v551 = vextract.low.u32 %v550
        %v552 = vextract.high.u32 %v550
        %v553 = vmul.u32 %v546, %v537
        %v554 = vadd.s32 %v549, %v551
        %vm555 = vc.u32 %v549, %v551
        %v556 = vadd.s32 %v552, 1
        %v557 = vsel %vm555, %v556, %v552
        %v558 = vadd.s32 %v553, %v557
        %v559 = vadd.s32 %v558, 536870912
        %v560 = vshrl.u32 %v559, 30
        %v561 = vshll.u32 %v560, 30
        %v562 = vsub.s32 %v558, %v561
        %vm563 = vcmp.lt.s32.totalorder %v562, 0
        %v564 = vsub.s32 0, %v562
        %v565 = vsel %vm563, %v564, %v562
        %v566 = vclz %v565
        %v567 = vsub.s32 %v566, 2
        %vm568 = vcmp.gt.s32.totalorder 0, %v567
        %v569 = vsel %vm568, 0, %v567
        %v570 = vsub.s32 32, %v569
        %v571 = vshll.u32 %v562, %v569
        %v572 = vshrl.u32 %v554, %v570
        %v573 = vor.u32 %v571, %v572
        %v574 = vsub.s32 4294967266, %v569
        %v575 = vadd.s32 %v574, 127
        %v576 = vshll.u32 %v575, 23
        %v577 = vor.u32 4788187, %v576
        %v578 = vand.u32 2147483647, %v577
        %v580 = vcvt.s32.f32 %v573
        %v581 = vmul.f32 %v580, %v578
        %v582 = vxor.u32 %v581, 2147483648
        %v583 = vsel %vm500, %v582, %v581
        %v584 = vsub.s32 4, %v560
        %v585 = vsel %vm500, %v584, %v560
        %v586 = vsel %vm499, %v388, %v583
        %v587 = vsel %vm499, 0, %v585
        %v588 = vcosq.f32.pop %v586
        %v589 = vsinq.f32.pop %v586
        %vm590 = vweird.f32 %v388
        %v591 = vand.u32 %v587, 3
        %vm592 = vcmp.lt.s32.totalorder %v591, 2
        %vm593 = vcmp.eq.s32.totalorder %v591, 0
        %v594 = vxor.u32 %v589, 2147483648
        %v595 = vsel %vm593, %v588, %v594
        %vm596 = vcmp.eq.s32.totalorder %v591, 2
        %v597 = vxor.u32 %v588, 2147483648
        %v598 = vsel %vm596, %v597, %v589
        %v599 = vsel %vm592, %v595, %v598
        %v600 = vsel %vm590, nan, %v599
        %v601 = vand.u32 2147483647, %v389
        %vm602 = vcmp.le.f32.partialorder %v601, 0.7853982
        %vm603 = vcmp.lt.s32.totalorder %v389, 0
        %v604 = vand.u32 %v389, 2139095040
        %v605 = vshrl.u32 %v604, 23
        %v606 = vsub.s32 %v605, 127
        %v607 = vand.u32 2147483647, %v389
        %v608 = vand.u32 %v607, 8388607
        %v609 = vor.u32 %v608, 8388608
        %v610 = vsub.s32 0, %v609
        %v611 = vadd.s32 %v606, 1
        %vm612 = vcmp.gt.s32.totalorder %v611, 0
        %v613 = vsel %vm612, %v611, 0
        %v614 = vshrl.u32 %v613, 5
        %v615 = vand.u32 %v613, 31
        %v616 = vsub.s32 32, %v615
        %v617 = vshrl.u32 683565275, %v616
        %v618 = vshll.u32 683565275, %v615
        %v619 = vshrl.u32 2475754826, %v616
        %v620 = vor.u32 %v618, %v619
        %v621 = vshll.u32 2475754826, %v615
        %v622 = vshrl.u32 2131351028, %v616
        %v623 = vor.u32 %v621, %v622
        %v624 = vshll.u32 2131351028, %v615
        %v625 = vshrl.u32 2102212464, %v616
        %v626 = vor.u32 %v624, %v625
        %v627 = vshll.u32 2102212464, %v615
        %v628 = vshrl.u32 920167782, %v616
        %v629 = vor.u32 %v627, %v628
        %v630 = vshll.u32 920167782, %v615
        %v631 = vshrl.u32 1326507024, %v616
        %v632 = vor.u32 %v630, %v631
        %vm633 = vcmp.lt.s32.totalorder %v614, 1
        %vm634 = vcmp.lt.s32.totalorder %v614, 2
        %vm635 = vcmp.lt.s32.totalorder %v614, 3
        %vm636 = vcmp.lt.s32.totalorder %v614, 4
        %v637 = vsel %vm633, %v617, %v620
        %v638 = vsel %vm636, %v626, 2102212464
        %v639 = vsel %vm635, %v623, %v638
        %v640 = vsel %vm634, %v637, %v639
        %v641 = vsel %vm633, %v620, %v623
        %v642 = vsel %vm636, %v629, 920167782
        %v643 = vsel %vm635, %v626, %v642
        %v644 = vsel %vm634, %v641, %v643
        %v645 = vsel %vm633, %v623, %v626
        %v646 = vsel %vm636, %v632, 1326507024
        %v647 = vsel %vm635, %v629, %v646
        %v648 = vsel %vm634, %v645, %v647
        %v649 = vshll.u32 %v609, 8
        %v650 = vmul.u32.u64.compose %v649, %v648
        %v651 = vextract.low.u32 %v650
        %v652 = vextract.high.u32 %v650
        %v653 = vmul.u32.u64.compose %v649, %v644
        %v654 = vextract.low.u32 %v653
        %v655 = vextract.high.u32 %v653
        %v656 = vmul.u32 %v649, %v640
        %v657 = vadd.s32 %v652, %v654
        %vm658 = vc.u32 %v652, %v654
        %v659 = vadd.s32 %v655, 1
        %v660 = vsel %vm658, %v659, %v655
        %v661 = vadd.s32 %v656, %v660
        %v662 = vadd.s32 %v661, 536870912
        %v663 = vshrl.u32 %v662, 30
        %v664 = vshll.u32 %v663, 30
        %v665 = vsub.s32 %v661, %v664
        %vm666 = vcmp.lt.s32.totalorder %v665, 0
        %v667 = vsub.s32 0, %v665
        %v668 = vsel %vm666, %v667, %v665
        %v669 = vclz %v668
        %v670 = vsub.s32 %v669, 2
        %vm671 = vcmp.gt.s32.totalorder 0, %v670
        %v672 = vsel %vm671, 0, %v670
        %v673 = vsub.s32 32, %v672
        %v674 = vshll.u32 %v665, %v672
        %v675 = vshrl.u32 %v657, %v673
        %v676 = vor.u32 %v674, %v675
        %v677 = vsub.s32 4294967266, %v672
        %v678 = vadd.s32 %v677, 127
        %v679 = vshll.u32 %v678, 23
        %v680 = vor.u32 4788187, %v679
        %v681 = vand.u32 2147483647, %v680
        %v683 = vcvt.s32.f32 %v676
        %v684 = vmul.f32 %v683, %v681
        %v685 = vxor.u32 %v684, 2147483648
        %v686 = vsel %vm603, %v685, %v684
        %v687 = vsub.s32 4, %v663
        %v688 = vsel %vm603, %v687, %v663
        %v689 = vsel %vm602, %v389, %v686
        %v690 = vsel %vm602, 0, %v688
        %v691 = vcosq.f32.pop %v689
        %v692 = vsinq.f32.pop %v689
        %vm693 = vweird.f32 %v389
        %v694 = vand.u32 %v690, 3
        %vm695 = vcmp.lt.s32.totalorder %v694, 2
        %vm696 = vcmp.eq.s32.totalorder %v694, 0
        %v697 = vxor.u32 %v692, 2147483648
        %v698 = vsel %vm696, %v691, %v697
        %vm699 = vcmp.eq.s32.totalorder %v694, 2
        %v700 = vxor.u32 %v691, 2147483648
        %v701 = vsel %vm699, %v700, %v692
        %v702 = vsel %vm695, %v698, %v701
        %v703 = vsel %vm693, nan, %v702
        %v704 = vand.u32 2147483647, %v390
        %vm705 = vcmp.le.f32.partialorder %v704, 0.7853982
        %vm706 = vcmp.lt.s32.totalorder %v390, 0
        %v707 = vand.u32 %v390, 2139095040
        %v708 = vshrl.u32 %v707, 23
        %v709 = vsub.s32 %v708, 127
        %v710 = vand.u32 2147483647, %v390
        %v711 = vand.u32 %v710, 8388607
        %v712 = vor.u32 %v711, 8388608
        %v713 = vsub.s32 0, %v712
        %v714 = vadd.s32 %v709, 1
        %vm715 = vcmp.gt.s32.totalorder %v714, 0
        %v716 = vsel %vm715, %v714, 0
        %v717 = vshrl.u32 %v716, 5
        %v718 = vand.u32 %v716, 31
        %v719 = vsub.s32 32, %v718
        %v720 = vshrl.u32 683565275, %v719
        %v721 = vshll.u32 683565275, %v718
        %v722 = vshrl.u32 2475754826, %v719
        %v723 = vor.u32 %v721, %v722
        %v724 = vshll.u32 2475754826, %v718
        %v725 = vshrl.u32 2131351028, %v719
        %v726 = vor.u32 %v724, %v725
        %v727 = vshll.u32 2131351028, %v718
        %v728 = vshrl.u32 2102212464, %v719
        %v729 = vor.u32 %v727, %v728
        %v730 = vshll.u32 2102212464, %v718
        %v731 = vshrl.u32 920167782, %v719
        %v732 = vor.u32 %v730, %v731
        %v733 = vshll.u32 920167782, %v718
        %v734 = vshrl.u32 1326507024, %v719
        %v735 = vor.u32 %v733, %v734
        %vm736 = vcmp.lt.s32.totalorder %v717, 1
        %vm737 = vcmp.lt.s32.totalorder %v717, 2
        %vm738 = vcmp.lt.s32.totalorder %v717, 3
        %vm739 = vcmp.lt.s32.totalorder %v717, 4
        %v740 = vsel %vm736, %v720, %v723
        %v741 = vsel %vm739, %v729, 2102212464
        %v742 = vsel %vm738, %v726, %v741
        %v743 = vsel %vm737, %v740, %v742
        %v744 = vsel %vm736, %v723, %v726
        %v745 = vsel %vm739, %v732, 920167782
        %v746 = vsel %vm738, %v729, %v745
        %v747 = vsel %vm737, %v744, %v746
        %v748 = vsel %vm736, %v726, %v729
        %v749 = vsel %vm739, %v735, 1326507024
        %v750 = vsel %vm738, %v732, %v749
        %v751 = vsel %vm737, %v748, %v750
        %v752 = vshll.u32 %v712, 8
        %v753 = vmul.u32.u64.compose %v752, %v751
        %v754 = vextract.low.u32 %v753
        %v755 = vextract.high.u32 %v753
        %v756 = vmul.u32.u64.compose %v752, %v747
        %v757 = vextract.low.u32 %v756
        %v758 = vextract.high.u32 %v756
        %v759 = vmul.u32 %v752, %v743
        %v760 = vadd.s32 %v755, %v757
        %vm761 = vc.u32 %v755, %v757
        %v762 = vadd.s32 %v758, 1
        %v763 = vsel %vm761, %v762, %v758
        %v764 = vadd.s32 %v759, %v763
        %v765 = vadd.s32 %v764, 536870912
        %v766 = vshrl.u32 %v765, 30
        %v767 = vshll.u32 %v766, 30
        %v768 = vsub.s32 %v764, %v767
        %vm769 = vcmp.lt.s32.totalorder %v768, 0
        %v770 = vsub.s32 0, %v768
        %v771 = vsel %vm769, %v770, %v768
        %v772 = vclz %v771
        %v773 = vsub.s32 %v772, 2
        %vm774 = vcmp.gt.s32.totalorder 0, %v773
        %v775 = vsel %vm774, 0, %v773
        %v776 = vsub.s32 32, %v775
        %v777 = vshll.u32 %v768, %v775
        %v778 = vshrl.u32 %v760, %v776
        %v779 = vor.u32 %v777, %v778
        %v780 = vsub.s32 4294967266, %v775
        %v781 = vadd.s32 %v780, 127
        %v782 = vshll.u32 %v781, 23
        %v783 = vor.u32 4788187, %v782
        %v784 = vand.u32 2147483647, %v783
        %v786 = vcvt.s32.f32 %v779
        %v787 = vmul.f32 %v786, %v784
        %v788 = vxor.u32 %v787, 2147483648
        %v789 = vsel %vm706, %v788, %v787
        %v790 = vsub.s32 4, %v766
        %v791 = vsel %vm706, %v790, %v766
        %v792 = vsel %vm705, %v390, %v789
        %v793 = vsel %vm705, 0, %v791
        %v794 = vcosq.f32.pop %v792
        %v795 = vsinq.f32.pop %v792
        %vm796 = vweird.f32 %v390
        %v797 = vand.u32 %v793, 3
        %vm798 = vcmp.lt.s32.totalorder %v797, 2
        %vm799 = vcmp.eq.s32.totalorder %v797, 0
        %v800 = vxor.u32 %v795, 2147483648
        %v801 = vsel %vm799, %v794, %v800
        %vm802 = vcmp.eq.s32.totalorder %v797, 2
        %v803 = vxor.u32 %v794, 2147483648
        %v804 = vsel %vm802, %v803, %v795
        %v805 = vsel %vm798, %v801, %v804
        %v806 = vsel %vm796, nan, %v805
        %v807 = vand.u32 2147483647, %v391
        %vm808 = vcmp.le.f32.partialorder %v807, 0.7853982
        %vm809 = vcmp.lt.s32.totalorder %v391, 0
        %v810 = vand.u32 %v391, 2139095040
        %v811 = vshrl.u32 %v810, 23
        %v812 = vsub.s32 %v811, 127
        %v813 = vand.u32 2147483647, %v391
        %v814 = vand.u32 %v813, 8388607
        %v815 = vor.u32 %v814, 8388608
        %v816 = vsub.s32 0, %v815
        %v817 = vadd.s32 %v812, 1
        %vm818 = vcmp.gt.s32.totalorder %v817, 0
        %v819 = vsel %vm818, %v817, 0
        %v820 = vshrl.u32 %v819, 5
        %v821 = vand.u32 %v819, 31
        %v822 = vsub.s32 32, %v821
        %v823 = vshrl.u32 683565275, %v822
        %v824 = vshll.u32 683565275, %v821
        %v825 = vshrl.u32 2475754826, %v822
        %v826 = vor.u32 %v824, %v825
        %v827 = vshll.u32 2475754826, %v821
        %v828 = vshrl.u32 2131351028, %v822
        %v829 = vor.u32 %v827, %v828
        %v830 = vshll.u32 2131351028, %v821
        %v831 = vshrl.u32 2102212464, %v822
        %v832 = vor.u32 %v830, %v831
        %v833 = vshll.u32 2102212464, %v821
        %v834 = vshrl.u32 920167782, %v822
        %v835 = vor.u32 %v833, %v834
        %v836 = vshll.u32 920167782, %v821
        %v837 = vshrl.u32 1326507024, %v822
        %v838 = vor.u32 %v836, %v837
        %vm839 = vcmp.lt.s32.totalorder %v820, 1
        %vm840 = vcmp.lt.s32.totalorder %v820, 2
        %vm841 = vcmp.lt.s32.totalorder %v820, 3
        %vm842 = vcmp.lt.s32.totalorder %v820, 4
        %v843 = vsel %vm839, %v823, %v826
        %v844 = vsel %vm842, %v832, 2102212464
        %v845 = vsel %vm841, %v829, %v844
        %v846 = vsel %vm840, %v843, %v845
        %v847 = vsel %vm839, %v826, %v829
        %v848 = vsel %vm842, %v835, 920167782
        %v849 = vsel %vm841, %v832, %v848
        %v850 = vsel %vm840, %v847, %v849
        %v851 = vsel %vm839, %v829, %v832
        %v852 = vsel %vm842, %v838, 1326507024
        %v853 = vsel %vm841, %v835, %v852
        %v854 = vsel %vm840, %v851, %v853
        %v855 = vshll.u32 %v815, 8
        %v856 = vmul.u32.u64.compose %v855, %v854
        %v857 = vextract.low.u32 %v856
        %v858 = vextract.high.u32 %v856
        %v859 = vmul.u32.u64.compose %v855, %v850
        %v860 = vextract.low.u32 %v859
        %v861 = vextract.high.u32 %v859
        %v862 = vmul.u32 %v855, %v846
        %v863 = vadd.s32 %v858, %v860
        %vm864 = vc.u32 %v858, %v860
        %v865 = vadd.s32 %v861, 1
        %v866 = vsel %vm864, %v865, %v861
        %v867 = vadd.s32 %v862, %v866
        %v868 = vadd.s32 %v867, 536870912
        %v869 = vshrl.u32 %v868, 30
        %v870 = vshll.u32 %v869, 30
        %v871 = vsub.s32 %v867, %v870
        %vm872 = vcmp.lt.s32.totalorder %v871, 0
        %v873 = vsub.s32 0, %v871
        %v874 = vsel %vm872, %v873, %v871
        %v875 = vclz %v874
        %v876 = vsub.s32 %v875, 2
        %vm877 = vcmp.gt.s32.totalorder 0, %v876
        %v878 = vsel %vm877, 0, %v876
        %v879 = vsub.s32 32, %v878
        %v880 = vshll.u32 %v871, %v878
        %v881 = vshrl.u32 %v863, %v879
        %v882 = vor.u32 %v880, %v881
        %v883 = vsub.s32 4294967266, %v878
        %v884 = vadd.s32 %v883, 127
        %v885 = vshll.u32 %v884, 23
        %v886 = vor.u32 4788187, %v885
        %v887 = vand.u32 2147483647, %v886
        %v889 = vcvt.s32.f32 %v882
        %v890 = vmul.f32 %v889, %v887
        %v891 = vxor.u32 %v890, 2147483648
        %v892 = vsel %vm809, %v891, %v890
        %v893 = vsub.s32 4, %v869
        %v894 = vsel %vm809, %v893, %v869
        %v895 = vsel %vm808, %v391, %v892
        %v896 = vsel %vm808, 0, %v894
        %v897 = vcosq.f32.pop %v895
        %v898 = vsinq.f32.pop %v895
        %vm899 = vweird.f32 %v391
        %v900 = vand.u32 %v896, 3
        %vm901 = vcmp.lt.s32.totalorder %v900, 2
        %vm902 = vcmp.eq.s32.totalorder %v900, 0
        %v903 = vxor.u32 %v898, 2147483648
        %v904 = vsel %vm902, %v897, %v903
        %vm905 = vcmp.eq.s32.totalorder %v900, 2
        %v906 = vxor.u32 %v897, 2147483648
        %v907 = vsel %vm905, %v906, %v898
        %v908 = vsel %vm901, %v904, %v907
        %v909 = vsel %vm899, nan, %v908
        %v910 = vand.u32 2147483647, %v392
        %vm911 = vcmp.le.f32.partialorder %v910, 0.7853982
        %vm912 = vcmp.lt.s32.totalorder %v392, 0
        %v913 = vand.u32 %v392, 2139095040
        %v914 = vshrl.u32 %v913, 23
        %v915 = vsub.s32 %v914, 127
        %v916 = vand.u32 2147483647, %v392
        %v917 = vand.u32 %v916, 8388607
        %v918 = vor.u32 %v917, 8388608
        %v919 = vsub.s32 0, %v918
        %v920 = vadd.s32 %v915, 1
        %vm921 = vcmp.gt.s32.totalorder %v920, 0
        %v922 = vsel %vm921, %v920, 0
        %v923 = vshrl.u32 %v922, 5
        %v924 = vand.u32 %v922, 31
        %v925 = vsub.s32 32, %v924
        %v926 = vshrl.u32 683565275, %v925
        %v927 = vshll.u32 683565275, %v924
        %v928 = vshrl.u32 2475754826, %v925
        %v929 = vor.u32 %v927, %v928
        %v930 = vshll.u32 2475754826, %v924
        %v931 = vshrl.u32 2131351028, %v925
        %v932 = vor.u32 %v930, %v931
        %v933 = vshll.u32 2131351028, %v924
        %v934 = vshrl.u32 2102212464, %v925
        %v935 = vor.u32 %v933, %v934
        %v936 = vshll.u32 2102212464, %v924
        %v937 = vshrl.u32 920167782, %v925
        %v938 = vor.u32 %v936, %v937
        %v939 = vshll.u32 920167782, %v924
        %v940 = vshrl.u32 1326507024, %v925
        %v941 = vor.u32 %v939, %v940
        %vm942 = vcmp.lt.s32.totalorder %v923, 1
        %vm943 = vcmp.lt.s32.totalorder %v923, 2
        %vm944 = vcmp.lt.s32.totalorder %v923, 3
        %vm945 = vcmp.lt.s32.totalorder %v923, 4
        %v946 = vsel %vm942, %v926, %v929
        %v947 = vsel %vm945, %v935, 2102212464
        %v948 = vsel %vm944, %v932, %v947
        %v949 = vsel %vm943, %v946, %v948
        %v950 = vsel %vm942, %v929, %v932
        %v951 = vsel %vm945, %v938, 920167782
        %v952 = vsel %vm944, %v935, %v951
        %v953 = vsel %vm943, %v950, %v952
        %v954 = vsel %vm942, %v932, %v935
        %v955 = vsel %vm945, %v941, 1326507024
        %v956 = vsel %vm944, %v938, %v955
        %v957 = vsel %vm943, %v954, %v956
        %v958 = vshll.u32 %v918, 8
        %v959 = vmul.u32.u64.compose %v958, %v957
        %v960 = vextract.low.u32 %v959
        %v961 = vextract.high.u32 %v959
        %v962 = vmul.u32.u64.compose %v958, %v953
        %v963 = vextract.low.u32 %v962
        %v964 = vextract.high.u32 %v962
        %v965 = vmul.u32 %v958, %v949
        %v966 = vadd.s32 %v961, %v963
        %vm967 = vc.u32 %v961, %v963
        %v968 = vadd.s32 %v964, 1
        %v969 = vsel %vm967, %v968, %v964
        %v970 = vadd.s32 %v965, %v969
        %v971 = vadd.s32 %v970, 536870912
        %v972 = vshrl.u32 %v971, 30
        %v973 = vshll.u32 %v972, 30
        %v974 = vsub.s32 %v970, %v973
        %vm975 = vcmp.lt.s32.totalorder %v974, 0
        %v976 = vsub.s32 0, %v974
        %v977 = vsel %vm975, %v976, %v974
        %v978 = vclz %v977
        %v979 = vsub.s32 %v978, 2
        %vm980 = vcmp.gt.s32.totalorder 0, %v979
        %v981 = vsel %vm980, 0, %v979
        %v982 = vsub.s32 32, %v981
        %v983 = vshll.u32 %v974, %v981
        %v984 = vshrl.u32 %v966, %v982
        %v985 = vor.u32 %v983, %v984
        %v986 = vsub.s32 4294967266, %v981
        %v987 = vadd.s32 %v986, 127
        %v988 = vshll.u32 %v987, 23
        %v989 = vor.u32 4788187, %v988
        %v990 = vand.u32 2147483647, %v989
        %v992 = vcvt.s32.f32 %v985
        %v993 = vmul.f32 %v992, %v990
        %v994 = vxor.u32 %v993, 2147483648
        %v995 = vsel %vm912, %v994, %v993
        %v996 = vsub.s32 4, %v972
        %v997 = vsel %vm912, %v996, %v972
        %v998 = vsel %vm911, %v392, %v995
        %v999 = vsel %vm911, 0, %v997
        %v1000 = vcosq.f32.pop %v998
        %v1001 = vsinq.f32.pop %v998
        %vm1002 = vweird.f32 %v392
        %v1003 = vand.u32 %v999, 3
        %vm1004 = vcmp.lt.s32.totalorder %v1003, 2
        %vm1005 = vcmp.eq.s32.totalorder %v1003, 0
        %v1006 = vxor.u32 %v1001, 2147483648
        %v1007 = vsel %vm1005, %v1000, %v1006
        %vm1008 = vcmp.eq.s32.totalorder %v1003, 2
        %v1009 = vxor.u32 %v1000, 2147483648
        %v1010 = vsel %vm1008, %v1009, %v1001
        %v1011 = vsel %vm1004, %v1007, %v1010
        %v1012 = vsel %vm1002, nan, %v1011
        %v1013 = vand.u32 2147483647, %v393
        %vm1014 = vcmp.le.f32.partialorder %v1013, 0.7853982
        %vm1015 = vcmp.lt.s32.totalorder %v393, 0
        %v1016 = vand.u32 %v393, 2139095040
        %v1017 = vshrl.u32 %v1016, 23
        %v1018 = vsub.s32 %v1017, 127
        %v1019 = vand.u32 2147483647, %v393
        %v1020 = vand.u32 %v1019, 8388607
        %v1021 = vor.u32 %v1020, 8388608
        %v1022 = vsub.s32 0, %v1021
        %v1023 = vadd.s32 %v1018, 1
        %vm1024 = vcmp.gt.s32.totalorder %v1023, 0
        %v1025 = vsel %vm1024, %v1023, 0
        %v1026 = vshrl.u32 %v1025, 5
        %v1027 = vand.u32 %v1025, 31
        %v1028 = vsub.s32 32, %v1027
        %v1029 = vshrl.u32 683565275, %v1028
        %v1030 = vshll.u32 683565275, %v1027
        %v1031 = vshrl.u32 2475754826, %v1028
        %v1032 = vor.u32 %v1030, %v1031
        %v1033 = vshll.u32 2475754826, %v1027
        %v1034 = vshrl.u32 2131351028, %v1028
        %v1035 = vor.u32 %v1033, %v1034
        %v1036 = vshll.u32 2131351028, %v1027
        %v1037 = vshrl.u32 2102212464, %v1028
        %v1038 = vor.u32 %v1036, %v1037
        %v1039 = vshll.u32 2102212464, %v1027
        %v1040 = vshrl.u32 920167782, %v1028
        %v1041 = vor.u32 %v1039, %v1040
        %v1042 = vshll.u32 920167782, %v1027
        %v1043 = vshrl.u32 1326507024, %v1028
        %v1044 = vor.u32 %v1042, %v1043
        %vm1045 = vcmp.lt.s32.totalorder %v1026, 1
        %vm1046 = vcmp.lt.s32.totalorder %v1026, 2
        %vm1047 = vcmp.lt.s32.totalorder %v1026, 3
        %vm1048 = vcmp.lt.s32.totalorder %v1026, 4
        %v1049 = vsel %vm1045, %v1029, %v1032
        %v1050 = vsel %vm1048, %v1038, 2102212464
        %v1051 = vsel %vm1047, %v1035, %v1050
        %v1052 = vsel %vm1046, %v1049, %v1051
        %v1053 = vsel %vm1045, %v1032, %v1035
        %v1054 = vsel %vm1048, %v1041, 920167782
        %v1055 = vsel %vm1047, %v1038, %v1054
        %v1056 = vsel %vm1046, %v1053, %v1055
        %v1057 = vsel %vm1045, %v1035, %v1038
        %v1058 = vsel %vm1048, %v1044, 1326507024
        %v1059 = vsel %vm1047, %v1041, %v1058
        %v1060 = vsel %vm1046, %v1057, %v1059
        %v1061 = vshll.u32 %v1021, 8
        %v1062 = vmul.u32.u64.compose %v1061, %v1060
        %v1063 = vextract.low.u32 %v1062
        %v1064 = vextract.high.u32 %v1062
        %v1065 = vmul.u32.u64.compose %v1061, %v1056
        %v1066 = vextract.low.u32 %v1065
        %v1067 = vextract.high.u32 %v1065
        %v1068 = vmul.u32 %v1061, %v1052
        %v1069 = vadd.s32 %v1064, %v1066
        %vm1070 = vc.u32 %v1064, %v1066
        %v1071 = vadd.s32 %v1067, 1
        %v1072 = vsel %vm1070, %v1071, %v1067
        %v1073 = vadd.s32 %v1068, %v1072
        %v1074 = vadd.s32 %v1073, 536870912
        %v1075 = vshrl.u32 %v1074, 30
        %v1076 = vshll.u32 %v1075, 30
        %v1077 = vsub.s32 %v1073, %v1076
        %vm1078 = vcmp.lt.s32.totalorder %v1077, 0
        %v1079 = vsub.s32 0, %v1077
        %v1080 = vsel %vm1078, %v1079, %v1077
        %v1081 = vclz %v1080
        %v1082 = vsub.s32 %v1081, 2
        %vm1083 = vcmp.gt.s32.totalorder 0, %v1082
        %v1084 = vsel %vm1083, 0, %v1082
        %v1085 = vsub.s32 32, %v1084
        %v1086 = vshll.u32 %v1077, %v1084
        %v1087 = vshrl.u32 %v1069, %v1085
        %v1088 = vor.u32 %v1086, %v1087
        %v1089 = vsub.s32 4294967266, %v1084
        %v1090 = vadd.s32 %v1089, 127
        %v1091 = vshll.u32 %v1090, 23
        %v1092 = vor.u32 4788187, %v1091
        %v1093 = vand.u32 2147483647, %v1092
        %v1095 = vcvt.s32.f32 %v1088
        %v1096 = vmul.f32 %v1095, %v1093
        %v1097 = vxor.u32 %v1096, 2147483648
        %v1098 = vsel %vm1015, %v1097, %v1096
        %v1099 = vsub.s32 4, %v1075
        %v1100 = vsel %vm1015, %v1099, %v1075
        %v1101 = vsel %vm1014, %v393, %v1098
        %v1102 = vsel %vm1014, 0, %v1100
        %v1103 = vcosq.f32.pop %v1101
        %v1104 = vsinq.f32.pop %v1101
        %vm1105 = vweird.f32 %v393
        %v1106 = vand.u32 %v1102, 3
        %vm1107 = vcmp.lt.s32.totalorder %v1106, 2
        %vm1108 = vcmp.eq.s32.totalorder %v1106, 0
        %v1109 = vxor.u32 %v1104, 2147483648
        %v1110 = vsel %vm1108, %v1103, %v1109
        %vm1111 = vcmp.eq.s32.totalorder %v1106, 2
        %v1112 = vxor.u32 %v1103, 2147483648
        %v1113 = vsel %vm1111, %v1112, %v1104
        %v1114 = vsel %vm1107, %v1110, %v1113
        %v1115 = vsel %vm1105, nan, %v1114
        %v1116 = vand.u32 2147483647, %v394
        %vm1117 = vcmp.le.f32.partialorder %v1116, 0.7853982
        %vm1118 = vcmp.lt.s32.totalorder %v394, 0
        %v1119 = vand.u32 %v394, 2139095040
        %v1120 = vshrl.u32 %v1119, 23
        %v1121 = vsub.s32 %v1120, 127
        %v1122 = vand.u32 2147483647, %v394
        %v1123 = vand.u32 %v1122, 8388607
        %v1124 = vor.u32 %v1123, 8388608
        %v1125 = vsub.s32 0, %v1124
        %v1126 = vadd.s32 %v1121, 1
        %vm1127 = vcmp.gt.s32.totalorder %v1126, 0
        %v1128 = vsel %vm1127, %v1126, 0
        %v1129 = vshrl.u32 %v1128, 5
        %v1130 = vand.u32 %v1128, 31
        %v1131 = vsub.s32 32, %v1130
        %v1132 = vshrl.u32 683565275, %v1131
        %v1133 = vshll.u32 683565275, %v1130
        %v1134 = vshrl.u32 2475754826, %v1131
        %v1135 = vor.u32 %v1133, %v1134
        %v1136 = vshll.u32 2475754826, %v1130
        %v1137 = vshrl.u32 2131351028, %v1131
        %v1138 = vor.u32 %v1136, %v1137
        %v1139 = vshll.u32 2131351028, %v1130
        %v1140 = vshrl.u32 2102212464, %v1131
        %v1141 = vor.u32 %v1139, %v1140
        %v1142 = vshll.u32 2102212464, %v1130
        %v1143 = vshrl.u32 920167782, %v1131
        %v1144 = vor.u32 %v1142, %v1143
        %v1145 = vshll.u32 920167782, %v1130
        %v1146 = vshrl.u32 1326507024, %v1131
        %v1147 = vor.u32 %v1145, %v1146
        %vm1148 = vcmp.lt.s32.totalorder %v1129, 1
        %vm1149 = vcmp.lt.s32.totalorder %v1129, 2
        %vm1150 = vcmp.lt.s32.totalorder %v1129, 3
        %vm1151 = vcmp.lt.s32.totalorder %v1129, 4
        %v1152 = vsel %vm1148, %v1132, %v1135
        %v1153 = vsel %vm1151, %v1141, 2102212464
        %v1154 = vsel %vm1150, %v1138, %v1153
        %v1155 = vsel %vm1149, %v1152, %v1154
        %v1156 = vsel %vm1148, %v1135, %v1138
        %v1157 = vsel %vm1151, %v1144, 920167782
        %v1158 = vsel %vm1150, %v1141, %v1157
        %v1159 = vsel %vm1149, %v1156, %v1158
        %v1160 = vsel %vm1148, %v1138, %v1141
        %v1161 = vsel %vm1151, %v1147, 1326507024
        %v1162 = vsel %vm1150, %v1144, %v1161
        %v1163 = vsel %vm1149, %v1160, %v1162
        %v1164 = vshll.u32 %v1124, 8
        %v1165 = vmul.u32.u64.compose %v1164, %v1163
        %v1166 = vextract.low.u32 %v1165
        %v1167 = vextract.high.u32 %v1165
        %v1168 = vmul.u32.u64.compose %v1164, %v1159
        %v1169 = vextract.low.u32 %v1168
        %v1170 = vextract.high.u32 %v1168
        %v1171 = vmul.u32 %v1164, %v1155
        %v1172 = vadd.s32 %v1167, %v1169
        %vm1173 = vc.u32 %v1167, %v1169
        %v1174 = vadd.s32 %v1170, 1
        %v1175 = vsel %vm1173, %v1174, %v1170
        %v1176 = vadd.s32 %v1171, %v1175
        %v1177 = vadd.s32 %v1176, 536870912
        %v1178 = vshrl.u32 %v1177, 30
        %v1179 = vshll.u32 %v1178, 30
        %v1180 = vsub.s32 %v1176, %v1179
        %vm1181 = vcmp.lt.s32.totalorder %v1180, 0
        %v1182 = vsub.s32 0, %v1180
        %v1183 = vsel %vm1181, %v1182, %v1180
        %v1184 = vclz %v1183
        %v1185 = vsub.s32 %v1184, 2
        %vm1186 = vcmp.gt.s32.totalorder 0, %v1185
        %v1187 = vsel %vm1186, 0, %v1185
        %v1188 = vsub.s32 32, %v1187
        %v1189 = vshll.u32 %v1180, %v1187
        %v1190 = vshrl.u32 %v1172, %v1188
        %v1191 = vor.u32 %v1189, %v1190
        %v1192 = vsub.s32 4294967266, %v1187
        %v1193 = vadd.s32 %v1192, 127
        %v1194 = vshll.u32 %v1193, 23
        %v1195 = vor.u32 4788187, %v1194
        %v1196 = vand.u32 2147483647, %v1195
        %v1198 = vcvt.s32.f32 %v1191
        %v1199 = vmul.f32 %v1198, %v1196
        %v1200 = vxor.u32 %v1199, 2147483648
        %v1201 = vsel %vm1118, %v1200, %v1199
        %v1202 = vsub.s32 4, %v1178
        %v1203 = vsel %vm1118, %v1202, %v1178
        %v1204 = vsel %vm1117, %v394, %v1201
        %v1205 = vsel %vm1117, 0, %v1203
        %v1206 = vcosq.f32.pop %v1204
        %v1207 = vsinq.f32.pop %v1204
        %vm1208 = vweird.f32 %v394
        %v1209 = vand.u32 %v1205, 3
        %vm1210 = vcmp.lt.s32.totalorder %v1209, 2
        %vm1211 = vcmp.eq.s32.totalorder %v1209, 0
        %v1212 = vxor.u32 %v1207, 2147483648
        %v1213 = vsel %vm1211, %v1206, %v1212
        %vm1214 = vcmp.eq.s32.totalorder %v1209, 2
        %v1215 = vxor.u32 %v1206, 2147483648
        %v1216 = vsel %vm1214, %v1215, %v1207
        %v1217 = vsel %vm1210, %v1213, %v1216
        %v1218 = vsel %vm1208, nan, %v1217
        %v1219 = vand.u32 2147483647, %v387
        %vm1220 = vcmp.le.f32.partialorder %v1219, 0.7853982
        %vm1221 = vcmp.lt.s32.totalorder %v387, 0
        %v1222 = vand.u32 %v387, 2139095040
        %v1223 = vshrl.u32 %v1222, 23
        %v1224 = vsub.s32 %v1223, 127
        %v1225 = vand.u32 2147483647, %v387
        %v1226 = vand.u32 %v1225, 8388607
        %v1227 = vor.u32 %v1226, 8388608
        %v1228 = vsub.s32 0, %v1227
        %v1229 = vadd.s32 %v1224, 1
        %vm1230 = vcmp.gt.s32.totalorder %v1229, 0
        %v1231 = vsel %vm1230, %v1229, 0
        %v1232 = vshrl.u32 %v1231, 5
        %v1233 = vand.u32 %v1231, 31
        %v1234 = vsub.s32 32, %v1233
        %v1235 = vshrl.u32 683565275, %v1234
        %v1236 = vshll.u32 683565275, %v1233
        %v1237 = vshrl.u32 2475754826, %v1234
        %v1238 = vor.u32 %v1236, %v1237
        %v1239 = vshll.u32 2475754826, %v1233
        %v1240 = vshrl.u32 2131351028, %v1234
        %v1241 = vor.u32 %v1239, %v1240
        %v1242 = vshll.u32 2131351028, %v1233
        %v1243 = vshrl.u32 2102212464, %v1234
        %v1244 = vor.u32 %v1242, %v1243
        %v1245 = vshll.u32 2102212464, %v1233
        %v1246 = vshrl.u32 920167782, %v1234
        %v1247 = vor.u32 %v1245, %v1246
        %v1248 = vshll.u32 920167782, %v1233
        %v1249 = vshrl.u32 1326507024, %v1234
        %v1250 = vor.u32 %v1248, %v1249
        %vm1251 = vcmp.lt.s32.totalorder %v1232, 1
        %vm1252 = vcmp.lt.s32.totalorder %v1232, 2
        %vm1253 = vcmp.lt.s32.totalorder %v1232, 3
        %vm1254 = vcmp.lt.s32.totalorder %v1232, 4
        %v1255 = vsel %vm1251, %v1235, %v1238
        %v1256 = vsel %vm1254, %v1244, 2102212464
        %v1257 = vsel %vm1253, %v1241, %v1256
        %v1258 = vsel %vm1252, %v1255, %v1257
        %v1259 = vsel %vm1251, %v1238, %v1241
        %v1260 = vsel %vm1254, %v1247, 920167782
        %v1261 = vsel %vm1253, %v1244, %v1260
        %v1262 = vsel %vm1252, %v1259, %v1261
        %v1263 = vsel %vm1251, %v1241, %v1244
        %v1264 = vsel %vm1254, %v1250, 1326507024
        %v1265 = vsel %vm1253, %v1247, %v1264
        %v1266 = vsel %vm1252, %v1263, %v1265
        %v1267 = vshll.u32 %v1227, 8
        %v1268 = vmul.u32.u64.compose %v1267, %v1266
        %v1269 = vextract.low.u32 %v1268
        %v1270 = vextract.high.u32 %v1268
        %v1271 = vmul.u32.u64.compose %v1267, %v1262
        %v1272 = vextract.low.u32 %v1271
        %v1273 = vextract.high.u32 %v1271
        %v1274 = vmul.u32 %v1267, %v1258
        %v1275 = vadd.s32 %v1270, %v1272
        %vm1276 = vc.u32 %v1270, %v1272
        %v1277 = vadd.s32 %v1273, 1
        %v1278 = vsel %vm1276, %v1277, %v1273
        %v1279 = vadd.s32 %v1274, %v1278
        %v1280 = vadd.s32 %v1279, 536870912
        %v1281 = vshrl.u32 %v1280, 30
        %v1282 = vshll.u32 %v1281, 30
        %v1283 = vsub.s32 %v1279, %v1282
        %vm1284 = vcmp.lt.s32.totalorder %v1283, 0
        %v1285 = vsub.s32 0, %v1283
        %v1286 = vsel %vm1284, %v1285, %v1283
        %v1287 = vclz %v1286
        %v1288 = vsub.s32 %v1287, 2
        %vm1289 = vcmp.gt.s32.totalorder 0, %v1288
        %v1290 = vsel %vm1289, 0, %v1288
        %v1291 = vsub.s32 32, %v1290
        %v1292 = vshll.u32 %v1283, %v1290
        %v1293 = vshrl.u32 %v1275, %v1291
        %v1294 = vor.u32 %v1292, %v1293
        %v1295 = vsub.s32 4294967266, %v1290
        %v1296 = vadd.s32 %v1295, 127
        %v1297 = vshll.u32 %v1296, 23
        %v1298 = vor.u32 4788187, %v1297
        %v1299 = vand.u32 2147483647, %v1298
        %v1301 = vcvt.s32.f32 %v1294
        %v1302 = vmul.f32 %v1301, %v1299
        %v1303 = vxor.u32 %v1302, 2147483648
        %v1304 = vsel %vm1221, %v1303, %v1302
        %v1305 = vsub.s32 4, %v1281
        %v1306 = vsel %vm1221, %v1305, %v1281
        %v1307 = vsel %vm1220, %v387, %v1304
        %v1308 = vsel %vm1220, 0, %v1306
        %v1309 = vcosq.f32.pop %v1307
        %v1310 = vsinq.f32.pop %v1307
        %vm1311 = vweird.f32 %v387
        %v1312 = vadd.s32 %v1308, 3
        %v1313 = vand.u32 %v1312, 3
        %vm1314 = vcmp.lt.s32.totalorder %v1313, 2
        %vm1315 = vcmp.eq.s32.totalorder %v1313, 0
        %v1316 = vxor.u32 %v1310, 2147483648
        %v1317 = vsel %vm1315, %v1309, %v1316
        %vm1318 = vcmp.eq.s32.totalorder %v1313, 2
        %v1319 = vxor.u32 %v1309, 2147483648
        %v1320 = vsel %vm1318, %v1319, %v1310
        %v1321 = vsel %vm1314, %v1317, %v1320
        %v1322 = vsel %vm1311, nan, %v1321
        %v1323 = vand.u32 2147483647, %v388
        %vm1324 = vcmp.le.f32.partialorder %v1323, 0.7853982
        %vm1325 = vcmp.lt.s32.totalorder %v388, 0
        %v1326 = vand.u32 %v388, 2139095040
        %v1327 = vshrl.u32 %v1326, 23
        %v1328 = vsub.s32 %v1327, 127
        %v1329 = vand.u32 2147483647, %v388
        %v1330 = vand.u32 %v1329, 8388607
        %v1331 = vor.u32 %v1330, 8388608
        %v1332 = vsub.s32 0, %v1331
        %v1333 = vadd.s32 %v1328, 1
        %vm1334 = vcmp.gt.s32.totalorder %v1333, 0
        %v1335 = vsel %vm1334, %v1333, 0
        %v1336 = vshrl.u32 %v1335, 5
        %v1337 = vand.u32 %v1335, 31
        %v1338 = vsub.s32 32, %v1337
        %v1339 = vshrl.u32 683565275, %v1338
        %v1340 = vshll.u32 683565275, %v1337
        %v1341 = vshrl.u32 2475754826, %v1338
        %v1342 = vor.u32 %v1340, %v1341
        %v1343 = vshll.u32 2475754826, %v1337
        %v1344 = vshrl.u32 2131351028, %v1338
        %v1345 = vor.u32 %v1343, %v1344
        %v1346 = vshll.u32 2131351028, %v1337
        %v1347 = vshrl.u32 2102212464, %v1338
        %v1348 = vor.u32 %v1346, %v1347
        %v1349 = vshll.u32 2102212464, %v1337
        %v1350 = vshrl.u32 920167782, %v1338
        %v1351 = vor.u32 %v1349, %v1350
        %v1352 = vshll.u32 920167782, %v1337
        %v1353 = vshrl.u32 1326507024, %v1338
        %v1354 = vor.u32 %v1352, %v1353
        %vm1355 = vcmp.lt.s32.totalorder %v1336, 1
        %vm1356 = vcmp.lt.s32.totalorder %v1336, 2
        %vm1357 = vcmp.lt.s32.totalorder %v1336, 3
        %vm1358 = vcmp.lt.s32.totalorder %v1336, 4
        %v1359 = vsel %vm1355, %v1339, %v1342
        %v1360 = vsel %vm1358, %v1348, 2102212464
        %v1361 = vsel %vm1357, %v1345, %v1360
        %v1362 = vsel %vm1356, %v1359, %v1361
        %v1363 = vsel %vm1355, %v1342, %v1345
        %v1364 = vsel %vm1358, %v1351, 920167782
        %v1365 = vsel %vm1357, %v1348, %v1364
        %v1366 = vsel %vm1356, %v1363, %v1365
        %v1367 = vsel %vm1355, %v1345, %v1348
        %v1368 = vsel %vm1358, %v1354, 1326507024
        %v1369 = vsel %vm1357, %v1351, %v1368
        %v1370 = vsel %vm1356, %v1367, %v1369
        %v1371 = vshll.u32 %v1331, 8
        %v1372 = vmul.u32.u64.compose %v1371, %v1370
        %v1373 = vextract.low.u32 %v1372
        %v1374 = vextract.high.u32 %v1372
        %v1375 = vmul.u32.u64.compose %v1371, %v1366
        %v1376 = vextract.low.u32 %v1375
        %v1377 = vextract.high.u32 %v1375
        %v1378 = vmul.u32 %v1371, %v1362
        %v1379 = vadd.s32 %v1374, %v1376
        %vm1380 = vc.u32 %v1374, %v1376
        %v1381 = vadd.s32 %v1377, 1
        %v1382 = vsel %vm1380, %v1381, %v1377
        %v1383 = vadd.s32 %v1378, %v1382
        %v1384 = vadd.s32 %v1383, 536870912
        %v1385 = vshrl.u32 %v1384, 30
        %v1386 = vshll.u32 %v1385, 30
        %v1387 = vsub.s32 %v1383, %v1386
        %vm1388 = vcmp.lt.s32.totalorder %v1387, 0
        %v1389 = vsub.s32 0, %v1387
        %v1390 = vsel %vm1388, %v1389, %v1387
        %v1391 = vclz %v1390
        %v1392 = vsub.s32 %v1391, 2
        %vm1393 = vcmp.gt.s32.totalorder 0, %v1392
        %v1394 = vsel %vm1393, 0, %v1392
        %v1395 = vsub.s32 32, %v1394
        %v1396 = vshll.u32 %v1387, %v1394
        %v1397 = vshrl.u32 %v1379, %v1395
        %v1398 = vor.u32 %v1396, %v1397
        %v1399 = vsub.s32 4294967266, %v1394
        %v1400 = vadd.s32 %v1399, 127
        %v1401 = vshll.u32 %v1400, 23
        %v1402 = vor.u32 4788187, %v1401
        %v1403 = vand.u32 2147483647, %v1402
        %v1405 = vcvt.s32.f32 %v1398
        %v1406 = vmul.f32 %v1405, %v1403
        %v1407 = vxor.u32 %v1406, 2147483648
        %v1408 = vsel %vm1325, %v1407, %v1406
        %v1409 = vsub.s32 4, %v1385
        %v1410 = vsel %vm1325, %v1409, %v1385
        %v1411 = vsel %vm1324, %v388, %v1408
        %v1412 = vsel %vm1324, 0, %v1410
        %v1413 = vcosq.f32.pop %v1411
        %v1414 = vsinq.f32.pop %v1411
        %vm1415 = vweird.f32 %v388
        %v1416 = vadd.s32 %v1412, 3
        %v1417 = vand.u32 %v1416, 3
        %vm1418 = vcmp.lt.s32.totalorder %v1417, 2
        %vm1419 = vcmp.eq.s32.totalorder %v1417, 0
        %v1420 = vxor.u32 %v1414, 2147483648
        %v1421 = vsel %vm1419, %v1413, %v1420
        %vm1422 = vcmp.eq.s32.totalorder %v1417, 2
        %v1423 = vxor.u32 %v1413, 2147483648
        %v1424 = vsel %vm1422, %v1423, %v1414
        %v1425 = vsel %vm1418, %v1421, %v1424
        %v1426 = vsel %vm1415, nan, %v1425
        %v1427 = vand.u32 2147483647, %v389
        %vm1428 = vcmp.le.f32.partialorder %v1427, 0.7853982
        %vm1429 = vcmp.lt.s32.totalorder %v389, 0
        %v1430 = vand.u32 %v389, 2139095040
        %v1431 = vshrl.u32 %v1430, 23
        %v1432 = vsub.s32 %v1431, 127
        %v1433 = vand.u32 2147483647, %v389
        %v1434 = vand.u32 %v1433, 8388607
        %v1435 = vor.u32 %v1434, 8388608
        %v1436 = vsub.s32 0, %v1435
        %v1437 = vadd.s32 %v1432, 1
        %vm1438 = vcmp.gt.s32.totalorder %v1437, 0
        %v1439 = vsel %vm1438, %v1437, 0
        %v1440 = vshrl.u32 %v1439, 5
        %v1441 = vand.u32 %v1439, 31
        %v1442 = vsub.s32 32, %v1441
        %v1443 = vshrl.u32 683565275, %v1442
        %v1444 = vshll.u32 683565275, %v1441
        %v1445 = vshrl.u32 2475754826, %v1442
        %v1446 = vor.u32 %v1444, %v1445
        %v1447 = vshll.u32 2475754826, %v1441
        %v1448 = vshrl.u32 2131351028, %v1442
        %v1449 = vor.u32 %v1447, %v1448
        %v1450 = vshll.u32 2131351028, %v1441
        %v1451 = vshrl.u32 2102212464, %v1442
        %v1452 = vor.u32 %v1450, %v1451
        %v1453 = vshll.u32 2102212464, %v1441
        %v1454 = vshrl.u32 920167782, %v1442
        %v1455 = vor.u32 %v1453, %v1454
        %v1456 = vshll.u32 920167782, %v1441
        %v1457 = vshrl.u32 1326507024, %v1442
        %v1458 = vor.u32 %v1456, %v1457
        %vm1459 = vcmp.lt.s32.totalorder %v1440, 1
        %vm1460 = vcmp.lt.s32.totalorder %v1440, 2
        %vm1461 = vcmp.lt.s32.totalorder %v1440, 3
        %vm1462 = vcmp.lt.s32.totalorder %v1440, 4
        %v1463 = vsel %vm1459, %v1443, %v1446
        %v1464 = vsel %vm1462, %v1452, 2102212464
        %v1465 = vsel %vm1461, %v1449, %v1464
        %v1466 = vsel %vm1460, %v1463, %v1465
        %v1467 = vsel %vm1459, %v1446, %v1449
        %v1468 = vsel %vm1462, %v1455, 920167782
        %v1469 = vsel %vm1461, %v1452, %v1468
        %v1470 = vsel %vm1460, %v1467, %v1469
        %v1471 = vsel %vm1459, %v1449, %v1452
        %v1472 = vsel %vm1462, %v1458, 1326507024
        %v1473 = vsel %vm1461, %v1455, %v1472
        %v1474 = vsel %vm1460, %v1471, %v1473
        %v1475 = vshll.u32 %v1435, 8
        %v1476 = vmul.u32.u64.compose %v1475, %v1474
        %v1477 = vextract.low.u32 %v1476
        %v1478 = vextract.high.u32 %v1476
        %v1479 = vmul.u32.u64.compose %v1475, %v1470
        %v1480 = vextract.low.u32 %v1479
        %v1481 = vextract.high.u32 %v1479
        %v1482 = vmul.u32 %v1475, %v1466
        %v1483 = vadd.s32 %v1478, %v1480
        %vm1484 = vc.u32 %v1478, %v1480
        %v1485 = vadd.s32 %v1481, 1
        %v1486 = vsel %vm1484, %v1485, %v1481
        %v1487 = vadd.s32 %v1482, %v1486
        %v1488 = vadd.s32 %v1487, 536870912
        %v1489 = vshrl.u32 %v1488, 30
        %v1490 = vshll.u32 %v1489, 30
        %v1491 = vsub.s32 %v1487, %v1490
        %vm1492 = vcmp.lt.s32.totalorder %v1491, 0
        %v1493 = vsub.s32 0, %v1491
        %v1494 = vsel %vm1492, %v1493, %v1491
        %v1495 = vclz %v1494
        %v1496 = vsub.s32 %v1495, 2
        %vm1497 = vcmp.gt.s32.totalorder 0, %v1496
        %v1498 = vsel %vm1497, 0, %v1496
        %v1499 = vsub.s32 32, %v1498
        %v1500 = vshll.u32 %v1491, %v1498
        %v1501 = vshrl.u32 %v1483, %v1499
        %v1502 = vor.u32 %v1500, %v1501
        %v1503 = vsub.s32 4294967266, %v1498
        %v1504 = vadd.s32 %v1503, 127
        %v1505 = vshll.u32 %v1504, 23
        %v1506 = vor.u32 4788187, %v1505
        %v1507 = vand.u32 2147483647, %v1506
        %v1509 = vcvt.s32.f32 %v1502
        %v1510 = vmul.f32 %v1509, %v1507
        %v1511 = vxor.u32 %v1510, 2147483648
        %v1512 = vsel %vm1429, %v1511, %v1510
        %v1513 = vsub.s32 4, %v1489
        %v1514 = vsel %vm1429, %v1513, %v1489
        %v1515 = vsel %vm1428, %v389, %v1512
        %v1516 = vsel %vm1428, 0, %v1514
        %v1517 = vcosq.f32.pop %v1515
        %v1518 = vsinq.f32.pop %v1515
        %vm1519 = vweird.f32 %v389
        %v1520 = vadd.s32 %v1516, 3
        %v1521 = vand.u32 %v1520, 3
        %vm1522 = vcmp.lt.s32.totalorder %v1521, 2
        %vm1523 = vcmp.eq.s32.totalorder %v1521, 0
        %v1524 = vxor.u32 %v1518, 2147483648
        %v1525 = vsel %vm1523, %v1517, %v1524
        %vm1526 = vcmp.eq.s32.totalorder %v1521, 2
        %v1527 = vxor.u32 %v1517, 2147483648
        %v1528 = vsel %vm1526, %v1527, %v1518
        %v1529 = vsel %vm1522, %v1525, %v1528
        %v1530 = vsel %vm1519, nan, %v1529
        %v1531 = vand.u32 2147483647, %v390
        %vm1532 = vcmp.le.f32.partialorder %v1531, 0.7853982
        %vm1533 = vcmp.lt.s32.totalorder %v390, 0
        %v1534 = vand.u32 %v390, 2139095040
        %v1535 = vshrl.u32 %v1534, 23
        %v1536 = vsub.s32 %v1535, 127
        %v1537 = vand.u32 2147483647, %v390
        %v1538 = vand.u32 %v1537, 8388607
        %v1539 = vor.u32 %v1538, 8388608
        %v1540 = vsub.s32 0, %v1539
        %v1541 = vadd.s32 %v1536, 1
        %vm1542 = vcmp.gt.s32.totalorder %v1541, 0
        %v1543 = vsel %vm1542, %v1541, 0
        %v1544 = vshrl.u32 %v1543, 5
        %v1545 = vand.u32 %v1543, 31
        %v1546 = vsub.s32 32, %v1545
        %v1547 = vshrl.u32 683565275, %v1546
        %v1548 = vshll.u32 683565275, %v1545
        %v1549 = vshrl.u32 2475754826, %v1546
        %v1550 = vor.u32 %v1548, %v1549
        %v1551 = vshll.u32 2475754826, %v1545
        %v1552 = vshrl.u32 2131351028, %v1546
        %v1553 = vor.u32 %v1551, %v1552
        %v1554 = vshll.u32 2131351028, %v1545
        %v1555 = vshrl.u32 2102212464, %v1546
        %v1556 = vor.u32 %v1554, %v1555
        %v1557 = vshll.u32 2102212464, %v1545
        %v1558 = vshrl.u32 920167782, %v1546
        %v1559 = vor.u32 %v1557, %v1558
        %v1560 = vshll.u32 920167782, %v1545
        %v1561 = vshrl.u32 1326507024, %v1546
        %v1562 = vor.u32 %v1560, %v1561
        %vm1563 = vcmp.lt.s32.totalorder %v1544, 1
        %vm1564 = vcmp.lt.s32.totalorder %v1544, 2
        %vm1565 = vcmp.lt.s32.totalorder %v1544, 3
        %vm1566 = vcmp.lt.s32.totalorder %v1544, 4
        %v1567 = vsel %vm1563, %v1547, %v1550
        %v1568 = vsel %vm1566, %v1556, 2102212464
        %v1569 = vsel %vm1565, %v1553, %v1568
        %v1570 = vsel %vm1564, %v1567, %v1569
        %v1571 = vsel %vm1563, %v1550, %v1553
        %v1572 = vsel %vm1566, %v1559, 920167782
        %v1573 = vsel %vm1565, %v1556, %v1572
        %v1574 = vsel %vm1564, %v1571, %v1573
        %v1575 = vsel %vm1563, %v1553, %v1556
        %v1576 = vsel %vm1566, %v1562, 1326507024
        %v1577 = vsel %vm1565, %v1559, %v1576
        %v1578 = vsel %vm1564, %v1575, %v1577
        %v1579 = vshll.u32 %v1539, 8
        %v1580 = vmul.u32.u64.compose %v1579, %v1578
        %v1581 = vextract.low.u32 %v1580
        %v1582 = vextract.high.u32 %v1580
        %v1583 = vmul.u32.u64.compose %v1579, %v1574
        %v1584 = vextract.low.u32 %v1583
        %v1585 = vextract.high.u32 %v1583
        %v1586 = vmul.u32 %v1579, %v1570
        %v1587 = vadd.s32 %v1582, %v1584
        %vm1588 = vc.u32 %v1582, %v1584
        %v1589 = vadd.s32 %v1585, 1
        %v1590 = vsel %vm1588, %v1589, %v1585
        %v1591 = vadd.s32 %v1586, %v1590
        %v1592 = vadd.s32 %v1591, 536870912
        %v1593 = vshrl.u32 %v1592, 30
        %v1594 = vshll.u32 %v1593, 30
        %v1595 = vsub.s32 %v1591, %v1594
        %vm1596 = vcmp.lt.s32.totalorder %v1595, 0
        %v1597 = vsub.s32 0, %v1595
        %v1598 = vsel %vm1596, %v1597, %v1595
        %v1599 = vclz %v1598
        %v1600 = vsub.s32 %v1599, 2
        %vm1601 = vcmp.gt.s32.totalorder 0, %v1600
        %v1602 = vsel %vm1601, 0, %v1600
        %v1603 = vsub.s32 32, %v1602
        %v1604 = vshll.u32 %v1595, %v1602
        %v1605 = vshrl.u32 %v1587, %v1603
        %v1606 = vor.u32 %v1604, %v1605
        %v1607 = vsub.s32 4294967266, %v1602
        %v1608 = vadd.s32 %v1607, 127
        %v1609 = vshll.u32 %v1608, 23
        %v1610 = vor.u32 4788187, %v1609
        %v1611 = vand.u32 2147483647, %v1610
        %v1613 = vcvt.s32.f32 %v1606
        %v1614 = vmul.f32 %v1613, %v1611
        %v1615 = vxor.u32 %v1614, 2147483648
        %v1616 = vsel %vm1533, %v1615, %v1614
        %v1617 = vsub.s32 4, %v1593
        %v1618 = vsel %vm1533, %v1617, %v1593
        %v1619 = vsel %vm1532, %v390, %v1616
        %v1620 = vsel %vm1532, 0, %v1618
        %v1621 = vcosq.f32.pop %v1619
        %v1622 = vsinq.f32.pop %v1619
        %vm1623 = vweird.f32 %v390
        %v1624 = vadd.s32 %v1620, 3
        %v1625 = vand.u32 %v1624, 3
        %vm1626 = vcmp.lt.s32.totalorder %v1625, 2
        %vm1627 = vcmp.eq.s32.totalorder %v1625, 0
        %v1628 = vxor.u32 %v1622, 2147483648
        %v1629 = vsel %vm1627, %v1621, %v1628
        %vm1630 = vcmp.eq.s32.totalorder %v1625, 2
        %v1631 = vxor.u32 %v1621, 2147483648
        %v1632 = vsel %vm1630, %v1631, %v1622
        %v1633 = vsel %vm1626, %v1629, %v1632
        %v1634 = vsel %vm1623, nan, %v1633
        %v1635 = vand.u32 2147483647, %v391
        %vm1636 = vcmp.le.f32.partialorder %v1635, 0.7853982
        %vm1637 = vcmp.lt.s32.totalorder %v391, 0
        %v1638 = vand.u32 %v391, 2139095040
        %v1639 = vshrl.u32 %v1638, 23
        %v1640 = vsub.s32 %v1639, 127
        %v1641 = vand.u32 2147483647, %v391
        %v1642 = vand.u32 %v1641, 8388607
        %v1643 = vor.u32 %v1642, 8388608
        %v1644 = vsub.s32 0, %v1643
        %v1645 = vadd.s32 %v1640, 1
        %vm1646 = vcmp.gt.s32.totalorder %v1645, 0
        %v1647 = vsel %vm1646, %v1645, 0
        %v1648 = vshrl.u32 %v1647, 5
        %v1649 = vand.u32 %v1647, 31
        %v1650 = vsub.s32 32, %v1649
        %v1651 = vshrl.u32 683565275, %v1650
        %v1652 = vshll.u32 683565275, %v1649
        %v1653 = vshrl.u32 2475754826, %v1650
        %v1654 = vor.u32 %v1652, %v1653
        %v1655 = vshll.u32 2475754826, %v1649
        %v1656 = vshrl.u32 2131351028, %v1650
        %v1657 = vor.u32 %v1655, %v1656
        %v1658 = vshll.u32 2131351028, %v1649
        %v1659 = vshrl.u32 2102212464, %v1650
        %v1660 = vor.u32 %v1658, %v1659
        %v1661 = vshll.u32 2102212464, %v1649
        %v1662 = vshrl.u32 920167782, %v1650
        %v1663 = vor.u32 %v1661, %v1662
        %v1664 = vshll.u32 920167782, %v1649
        %v1665 = vshrl.u32 1326507024, %v1650
        %v1666 = vor.u32 %v1664, %v1665
        %vm1667 = vcmp.lt.s32.totalorder %v1648, 1
        %vm1668 = vcmp.lt.s32.totalorder %v1648, 2
        %vm1669 = vcmp.lt.s32.totalorder %v1648, 3
        %vm1670 = vcmp.lt.s32.totalorder %v1648, 4
        %v1671 = vsel %vm1667, %v1651, %v1654
        %v1672 = vsel %vm1670, %v1660, 2102212464
        %v1673 = vsel %vm1669, %v1657, %v1672
        %v1674 = vsel %vm1668, %v1671, %v1673
        %v1675 = vsel %vm1667, %v1654, %v1657
        %v1676 = vsel %vm1670, %v1663, 920167782
        %v1677 = vsel %vm1669, %v1660, %v1676
        %v1678 = vsel %vm1668, %v1675, %v1677
        %v1679 = vsel %vm1667, %v1657, %v1660
        %v1680 = vsel %vm1670, %v1666, 1326507024
        %v1681 = vsel %vm1669, %v1663, %v1680
        %v1682 = vsel %vm1668, %v1679, %v1681
        %v1683 = vshll.u32 %v1643, 8
        %v1684 = vmul.u32.u64.compose %v1683, %v1682
        %v1685 = vextract.low.u32 %v1684
        %v1686 = vextract.high.u32 %v1684
        %v1687 = vmul.u32.u64.compose %v1683, %v1678
        %v1688 = vextract.low.u32 %v1687
        %v1689 = vextract.high.u32 %v1687
        %v1690 = vmul.u32 %v1683, %v1674
        %v1691 = vadd.s32 %v1686, %v1688
        %vm1692 = vc.u32 %v1686, %v1688
        %v1693 = vadd.s32 %v1689, 1
        %v1694 = vsel %vm1692, %v1693, %v1689
        %v1695 = vadd.s32 %v1690, %v1694
        %v1696 = vadd.s32 %v1695, 536870912
        %v1697 = vshrl.u32 %v1696, 30
        %v1698 = vshll.u32 %v1697, 30
        %v1699 = vsub.s32 %v1695, %v1698
        %vm1700 = vcmp.lt.s32.totalorder %v1699, 0
        %v1701 = vsub.s32 0, %v1699
        %v1702 = vsel %vm1700, %v1701, %v1699
        %v1703 = vclz %v1702
        %v1704 = vsub.s32 %v1703, 2
        %vm1705 = vcmp.gt.s32.totalorder 0, %v1704
        %v1706 = vsel %vm1705, 0, %v1704
        %v1707 = vsub.s32 32, %v1706
        %v1708 = vshll.u32 %v1699, %v1706
        %v1709 = vshrl.u32 %v1691, %v1707
        %v1710 = vor.u32 %v1708, %v1709
        %v1711 = vsub.s32 4294967266, %v1706
        %v1712 = vadd.s32 %v1711, 127
        %v1713 = vshll.u32 %v1712, 23
        %v1714 = vor.u32 4788187, %v1713
        %v1715 = vand.u32 2147483647, %v1714
        %v1717 = vcvt.s32.f32 %v1710
        %v1718 = vmul.f32 %v1717, %v1715
        %v1719 = vxor.u32 %v1718, 2147483648
        %v1720 = vsel %vm1637, %v1719, %v1718
        %v1721 = vsub.s32 4, %v1697
        %v1722 = vsel %vm1637, %v1721, %v1697
        %v1723 = vsel %vm1636, %v391, %v1720
        %v1724 = vsel %vm1636, 0, %v1722
        %v1725 = vcosq.f32.pop %v1723
        %v1726 = vsinq.f32.pop %v1723
        %vm1727 = vweird.f32 %v391
        %v1728 = vadd.s32 %v1724, 3
        %v1729 = vand.u32 %v1728, 3
        %vm1730 = vcmp.lt.s32.totalorder %v1729, 2
        %vm1731 = vcmp.eq.s32.totalorder %v1729, 0
        %v1732 = vxor.u32 %v1726, 2147483648
        %v1733 = vsel %vm1731, %v1725, %v1732
        %vm1734 = vcmp.eq.s32.totalorder %v1729, 2
        %v1735 = vxor.u32 %v1725, 2147483648
        %v1736 = vsel %vm1734, %v1735, %v1726
        %v1737 = vsel %vm1730, %v1733, %v1736
        %v1738 = vsel %vm1727, nan, %v1737
        %v1739 = vand.u32 2147483647, %v392
        %vm1740 = vcmp.le.f32.partialorder %v1739, 0.7853982
        %vm1741 = vcmp.lt.s32.totalorder %v392, 0
        %v1742 = vand.u32 %v392, 2139095040
        %v1743 = vshrl.u32 %v1742, 23
        %v1744 = vsub.s32 %v1743, 127
        %v1745 = vand.u32 2147483647, %v392
        %v1746 = vand.u32 %v1745, 8388607
        %v1747 = vor.u32 %v1746, 8388608
        %v1748 = vsub.s32 0, %v1747
        %v1749 = vadd.s32 %v1744, 1
        %vm1750 = vcmp.gt.s32.totalorder %v1749, 0
        %v1751 = vsel %vm1750, %v1749, 0
        %v1752 = vshrl.u32 %v1751, 5
        %v1753 = vand.u32 %v1751, 31
        %v1754 = vsub.s32 32, %v1753
        %v1755 = vshrl.u32 683565275, %v1754
        %v1756 = vshll.u32 683565275, %v1753
        %v1757 = vshrl.u32 2475754826, %v1754
        %v1758 = vor.u32 %v1756, %v1757
        %v1759 = vshll.u32 2475754826, %v1753
        %v1760 = vshrl.u32 2131351028, %v1754
        %v1761 = vor.u32 %v1759, %v1760
        %v1762 = vshll.u32 2131351028, %v1753
        %v1763 = vshrl.u32 2102212464, %v1754
        %v1764 = vor.u32 %v1762, %v1763
        %v1765 = vshll.u32 2102212464, %v1753
        %v1766 = vshrl.u32 920167782, %v1754
        %v1767 = vor.u32 %v1765, %v1766
        %v1768 = vshll.u32 920167782, %v1753
        %v1769 = vshrl.u32 1326507024, %v1754
        %v1770 = vor.u32 %v1768, %v1769
        %vm1771 = vcmp.lt.s32.totalorder %v1752, 1
        %vm1772 = vcmp.lt.s32.totalorder %v1752, 2
        %vm1773 = vcmp.lt.s32.totalorder %v1752, 3
        %vm1774 = vcmp.lt.s32.totalorder %v1752, 4
        %v1775 = vsel %vm1771, %v1755, %v1758
        %v1776 = vsel %vm1774, %v1764, 2102212464
        %v1777 = vsel %vm1773, %v1761, %v1776
        %v1778 = vsel %vm1772, %v1775, %v1777
        %v1779 = vsel %vm1771, %v1758, %v1761
        %v1780 = vsel %vm1774, %v1767, 920167782
        %v1781 = vsel %vm1773, %v1764, %v1780
        %v1782 = vsel %vm1772, %v1779, %v1781
        %v1783 = vsel %vm1771, %v1761, %v1764
        %v1784 = vsel %vm1774, %v1770, 1326507024
        %v1785 = vsel %vm1773, %v1767, %v1784
        %v1786 = vsel %vm1772, %v1783, %v1785
        %v1787 = vshll.u32 %v1747, 8
        %v1788 = vmul.u32.u64.compose %v1787, %v1786
        %v1789 = vextract.low.u32 %v1788
        %v1790 = vextract.high.u32 %v1788
        %v1791 = vmul.u32.u64.compose %v1787, %v1782
        %v1792 = vextract.low.u32 %v1791
        %v1793 = vextract.high.u32 %v1791
        %v1794 = vmul.u32 %v1787, %v1778
        %v1795 = vadd.s32 %v1790, %v1792
        %vm1796 = vc.u32 %v1790, %v1792
        %v1797 = vadd.s32 %v1793, 1
        %v1798 = vsel %vm1796, %v1797, %v1793
        %v1799 = vadd.s32 %v1794, %v1798
        %v1800 = vadd.s32 %v1799, 536870912
        %v1801 = vshrl.u32 %v1800, 30
        %v1802 = vshll.u32 %v1801, 30
        %v1803 = vsub.s32 %v1799, %v1802
        %vm1804 = vcmp.lt.s32.totalorder %v1803, 0
        %v1805 = vsub.s32 0, %v1803
        %v1806 = vsel %vm1804, %v1805, %v1803
        %v1807 = vclz %v1806
        %v1808 = vsub.s32 %v1807, 2
        %vm1809 = vcmp.gt.s32.totalorder 0, %v1808
        %v1810 = vsel %vm1809, 0, %v1808
        %v1811 = vsub.s32 32, %v1810
        %v1812 = vshll.u32 %v1803, %v1810
        %v1813 = vshrl.u32 %v1795, %v1811
        %v1814 = vor.u32 %v1812, %v1813
        %v1815 = vsub.s32 4294967266, %v1810
        %v1816 = vadd.s32 %v1815, 127
        %v1817 = vshll.u32 %v1816, 23
        %v1818 = vor.u32 4788187, %v1817
        %v1819 = vand.u32 2147483647, %v1818
        %v1821 = vcvt.s32.f32 %v1814
        %v1822 = vmul.f32 %v1821, %v1819
        %v1823 = vxor.u32 %v1822, 2147483648
        %v1824 = vsel %vm1741, %v1823, %v1822
        %v1825 = vsub.s32 4, %v1801
        %v1826 = vsel %vm1741, %v1825, %v1801
        %v1827 = vsel %vm1740, %v392, %v1824
        %v1828 = vsel %vm1740, 0, %v1826
        %v1829 = vcosq.f32.pop %v1827
        %v1830 = vsinq.f32.pop %v1827
        %vm1831 = vweird.f32 %v392
        %v1832 = vadd.s32 %v1828, 3
        %v1833 = vand.u32 %v1832, 3
        %vm1834 = vcmp.lt.s32.totalorder %v1833, 2
        %vm1835 = vcmp.eq.s32.totalorder %v1833, 0
        %v1836 = vxor.u32 %v1830, 2147483648
        %v1837 = vsel %vm1835, %v1829, %v1836
        %vm1838 = vcmp.eq.s32.totalorder %v1833, 2
        %v1839 = vxor.u32 %v1829, 2147483648
        %v1840 = vsel %vm1838, %v1839, %v1830
        %v1841 = vsel %vm1834, %v1837, %v1840
        %v1842 = vsel %vm1831, nan, %v1841
        %v1843 = vand.u32 2147483647, %v393
        %vm1844 = vcmp.le.f32.partialorder %v1843, 0.7853982
        %vm1845 = vcmp.lt.s32.totalorder %v393, 0
        %v1846 = vand.u32 %v393, 2139095040
        %v1847 = vshrl.u32 %v1846, 23
        %v1848 = vsub.s32 %v1847, 127
        %v1849 = vand.u32 2147483647, %v393
        %v1850 = vand.u32 %v1849, 8388607
        %v1851 = vor.u32 %v1850, 8388608
        %v1852 = vsub.s32 0, %v1851
        %v1853 = vadd.s32 %v1848, 1
        %vm1854 = vcmp.gt.s32.totalorder %v1853, 0
        %v1855 = vsel %vm1854, %v1853, 0
        %v1856 = vshrl.u32 %v1855, 5
        %v1857 = vand.u32 %v1855, 31
        %v1858 = vsub.s32 32, %v1857
        %v1859 = vshrl.u32 683565275, %v1858
        %v1860 = vshll.u32 683565275, %v1857
        %v1861 = vshrl.u32 2475754826, %v1858
        %v1862 = vor.u32 %v1860, %v1861
        %v1863 = vshll.u32 2475754826, %v1857
        %v1864 = vshrl.u32 2131351028, %v1858
        %v1865 = vor.u32 %v1863, %v1864
        %v1866 = vshll.u32 2131351028, %v1857
        %v1867 = vshrl.u32 2102212464, %v1858
        %v1868 = vor.u32 %v1866, %v1867
        %v1869 = vshll.u32 2102212464, %v1857
        %v1870 = vshrl.u32 920167782, %v1858
        %v1871 = vor.u32 %v1869, %v1870
        %v1872 = vshll.u32 920167782, %v1857
        %v1873 = vshrl.u32 1326507024, %v1858
        %v1874 = vor.u32 %v1872, %v1873
        %vm1875 = vcmp.lt.s32.totalorder %v1856, 1
        %vm1876 = vcmp.lt.s32.totalorder %v1856, 2
        %vm1877 = vcmp.lt.s32.totalorder %v1856, 3
        %vm1878 = vcmp.lt.s32.totalorder %v1856, 4
        %v1879 = vsel %vm1875, %v1859, %v1862
        %v1880 = vsel %vm1878, %v1868, 2102212464
        %v1881 = vsel %vm1877, %v1865, %v1880
        %v1882 = vsel %vm1876, %v1879, %v1881
        %v1883 = vsel %vm1875, %v1862, %v1865
        %v1884 = vsel %vm1878, %v1871, 920167782
        %v1885 = vsel %vm1877, %v1868, %v1884
        %v1886 = vsel %vm1876, %v1883, %v1885
        %v1887 = vsel %vm1875, %v1865, %v1868
        %v1888 = vsel %vm1878, %v1874, 1326507024
        %v1889 = vsel %vm1877, %v1871, %v1888
        %v1890 = vsel %vm1876, %v1887, %v1889
        %v1891 = vshll.u32 %v1851, 8
        %v1892 = vmul.u32.u64.compose %v1891, %v1890
        %v1893 = vextract.low.u32 %v1892
        %v1894 = vextract.high.u32 %v1892
        %v1895 = vmul.u32.u64.compose %v1891, %v1886
        %v1896 = vextract.low.u32 %v1895
        %v1897 = vextract.high.u32 %v1895
        %v1898 = vmul.u32 %v1891, %v1882
        %v1899 = vadd.s32 %v1894, %v1896
        %vm1900 = vc.u32 %v1894, %v1896
        %v1901 = vadd.s32 %v1897, 1
        %v1902 = vsel %vm1900, %v1901, %v1897
        %v1903 = vadd.s32 %v1898, %v1902
        %v1904 = vadd.s32 %v1903, 536870912
        %v1905 = vshrl.u32 %v1904, 30
        %v1906 = vshll.u32 %v1905, 30
        %v1907 = vsub.s32 %v1903, %v1906
        %vm1908 = vcmp.lt.s32.totalorder %v1907, 0
        %v1909 = vsub.s32 0, %v1907
        %v1910 = vsel %vm1908, %v1909, %v1907
        %v1911 = vclz %v1910
        %v1912 = vsub.s32 %v1911, 2
        %vm1913 = vcmp.gt.s32.totalorder 0, %v1912
        %v1914 = vsel %vm1913, 0, %v1912
        %v1915 = vsub.s32 32, %v1914
        %v1916 = vshll.u32 %v1907, %v1914
        %v1917 = vshrl.u32 %v1899, %v1915
        %v1918 = vor.u32 %v1916, %v1917
        %v1919 = vsub.s32 4294967266, %v1914
        %v1920 = vadd.s32 %v1919, 127
        %v1921 = vshll.u32 %v1920, 23
        %v1922 = vor.u32 4788187, %v1921
        %v1923 = vand.u32 2147483647, %v1922
        %v1925 = vcvt.s32.f32 %v1918
        %v1926 = vmul.f32 %v1925, %v1923
        %v1927 = vxor.u32 %v1926, 2147483648
        %v1928 = vsel %vm1845, %v1927, %v1926
        %v1929 = vsub.s32 4, %v1905
        %v1930 = vsel %vm1845, %v1929, %v1905
        %v1931 = vsel %vm1844, %v393, %v1928
        %v1932 = vsel %vm1844, 0, %v1930
        %v1933 = vcosq.f32.pop %v1931
        %v1934 = vsinq.f32.pop %v1931
        %vm1935 = vweird.f32 %v393
        %v1936 = vadd.s32 %v1932, 3
        %v1937 = vand.u32 %v1936, 3
        %vm1938 = vcmp.lt.s32.totalorder %v1937, 2
        %vm1939 = vcmp.eq.s32.totalorder %v1937, 0
        %v1940 = vxor.u32 %v1934, 2147483648
        %v1941 = vsel %vm1939, %v1933, %v1940
        %vm1942 = vcmp.eq.s32.totalorder %v1937, 2
        %v1943 = vxor.u32 %v1933, 2147483648
        %v1944 = vsel %vm1942, %v1943, %v1934
        %v1945 = vsel %vm1938, %v1941, %v1944
        %v1946 = vsel %vm1935, nan, %v1945
        %v1947 = vand.u32 2147483647, %v394
        %vm1948 = vcmp.le.f32.partialorder %v1947, 0.7853982
        %vm1949 = vcmp.lt.s32.totalorder %v394, 0
        %v1950 = vand.u32 %v394, 2139095040
        %v1951 = vshrl.u32 %v1950, 23
        %v1952 = vsub.s32 %v1951, 127
        %v1953 = vand.u32 2147483647, %v394
        %v1954 = vand.u32 %v1953, 8388607
        %v1955 = vor.u32 %v1954, 8388608
        %v1956 = vsub.s32 0, %v1955
        %v1957 = vadd.s32 %v1952, 1
        %vm1958 = vcmp.gt.s32.totalorder %v1957, 0
        %v1959 = vsel %vm1958, %v1957, 0
        %v1960 = vshrl.u32 %v1959, 5
        %v1961 = vand.u32 %v1959, 31
        %v1962 = vsub.s32 32, %v1961
        %v1963 = vshrl.u32 683565275, %v1962
        %v1964 = vshll.u32 683565275, %v1961
        %v1965 = vshrl.u32 2475754826, %v1962
        %v1966 = vor.u32 %v1964, %v1965
        %v1967 = vshll.u32 2475754826, %v1961
        %v1968 = vshrl.u32 2131351028, %v1962
        %v1969 = vor.u32 %v1967, %v1968
        %v1970 = vshll.u32 2131351028, %v1961
        %v1971 = vshrl.u32 2102212464, %v1962
        %v1972 = vor.u32 %v1970, %v1971
        %v1973 = vshll.u32 2102212464, %v1961
        %v1974 = vshrl.u32 920167782, %v1962
        %v1975 = vor.u32 %v1973, %v1974
        %v1976 = vshll.u32 920167782, %v1961
        %v1977 = vshrl.u32 1326507024, %v1962
        %v1978 = vor.u32 %v1976, %v1977
        %vm1979 = vcmp.lt.s32.totalorder %v1960, 1
        %vm1980 = vcmp.lt.s32.totalorder %v1960, 2
        %vm1981 = vcmp.lt.s32.totalorder %v1960, 3
        %vm1982 = vcmp.lt.s32.totalorder %v1960, 4
        %v1983 = vsel %vm1979, %v1963, %v1966
        %v1984 = vsel %vm1982, %v1972, 2102212464
        %v1985 = vsel %vm1981, %v1969, %v1984
        %v1986 = vsel %vm1980, %v1983, %v1985
        %v1987 = vsel %vm1979, %v1966, %v1969
        %v1988 = vsel %vm1982, %v1975, 920167782
        %v1989 = vsel %vm1981, %v1972, %v1988
        %v1990 = vsel %vm1980, %v1987, %v1989
        %v1991 = vsel %vm1979, %v1969, %v1972
        %v1992 = vsel %vm1982, %v1978, 1326507024
        %v1993 = vsel %vm1981, %v1975, %v1992
        %v1994 = vsel %vm1980, %v1991, %v1993
        %v1995 = vshll.u32 %v1955, 8
        %v1996 = vmul.u32.u64.compose %v1995, %v1994
        %v1997 = vextract.low.u32 %v1996
        %v1998 = vextract.high.u32 %v1996
        %v1999 = vmul.u32.u64.compose %v1995, %v1990
        %v2000 = vextract.low.u32 %v1999
        %v2001 = vextract.high.u32 %v1999
        %v2002 = vmul.u32 %v1995, %v1986
        %v2003 = vadd.s32 %v1998, %v2000
        %vm2004 = vc.u32 %v1998, %v2000
        %v2005 = vadd.s32 %v2001, 1
        %v2006 = vsel %vm2004, %v2005, %v2001
        %v2007 = vadd.s32 %v2002, %v2006
        %v2008 = vadd.s32 %v2007, 536870912
        %v2009 = vshrl.u32 %v2008, 30
        %v2010 = vshll.u32 %v2009, 30
        %v2011 = vsub.s32 %v2007, %v2010
        %vm2012 = vcmp.lt.s32.totalorder %v2011, 0
        %v2013 = vsub.s32 0, %v2011
        %v2014 = vsel %vm2012, %v2013, %v2011
        %v2015 = vclz %v2014
        %v2016 = vsub.s32 %v2015, 2
        %vm2017 = vcmp.gt.s32.totalorder 0, %v2016
        %v2018 = vsel %vm2017, 0, %v2016
        %v2019 = vsub.s32 32, %v2018
        %v2020 = vshll.u32 %v2011, %v2018
        %v2021 = vshrl.u32 %v2003, %v2019
        %v2022 = vor.u32 %v2020, %v2021
        %v2023 = vsub.s32 4294967266, %v2018
        %v2024 = vadd.s32 %v2023, 127
        %v2025 = vshll.u32 %v2024, 23
        %v2026 = vor.u32 4788187, %v2025
        %v2027 = vand.u32 2147483647, %v2026
        %v2029 = vcvt.s32.f32 %v2022
        %v2030 = vmul.f32 %v2029, %v2027
        %v2031 = vxor.u32 %v2030, 2147483648
        %v2032 = vsel %vm1949, %v2031, %v2030
        %v2033 = vsub.s32 4, %v2009
        %v2034 = vsel %vm1949, %v2033, %v2009
        %v2035 = vsel %vm1948, %v394, %v2032
        %v2036 = vsel %vm1948, 0, %v2034
        %v2037 = vcosq.f32.pop %v2035
        %v2038 = vsinq.f32.pop %v2035
        %vm2039 = vweird.f32 %v394
        %v2040 = vadd.s32 %v2036, 3
        %v2041 = vand.u32 %v2040, 3
        %vm2042 = vcmp.lt.s32.totalorder %v2041, 2
        %vm2043 = vcmp.eq.s32.totalorder %v2041, 0
        %v2044 = vxor.u32 %v2038, 2147483648
        %v2045 = vsel %vm2043, %v2037, %v2044
        %vm2046 = vcmp.eq.s32.totalorder %v2041, 2
        %v2047 = vxor.u32 %v2037, 2147483648
        %v2048 = vsel %vm2046, %v2047, %v2038
        %v2049 = vsel %vm2042, %v2045, %v2048
        %v2050 = vsel %vm2039, nan, %v2049
        %v2051 = vld [vmem:[%s288] sm:$0xff]
        %v2052 = vld [vmem:[%s288 + $0x8] sm:$0xff]
        %v2053 = vld [vmem:[%s288 + $0x10] sm:$0xff]
        %v2054 = vld [vmem:[%s288 + $0x18] sm:$0xff]
        %v2055 = vld [vmem:[%s288 + $0x20] sm:$0xff]
        %v2056 = vld [vmem:[%s288 + $0x28] sm:$0xff]
        %v2057 = vld [vmem:[%s288 + $0x30] sm:$0xff]
        %v2058 = vld [vmem:[%s288 + $0x38] sm:$0xff]
        %2059 = vrot.lane.b32.xlu0 %v2051, 64
        %v2060 = vpop.permute.xlu0 %2059
        %2061 = vrot.lane.b32.xlu0 %v2052, 64
        %v2062 = vpop.permute.xlu0 %2061
        %2063 = vrot.lane.b32.xlu0 %v2053, 64
        %v2064 = vpop.permute.xlu0 %2063
        %2065 = vrot.lane.b32.xlu0 %v2054, 64
        %v2066 = vpop.permute.xlu0 %2065
        %2067 = vrot.lane.b32.xlu0 %v2055, 64
        %v2068 = vpop.permute.xlu0 %2067
        %2069 = vrot.lane.b32.xlu0 %v2056, 64
        %v2070 = vpop.permute.xlu0 %2069
        %2071 = vrot.lane.b32.xlu0 %v2057, 64
        %v2072 = vpop.permute.xlu0 %2071
        %2073 = vrot.lane.b32.xlu0 %v2058, 64
        %v2074 = vpop.permute.xlu0 %2073
        %v2075 = vlaneseq
        %v2076 = vand.u32 %v2075, 127
        %vm2077 = vcmp.lt.s32.totalorder %v2076, 64
        %v2078 = vsel %vm2077, -1.0, 1.0
        %v2079 = vmul.f32 %v2051, %v497
        %v2080 = vmul.f32 %v2052, %v600
        %v2081 = vmul.f32 %v2053, %v703
        %v2082 = vmul.f32 %v2054, %v806
        %v2083 = vmul.f32 %v2055, %v909
        %v2084 = vmul.f32 %v2056, %v1012
        %v2085 = vmul.f32 %v2057, %v1115
        %v2086 = vmul.f32 %v2058, %v1218
        %v2087 = vmul.f32 %v2078, %v2060
        %v2088 = vmul.f32 %v2078, %v2062
        %v2089 = vmul.f32 %v2078, %v2064
        %v2090 = vmul.f32 %v2078, %v2066
        %v2091 = vmul.f32 %v2078, %v2068
        %v2092 = vmul.f32 %v2078, %v2070
        %v2093 = vmul.f32 %v2078, %v2072
        %v2094 = vmul.f32 %v2078, %v2074
        %v2095 = vmul.f32 %v2087, %v1322
        %v2096 = vmul.f32 %v2088, %v1426
        %v2097 = vmul.f32 %v2089, %v1530
        %v2098 = vmul.f32 %v2090, %v1634
        %v2099 = vmul.f32 %v2091, %v1738
        %v2100 = vmul.f32 %v2092, %v1842
        %v2101 = vmul.f32 %v2093, %v1946
        %v2102 = vmul.f32 %v2094, %v2050
        %v2103 = vadd.f32 %v2079, %v2095
        %v2104 = vadd.f32 %v2080, %v2096
        %v2105 = vadd.f32 %v2081, %v2097
        %v2106 = vadd.f32 %v2082, %v2098
        %v2107 = vadd.f32 %v2083, %v2099
        %v2108 = vadd.f32 %v2084, %v2100
        %v2109 = vadd.f32 %v2085, %v2101
        %v2110 = vadd.f32 %v2086, %v2102
        %v2111 = vld [vmem:[%s3] sm:$0xf]
        %v2112 = vld [vmem:[%s3 + $0x4] sm:$0xf]
        %v2113 = vld [vmem:[%s3 + $0x8] sm:$0xf]
        %v2114 = vld [vmem:[%s3 + $0xc] sm:$0xf]
        %v2115 = vld [vmem:[%s3 + $0x10] sm:$0xf]
        %v2116 = vld [vmem:[%s3 + $0x14] sm:$0xf]
        %v2117 = vld [vmem:[%s3 + $0x18] sm:$0xf]
        %v2118 = vld [vmem:[%s3 + $0x1c] sm:$0xf]
        %v2119 = vld [vmem:[%s3 + $0x20] sm:$0xf]
        %v2120 = vld [vmem:[%s3 + $0x24] sm:$0xf]
        %v2121 = vld [vmem:[%s3 + $0x28] sm:$0xf]
        %v2122 = vld [vmem:[%s3 + $0x2c] sm:$0xf]
        %v2123 = vld [vmem:[%s3 + $0x30] sm:$0xf]
        %v2124 = vld [vmem:[%s3 + $0x34] sm:$0xf]
        %v2125 = vld [vmem:[%s3 + $0x38] sm:$0xf]
        %v2126 = vld [vmem:[%s3 + $0x3c] sm:$0xf]
        %v2127 = vld [vmem:[%s4] sm:$0xf]
        %v2128 = vld [vmem:[%s4 + $0x4] sm:$0xf]
        %v2129 = vld [vmem:[%s4 + $0x8] sm:$0xf]
        %v2130 = vld [vmem:[%s4 + $0xc] sm:$0xf]
        %v2131 = vld [vmem:[%s4 + $0x10] sm:$0xf]
        %v2132 = vld [vmem:[%s4 + $0x14] sm:$0xf]
        %v2133 = vld [vmem:[%s4 + $0x18] sm:$0xf]
        %v2134 = vld [vmem:[%s4 + $0x1c] sm:$0xf]
        %v2135 = vpack.c.bf16 %v2104, %v2103
        %v2136 = vpack.c.bf16 %v2106, %v2105
        %v2137 = vpack.c.bf16 %v2108, %v2107
        %v2138 = vpack.c.bf16 %v2110, %v2109
        %v2155 = vunpack.c.l.b16 %v2111
        %v2156 = vunpack.c.l.b16 %v2112
        %v2157 = vunpack.c.l.b16 %v2113
        %v2158 = vunpack.c.l.b16 %v2114
        %v2159 = vunpack.c.l.b16 %v2115
        %v2160 = vunpack.c.l.b16 %v2116
        %v2161 = vunpack.c.l.b16 %v2117
        %v2162 = vunpack.c.l.b16 %v2118
        %v2163 = vunpack.c.l.b16 %v2119
        %v2164 = vunpack.c.l.b16 %v2120
        %v2165 = vunpack.c.l.b16 %v2121
        %v2166 = vunpack.c.l.b16 %v2122
        %v2167 = vunpack.c.l.b16 %v2123
        %v2168 = vunpack.c.l.b16 %v2124
        %v2169 = vunpack.c.l.b16 %v2125
        %v2170 = vunpack.c.l.b16 %v2126
        %v2171 = vpack.c.b16 %v2156, %v2155
        %v2172 = vpack.c.b16 %v2158, %v2157
        %v2173 = vpack.c.b16 %v2160, %v2159
        %v2174 = vpack.c.b16 %v2162, %v2161
        %v2175 = vpack.c.b16 %v2164, %v2163
        %v2176 = vpack.c.b16 %v2166, %v2165
        %v2177 = vpack.c.b16 %v2168, %v2167
        %v2178 = vpack.c.b16 %v2170, %v2169
        %vm2179 = vcmask 523264
        %v2181 = vsel %vm2179, %v2171, 0
        %v2184 = vsel %vm2179, %v2172, 0
        %v2187 = vsel %vm2179, %v2173, 0
        %v2190 = vsel %vm2179, %v2174, 0
        %v2193 = vsel %vm2179, %v2175, 0
        %v2196 = vsel %vm2179, %v2176, 0
        %v2199 = vsel %vm2179, %v2177, 0
        %v2202 = vsel %vm2179, %v2178, 0
        %2204 = vmatprep.subr.bf16.mxu0 0
        %2205 = vmatpush1.bf16.msra.mxu0 %v2135
        %2206 = vmatprep.subr.bf16.mxu0 0
        %2207 = vmatpush1.bf16.msra.mxu0 %v2136
        %2208 = vmatprep.subr.bf16.mxu0 0
        %2209 = vmatpush1.bf16.msra.mxu0 %v2137
        %2210 = vmatprep.subr.bf16.mxu0 0
        %2211 = vmatpush1.bf16.msra.mxu0 %v2138
        %2212 = vmatprep.subr.bf16.mxu0 0
        %2213 = vmatpush1.bf16.msra.mxu0 0
        %2214 = vmatprep.subr.bf16.mxu0 0
        %2215 = vmatpush1.bf16.msra.mxu0 0
        %2216 = vmatprep.subr.bf16.mxu0 0
        %2217 = vmatpush1.bf16.msra.mxu0 0
        %2218 = vmatprep.subr.bf16.mxu0 0
        %2219 = vmatpush1.bf16.msra.mxu0 0
        %2220 = vmatprep.subr.bf16.mxu0 0
        %2221 = vmatpush1.bf16.msra.mxu0 0
        %2222 = vmatprep.subr.bf16.mxu0 0
        %2223 = vmatpush1.bf16.msra.mxu0 0
        %2224 = vmatprep.subr.bf16.mxu0 0
        %2225 = vmatpush1.bf16.msra.mxu0 0
        %2226 = vmatprep.subr.bf16.mxu0 0
        %2227 = vmatpush1.bf16.msra.mxu0 0
        %2228 = vmatprep.subr.bf16.mxu0 0
        %2229 = vmatpush1.bf16.msra.mxu0 0
        %2230 = vmatprep.subr.bf16.mxu0 0
        %2231 = vmatpush1.bf16.msra.mxu0 0
        %2232 = vmatprep.subr.bf16.mxu0 0
        %2233 = vmatpush1.bf16.msra.mxu0 0
        %2234 = vmatprep.subr.bf16.mxu0 0
        %2235 = vmatpush1.bf16.msra.mxu0 0
        %2236 = vmatprep.mubr.bf16.mxu0 0
        %2237 = vmatmul.mubr.bf16.gmra.mrb[0].mxu0 %v2181
        %v2238 = vpop.f32.mrb[0].mxu0
        %v2239 = vadd.f32 0.0, %v2238
        %v2240 = vpop.f32.mrb[0].mxu0
        %v2241 = vpop.f32.mrb[0].mxu0
        %v2242 = vadd.f32 0.0, %v2241
        %v2243 = vpop.f32.mrb[0].mxu0
        %2244 = vmatprep.mubr.bf16.mxu0 0
        %2245 = vmatmul.mubr.bf16.gmra.mrb[0].mxu0 %v2184
        %v2246 = vpop.f32.mrb[0].mxu0
        %v2247 = vadd.f32 0.0, %v2246
        %v2248 = vpop.f32.mrb[0].mxu0
        %v2249 = vpop.f32.mrb[0].mxu0
        %v2250 = vadd.f32 0.0, %v2249
        %v2251 = vpop.f32.mrb[0].mxu0
        %2252 = vmatprep.mubr.bf16.mxu0 0
        %2253 = vmatmul.mubr.bf16.gmra.mrb[0].mxu0 %v2187
        %v2254 = vpop.f32.mrb[0].mxu0
        %v2255 = vadd.f32 0.0, %v2254
        %v2256 = vpop.f32.mrb[0].mxu0
        %v2257 = vpop.f32.mrb[0].mxu0
        %v2258 = vadd.f32 0.0, %v2257
        %v2259 = vpop.f32.mrb[0].mxu0
        %2260 = vmatprep.mubr.bf16.mxu0 0
        %2261 = vmatmul.mubr.bf16.gmra.mrb[0].mxu0 %v2190
        %v2262 = vpop.f32.mrb[0].mxu0
        %v2263 = vadd.f32 0.0, %v2262
        %v2264 = vpop.f32.mrb[0].mxu0
        %v2265 = vpop.f32.mrb[0].mxu0
        %v2266 = vadd.f32 0.0, %v2265
        %v2267 = vpop.f32.mrb[0].mxu0
        %2268 = vmatprep.mubr.bf16.mxu0 0
        %2269 = vmatmul.mubr.bf16.gmra.mrb[0].mxu0 %v2193
        %v2270 = vpop.f32.mrb[0].mxu0
        %v2271 = vadd.f32 0.0, %v2270
        %v2272 = vpop.f32.mrb[0].mxu0
        %v2273 = vpop.f32.mrb[0].mxu0
        %v2274 = vadd.f32 0.0, %v2273
        %v2275 = vpop.f32.mrb[0].mxu0
        %2276 = vmatprep.mubr.bf16.mxu0 0
        %2277 = vmatmul.mubr.bf16.gmra.mrb[0].mxu0 %v2196
        %v2278 = vpop.f32.mrb[0].mxu0
        %v2279 = vadd.f32 0.0, %v2278
        %v2280 = vpop.f32.mrb[0].mxu0
        %v2281 = vpop.f32.mrb[0].mxu0
        %v2282 = vadd.f32 0.0, %v2281
        %v2283 = vpop.f32.mrb[0].mxu0
        %2284 = vmatprep.mubr.bf16.mxu0 0
        %2285 = vmatmul.mubr.bf16.gmra.mrb[0].mxu0 %v2199
        %v2286 = vpop.f32.mrb[0].mxu0
        %v2287 = vadd.f32 0.0, %v2286
        %v2288 = vpop.f32.mrb[0].mxu0
        %v2289 = vpop.f32.mrb[0].mxu0
        %v2290 = vadd.f32 0.0, %v2289
        %v2291 = vpop.f32.mrb[0].mxu0
        %2292 = vmatprep.mubr.bf16.mxu0 0
        %2293 = vmatmul.mubr.bf16.gmra.mrb[0].mxu0 %v2202
        %v2294 = vpop.f32.mrb[0].mxu0
        %v2295 = vadd.f32 0.0, %v2294
        %v2296 = vpop.f32.mrb[0].mxu0
        %v2297 = vpop.f32.mrb[0].mxu0
        %v2298 = vadd.f32 0.0, %v2297
        %v2299 = vpop.f32.mrb[0].mxu0
        %2300 = vdwg.mxu0
        %2309 = vrot.lane.b32.xlu0 %v2271, 64
        %v2310 = vpop.permute.xlu0 %2309
        %2311 = vrot.lane.b32.xlu0 %v2274, 64
        %v2312 = vpop.permute.xlu0 %2311
        %2313 = vrot.lane.b32.xlu0 %v2279, 64
        %v2314 = vpop.permute.xlu0 %2313
        %2315 = vrot.lane.b32.xlu0 %v2282, 64
        %v2316 = vpop.permute.xlu0 %2315
        %2317 = vrot.lane.b32.xlu0 %v2287, 64
        %v2318 = vpop.permute.xlu0 %2317
        %2319 = vrot.lane.b32.xlu0 %v2290, 64
        %v2320 = vpop.permute.xlu0 %2319
        %2321 = vrot.lane.b32.xlu0 %v2295, 64
        %v2322 = vpop.permute.xlu0 %2321
        %2323 = vrot.lane.b32.xlu0 %v2298, 64
        %v2324 = vpop.permute.xlu0 %2323
        %v2333 = vsub.f32 %v2239, %v2310
        %v2334 = vsub.f32 %v2242, %v2312
        %v2335 = vsub.f32 %v2247, %v2314
        %v2336 = vsub.f32 %v2250, %v2316
        %v2337 = vsub.f32 %v2255, %v2318
        %v2338 = vsub.f32 %v2258, %v2320
        %v2339 = vsub.f32 %v2263, %v2322
        %v2340 = vsub.f32 %v2266, %v2324
        %v2341 = vadd.f32 %v2239, %v2310
        %v2342 = vadd.f32 %v2242, %v2312
        %v2343 = vadd.f32 %v2247, %v2314
        %v2344 = vadd.f32 %v2250, %v2316
        %v2345 = vadd.f32 %v2255, %v2318
        %v2346 = vadd.f32 %v2258, %v2320
        %v2347 = vadd.f32 %v2263, %v2322
        %v2348 = vadd.f32 %v2266, %v2324
        %2357 = vrot.lane.b32.xlu0 %v2341, 64
        %v2358 = vpop.permute.xlu0 %2357
        %2359 = vrot.lane.b32.xlu0 %v2342, 64
        %v2360 = vpop.permute.xlu0 %2359
        %2361 = vrot.lane.b32.xlu0 %v2343, 64
        %v2362 = vpop.permute.xlu0 %2361
        %2363 = vrot.lane.b32.xlu0 %v2344, 64
        %v2364 = vpop.permute.xlu0 %2363
        %2365 = vrot.lane.b32.xlu0 %v2345, 64
        %v2366 = vpop.permute.xlu0 %2365
        %2367 = vrot.lane.b32.xlu0 %v2346, 64
        %v2368 = vpop.permute.xlu0 %2367
        %2369 = vrot.lane.b32.xlu0 %v2347, 64
        %v2370 = vpop.permute.xlu0 %2369
        %2371 = vrot.lane.b32.xlu0 %v2348, 64
        %v2372 = vpop.permute.xlu0 %2371
        %v2381 = vpack.c.bf16 %v2334, %v2333
        %v2382 = vpack.c.bf16 %v2336, %v2335
        %v2383 = vpack.c.bf16 %v2338, %v2337
        %v2384 = vpack.c.bf16 %v2340, %v2339
        %v2385 = vpack.c.bf16 %v2360, %v2358
        %v2386 = vpack.c.bf16 %v2364, %v2362
        %v2387 = vpack.c.bf16 %v2368, %v2366
        %v2388 = vpack.c.bf16 %v2372, %v2370
        %v2397 = vunpack.c.l.b16 %v2127
        %v2398 = vunpack.c.l.b16 %v2128
        %v2399 = vunpack.c.l.b16 %v2129
        %v2400 = vunpack.c.l.b16 %v2130
        %v2401 = vunpack.c.l.b16 %v2131
        %v2402 = vunpack.c.l.b16 %v2132
        %v2403 = vunpack.c.l.b16 %v2133
        %v2404 = vunpack.c.l.b16 %v2134
        %v2405 = vpack.c.b16 %v2398, %v2397
        %v2406 = vpack.c.b16 %v2400, %v2399
        %v2407 = vpack.c.b16 %v2402, %v2401
        %v2408 = vpack.c.b16 %v2404, %v2403
        %v2414 = vsel %vm2179, %v2381, 0
        %v2417 = vsel %vm2179, %v2382, 0
        %v2420 = vsel %vm2179, %v2383, 0
        %v2423 = vsel %vm2179, %v2384, 0
        %v2426 = vsel %vm2179, %v2385, 0
        %v2429 = vsel %vm2179, %v2386, 0
        %v2432 = vsel %vm2179, %v2387, 0
        %v2435 = vsel %vm2179, %v2388, 0
        %2437 = vmatprep.subr.bf16.mxu0 0
        %2438 = vmatpush1.bf16.msra.mxu0 %v2405
        %2439 = vmatprep.subr.bf16.mxu0 0
        %2440 = vmatpush1.bf16.msra.mxu0 %v2406
        %2441 = vmatprep.subr.bf16.mxu0 0
        %2442 = vmatpush1.bf16.msra.mxu0 %v2407
        %2443 = vmatprep.subr.bf16.mxu0 0
        %2444 = vmatpush1.bf16.msra.mxu0 %v2408
        %2445 = vmatprep.subr.bf16.mxu0 0
        %2446 = vmatpush1.bf16.msra.mxu0 0
        %2447 = vmatprep.subr.bf16.mxu0 0
        %2448 = vmatpush1.bf16.msra.mxu0 0
        %2449 = vmatprep.subr.bf16.mxu0 0
        %2450 = vmatpush1.bf16.msra.mxu0 0
        %2451 = vmatprep.subr.bf16.mxu0 0
        %2452 = vmatpush1.bf16.msra.mxu0 0
        %2453 = vmatprep.subr.bf16.mxu0 0
        %2454 = vmatpush1.bf16.msra.mxu0 0
        %2455 = vmatprep.subr.bf16.mxu0 0
        %2456 = vmatpush1.bf16.msra.mxu0 0
        %2457 = vmatprep.subr.bf16.mxu0 0
        %2458 = vmatpush1.bf16.msra.mxu0 0
        %2459 = vmatprep.subr.bf16.mxu0 0
        %2460 = vmatpush1.bf16.msra.mxu0 0
        %2461 = vmatprep.subr.bf16.mxu0 0
        %2462 = vmatpush1.bf16.msra.mxu0 0
        %2463 = vmatprep.subr.bf16.mxu0 0
        %2464 = vmatpush1.bf16.msra.mxu0 0
        %2465 = vmatprep.subr.bf16.mxu0 0
        %2466 = vmatpush1.bf16.msra.mxu0 0
        %2467 = vmatprep.subr.bf16.mxu0 0
        %2468 = vmatpush1.bf16.msra.mxu0 0
        %2469 = vmatprep.mubr.bf16.mxu0 0
        %2470 = vmatmul.mubr.bf16.gmra.mrb[0].mxu0 %v2414
        %v2471 = vpop.f32.mrb[0].mxu0
        %v2472 = vadd.f32 0.0, %v2471
        %v2473 = vpop.f32.mrb[0].mxu0
        %v2474 = vpop.f32.mrb[0].mxu0
        %v2475 = vadd.f32 0.0, %v2474
        %v2476 = vpop.f32.mrb[0].mxu0
        %2477 = vmatprep.mubr.bf16.mxu0 0
        %2478 = vmatmul.mubr.bf16.gmra.mrb[0].mxu0 %v2417
        %v2479 = vpop.f32.mrb[0].mxu0
        %v2480 = vadd.f32 0.0, %v2479
        %v2481 = vpop.f32.mrb[0].mxu0
        %v2482 = vpop.f32.mrb[0].mxu0
        %v2483 = vadd.f32 0.0, %v2482
        %v2484 = vpop.f32.mrb[0].mxu0
        %2485 = vmatprep.mubr.bf16.mxu0 0
        %2486 = vmatmul.mubr.bf16.gmra.mrb[0].mxu0 %v2420
        %v2487 = vpop.f32.mrb[0].mxu0
        %v2488 = vadd.f32 0.0, %v2487
        %v2489 = vpop.f32.mrb[0].mxu0
        %v2490 = vpop.f32.mrb[0].mxu0
        %v2491 = vadd.f32 0.0, %v2490
        %v2492 = vpop.f32.mrb[0].mxu0
        %2493 = vmatprep.mubr.bf16.mxu0 0
        %2494 = vmatmul.mubr.bf16.gmra.mrb[0].mxu0 %v2423
        %v2495 = vpop.f32.mrb[0].mxu0
        %v2496 = vadd.f32 0.0, %v2495
        %v2497 = vpop.f32.mrb[0].mxu0
        %v2498 = vpop.f32.mrb[0].mxu0
        %v2499 = vadd.f32 0.0, %v2498
        %v2500 = vpop.f32.mrb[0].mxu0
        %2501 = vmatprep.mubr.bf16.mxu0 0
        %2502 = vmatmul.mubr.bf16.gmra.mrb[0].mxu0 %v2426
        %v2503 = vpop.f32.mrb[0].mxu0
        %v2504 = vadd.f32 0.0, %v2503
        %v2505 = vpop.f32.mrb[0].mxu0
        %v2506 = vpop.f32.mrb[0].mxu0
        %v2507 = vadd.f32 0.0, %v2506
        %v2508 = vpop.f32.mrb[0].mxu0
        %2509 = vmatprep.mubr.bf16.mxu0 0
        %2510 = vmatmul.mubr.bf16.gmra.mrb[0].mxu0 %v2429
        %v2511 = vpop.f32.mrb[0].mxu0
        %v2512 = vadd.f32 0.0, %v2511
        %v2513 = vpop.f32.mrb[0].mxu0
        %v2514 = vpop.f32.mrb[0].mxu0
        %v2515 = vadd.f32 0.0, %v2514
        %v2516 = vpop.f32.mrb[0].mxu0
        %2517 = vmatprep.mubr.bf16.mxu0 0
        %2518 = vmatmul.mubr.bf16.gmra.mrb[0].mxu0 %v2432
        %v2519 = vpop.f32.mrb[0].mxu0
        %v2520 = vadd.f32 0.0, %v2519
        %v2521 = vpop.f32.mrb[0].mxu0
        %v2522 = vpop.f32.mrb[0].mxu0
        %v2523 = vadd.f32 0.0, %v2522
        %v2524 = vpop.f32.mrb[0].mxu0
        %2525 = vmatprep.mubr.bf16.mxu0 0
        %2526 = vmatmul.mubr.bf16.gmra.mrb[0].mxu0 %v2435
        %v2527 = vpop.f32.mrb[0].mxu0
        %v2528 = vadd.f32 0.0, %v2527
        %v2529 = vpop.f32.mrb[0].mxu0
        %v2530 = vpop.f32.mrb[0].mxu0
        %v2531 = vadd.f32 0.0, %v2530
        %v2532 = vpop.f32.mrb[0].mxu0
        %2533 = vdwg.mxu0
        %2542 = vrot.lane.b32.xlu0 %v2504, 64
        %v2543 = vpop.permute.xlu0 %2542
        %2544 = vrot.lane.b32.xlu0 %v2507, 64
        %v2545 = vpop.permute.xlu0 %2544
        %2546 = vrot.lane.b32.xlu0 %v2512, 64
        %v2547 = vpop.permute.xlu0 %2546
        %2548 = vrot.lane.b32.xlu0 %v2515, 64
        %v2549 = vpop.permute.xlu0 %2548
        %2550 = vrot.lane.b32.xlu0 %v2520, 64
        %v2551 = vpop.permute.xlu0 %2550
        %2552 = vrot.lane.b32.xlu0 %v2523, 64
        %v2553 = vpop.permute.xlu0 %2552
        %2554 = vrot.lane.b32.xlu0 %v2528, 64
        %v2555 = vpop.permute.xlu0 %2554
        %2556 = vrot.lane.b32.xlu0 %v2531, 64
        %v2557 = vpop.permute.xlu0 %2556
        %v2566 = vsub.f32 %v2472, %v2543
        %v2567 = vsub.f32 %v2475, %v2545
        %v2568 = vsub.f32 %v2480, %v2547
        %v2569 = vsub.f32 %v2483, %v2549
        %v2570 = vsub.f32 %v2488, %v2551
        %v2571 = vsub.f32 %v2491, %v2553
        %v2572 = vsub.f32 %v2496, %v2555
        %v2573 = vsub.f32 %v2499, %v2557
        %v2574 = vadd.f32 %v2472, %v2543
        %v2575 = vadd.f32 %v2475, %v2545
        %v2576 = vadd.f32 %v2480, %v2547
        %v2577 = vadd.f32 %v2483, %v2549
        %v2578 = vadd.f32 %v2488, %v2551
        %v2579 = vadd.f32 %v2491, %v2553
        %v2580 = vadd.f32 %v2496, %v2555
        %v2581 = vadd.f32 %v2499, %v2557
        %v2582 = vld [vmem:[#allocation6] sm:$0xff]
        %v2583 = vld [vmem:[#allocation6 + $0x8] sm:$0xff]
        %v2584 = vld [vmem:[#allocation6 + $0x10] sm:$0xff]
        %v2585 = vld [vmem:[#allocation6 + $0x18] sm:$0xff]
        %v2586 = vld [vmem:[#allocation6 + $0x20] sm:$0xff]
        %v2587 = vld [vmem:[#allocation6 + $0x28] sm:$0xff]
        %v2588 = vld [vmem:[#allocation6 + $0x30] sm:$0xff]
        %v2589 = vld [vmem:[#allocation6 + $0x38] sm:$0xff]
        %v2590 = vld [vmem:[#allocation8] sm:$0xff]
        %v2591 = vld [vmem:[#allocation8 + $0x8] sm:$0xff]
        %v2592 = vld [vmem:[#allocation8 + $0x10] sm:$0xff]
        %v2593 = vld [vmem:[#allocation8 + $0x18] sm:$0xff]
        %v2594 = vld [vmem:[#allocation8 + $0x20] sm:$0xff]
        %v2595 = vld [vmem:[#allocation8 + $0x28] sm:$0xff]
        %v2596 = vld [vmem:[#allocation8 + $0x30] sm:$0xff]
        %v2597 = vld [vmem:[#allocation8 + $0x38] sm:$0xff]
        %v2598 = vmul.f32 %v2566, %v2582
        %v2599 = vmul.f32 %v2567, %v2583
        %v2600 = vmul.f32 %v2568, %v2584
        %v2601 = vmul.f32 %v2569, %v2585
        %v2602 = vmul.f32 %v2570, %v2586
        %v2603 = vmul.f32 %v2571, %v2587
        %v2604 = vmul.f32 %v2572, %v2588
        %v2605 = vmul.f32 %v2573, %v2589
        %2614 = vrot.lane.b32.xlu0 %v2590, 64
        %v2615 = vpop.permute.xlu0 %2614
        %2616 = vrot.lane.b32.xlu0 %v2591, 64
        %v2617 = vpop.permute.xlu0 %2616
        %2618 = vrot.lane.b32.xlu0 %v2592, 64
        %v2619 = vpop.permute.xlu0 %2618
        %2620 = vrot.lane.b32.xlu0 %v2593, 64
        %v2621 = vpop.permute.xlu0 %2620
        %2622 = vrot.lane.b32.xlu0 %v2594, 64
        %v2623 = vpop.permute.xlu0 %2622
        %2624 = vrot.lane.b32.xlu0 %v2595, 64
        %v2625 = vpop.permute.xlu0 %2624
        %2626 = vrot.lane.b32.xlu0 %v2596, 64
        %v2627 = vpop.permute.xlu0 %2626
        %2628 = vrot.lane.b32.xlu0 %v2597, 64
        %v2629 = vpop.permute.xlu0 %2628
        %v2638 = vmul.f32 %v2574, %v2615
        %v2639 = vmul.f32 %v2575, %v2617
        %v2640 = vmul.f32 %v2576, %v2619
        %v2641 = vmul.f32 %v2577, %v2621
        %v2642 = vmul.f32 %v2578, %v2623
        %v2643 = vmul.f32 %v2579, %v2625
        %v2644 = vmul.f32 %v2580, %v2627
        %v2645 = vmul.f32 %v2581, %v2629
        %2654 = vrot.lane.b32.xlu0 %v2638, 64
        %v2655 = vpop.permute.xlu0 %2654
        %2656 = vrot.lane.b32.xlu0 %v2639, 64
        %v2657 = vpop.permute.xlu0 %2656
        %2658 = vrot.lane.b32.xlu0 %v2640, 64
        %v2659 = vpop.permute.xlu0 %2658
        %2660 = vrot.lane.b32.xlu0 %v2641, 64
        %v2661 = vpop.permute.xlu0 %2660
        %2662 = vrot.lane.b32.xlu0 %v2642, 64
        %v2663 = vpop.permute.xlu0 %2662
        %2664 = vrot.lane.b32.xlu0 %v2643, 64
        %v2665 = vpop.permute.xlu0 %2664
        %2666 = vrot.lane.b32.xlu0 %v2644, 64
        %v2667 = vpop.permute.xlu0 %2666
        %2668 = vrot.lane.b32.xlu0 %v2645, 64
        %v2669 = vpop.permute.xlu0 %2668
        %v2678 = vsub.f32 %v2598, %v2655
        %v2679 = vsub.f32 %v2599, %v2657
        %v2680 = vsub.f32 %v2600, %v2659
        %v2681 = vsub.f32 %v2601, %v2661
        %v2682 = vsub.f32 %v2602, %v2663
        %v2683 = vsub.f32 %v2603, %v2665
        %v2684 = vsub.f32 %v2604, %v2667
        %v2685 = vsub.f32 %v2605, %v2669
        %v2686 = vmul.f32 %v2566, %v2590
        %v2687 = vmul.f32 %v2567, %v2591
        %v2688 = vmul.f32 %v2568, %v2592
        %v2689 = vmul.f32 %v2569, %v2593
        %v2690 = vmul.f32 %v2570, %v2594
        %v2691 = vmul.f32 %v2571, %v2595
        %v2692 = vmul.f32 %v2572, %v2596
        %v2693 = vmul.f32 %v2573, %v2597
        %2702 = vrot.lane.b32.xlu0 %v2582, 64
        %v2703 = vpop.permute.xlu0 %2702
        %2704 = vrot.lane.b32.xlu0 %v2583, 64
        %v2705 = vpop.permute.xlu0 %2704
        %2706 = vrot.lane.b32.xlu0 %v2584, 64
        %v2707 = vpop.permute.xlu0 %2706
        %2708 = vrot.lane.b32.xlu0 %v2585, 64
        %v2709 = vpop.permute.xlu0 %2708
        %2710 = vrot.lane.b32.xlu0 %v2586, 64
        %v2711 = vpop.permute.xlu0 %2710
        %2712 = vrot.lane.b32.xlu0 %v2587, 64
        %v2713 = vpop.permute.xlu0 %2712
        %2714 = vrot.lane.b32.xlu0 %v2588, 64
        %v2715 = vpop.permute.xlu0 %2714
        %2716 = vrot.lane.b32.xlu0 %v2589, 64
        %v2717 = vpop.permute.xlu0 %2716
        %v2726 = vmul.f32 %v2574, %v2703
        %v2727 = vmul.f32 %v2575, %v2705
        %v2728 = vmul.f32 %v2576, %v2707
        %v2729 = vmul.f32 %v2577, %v2709
        %v2730 = vmul.f32 %v2578, %v2711
        %v2731 = vmul.f32 %v2579, %v2713
        %v2732 = vmul.f32 %v2580, %v2715
        %v2733 = vmul.f32 %v2581, %v2717
        %2742 = vrot.lane.b32.xlu0 %v2726, 64
        %v2743 = vpop.permute.xlu0 %2742
        %2744 = vrot.lane.b32.xlu0 %v2727, 64
        %v2745 = vpop.permute.xlu0 %2744
        %2746 = vrot.lane.b32.xlu0 %v2728, 64
        %v2747 = vpop.permute.xlu0 %2746
        %2748 = vrot.lane.b32.xlu0 %v2729, 64
        %v2749 = vpop.permute.xlu0 %2748
        %2750 = vrot.lane.b32.xlu0 %v2730, 64
        %v2751 = vpop.permute.xlu0 %2750
        %2752 = vrot.lane.b32.xlu0 %v2731, 64
        %v2753 = vpop.permute.xlu0 %2752
        %2754 = vrot.lane.b32.xlu0 %v2732, 64
        %v2755 = vpop.permute.xlu0 %2754
        %2756 = vrot.lane.b32.xlu0 %v2733, 64
        %v2757 = vpop.permute.xlu0 %2756
        %v2766 = vadd.f32 %v2686, %v2743
        %v2767 = vadd.f32 %v2687, %v2745
        %v2768 = vadd.f32 %v2688, %v2747
        %v2769 = vadd.f32 %v2689, %v2749
        %v2770 = vadd.f32 %v2690, %v2751
        %v2771 = vadd.f32 %v2691, %v2753
        %v2772 = vadd.f32 %v2692, %v2755
        %v2773 = vadd.f32 %v2693, %v2757
        %v2774 = vsub.f32 0.0, %v2766
        %v2775 = vsub.f32 0.0, %v2767
        %v2776 = vsub.f32 0.0, %v2768
        %v2777 = vsub.f32 0.0, %v2769
        %v2778 = vsub.f32 0.0, %v2770
        %v2779 = vsub.f32 0.0, %v2771
        %v2780 = vsub.f32 0.0, %v2772
        %v2781 = vsub.f32 0.0, %v2773
        %2790 = vrot.lane.b32.xlu0 %v2774, 64
        %v2791 = vpop.permute.xlu0 %2790
        %2792 = vrot.lane.b32.xlu0 %v2775, 64
        %v2793 = vpop.permute.xlu0 %2792
        %2794 = vrot.lane.b32.xlu0 %v2776, 64
        %v2795 = vpop.permute.xlu0 %2794
        %2796 = vrot.lane.b32.xlu0 %v2777, 64
        %v2797 = vpop.permute.xlu0 %2796
        %2798 = vrot.lane.b32.xlu0 %v2778, 64
        %v2799 = vpop.permute.xlu0 %2798
        %2800 = vrot.lane.b32.xlu0 %v2779, 64
        %v2801 = vpop.permute.xlu0 %2800
        %2802 = vrot.lane.b32.xlu0 %v2780, 64
        %v2803 = vpop.permute.xlu0 %2802
        %2804 = vrot.lane.b32.xlu0 %v2781, 64
        %v2805 = vpop.permute.xlu0 %2804
        %v2814 = vsel %vm2179, %v2678, %v2791
        %v2815 = vsel %vm2179, %v2679, %v2793
        %v2816 = vsel %vm2179, %v2680, %v2795
        %v2817 = vsel %vm2179, %v2681, %v2797
        %v2818 = vsel %vm2179, %v2682, %v2799
        %v2819 = vsel %vm2179, %v2683, %v2801
        %v2820 = vsel %vm2179, %v2684, %v2803
        %v2821 = vsel %vm2179, %v2685, %v2805
        %v2822 = vpack.c.bf16 %v2815, %v2814
        %v2823 = vpack.c.bf16 %v2817, %v2816
        %v2824 = vpack.c.bf16 %v2819, %v2818
        %v2825 = vpack.c.bf16 %v2821, %v2820
        %2826 = vmatprep.subr.bf16.mxu0 0
        %2827 = vmatpush1.bf16.msra.mxu0 %v2822
        %2828 = vmatprep.subr.bf16.mxu0 0
        %2829 = vmatpush1.bf16.msra.mxu0 %v2823
        %2830 = vmatprep.subr.bf16.mxu0 0
        %2831 = vmatpush1.bf16.msra.mxu0 %v2824
        %2832 = vmatprep.subr.bf16.mxu0 0
        %2833 = vmatpush1.bf16.msra.mxu0 %v2825
        %2834 = vmatprep.subr.bf16.mxu0 0
        %2835 = vmatpush1.bf16.msra.mxu0 0
        %2836 = vmatprep.subr.bf16.mxu0 0
        %2837 = vmatpush1.bf16.msra.mxu0 0
        %2838 = vmatprep.subr.bf16.mxu0 0
        %2839 = vmatpush1.bf16.msra.mxu0 0
        %2840 = vmatprep.subr.bf16.mxu0 0
        %2841 = vmatpush1.bf16.msra.mxu0 0
        %2842 = vmatprep.subr.bf16.mxu0 0
        %2843 = vmatpush1.bf16.msra.mxu0 0
        %2844 = vmatprep.subr.bf16.mxu0 0
        %2845 = vmatpush1.bf16.msra.mxu0 0
        %2846 = vmatprep.subr.bf16.mxu0 0
        %2847 = vmatpush1.bf16.msra.mxu0 0
        %2848 = vmatprep.subr.bf16.mxu0 0
        %2849 = vmatpush1.bf16.msra.mxu0 0
        %2850 = vmatprep.subr.bf16.mxu0 0
        %2851 = vmatpush1.bf16.msra.mxu0 0
        %2852 = vmatprep.subr.bf16.mxu0 0
        %2853 = vmatpush1.bf16.msra.mxu0 0
        %2854 = vmatprep.subr.bf16.mxu0 0
        %2855 = vmatpush1.bf16.msra.mxu0 0
        %2856 = vmatprep.subr.bf16.mxu0 0
        %2857 = vmatpush1.bf16.msra.mxu0 0
        %2858 = vmatprep.mubr.bf16.mxu0 0
        %2859 = vmatmul.mubr.bf16.gmra.mrb[0].mxu0 %v2181
        %v2860 = vpop.f32.mrb[0].mxu0
        %v2861 = vadd.f32 0.0, %v2860
        %v2862 = vpop.f32.mrb[0].mxu0
        %v2863 = vpop.f32.mrb[0].mxu0
        %v2864 = vadd.f32 0.0, %v2863
        %v2865 = vpop.f32.mrb[0].mxu0
        %2866 = vmatprep.mubr.bf16.mxu0 0
        %2867 = vmatmul.mubr.bf16.gmra.mrb[0].mxu0 %v2184
        %v2868 = vpop.f32.mrb[0].mxu0
        %v2869 = vadd.f32 0.0, %v2868
        %v2870 = vpop.f32.mrb[0].mxu0
        %v2871 = vpop.f32.mrb[0].mxu0
        %v2872 = vadd.f32 0.0, %v2871
        %v2873 = vpop.f32.mrb[0].mxu0
        %2874 = vmatprep.mubr.bf16.mxu0 0
        %2875 = vmatmul.mubr.bf16.gmra.mrb[0].mxu0 %v2187
        %v2876 = vpop.f32.mrb[0].mxu0
        %v2877 = vadd.f32 0.0, %v2876
        %v2878 = vpop.f32.mrb[0].mxu0
        %v2879 = vpop.f32.mrb[0].mxu0
        %v2880 = vadd.f32 0.0, %v2879
        %v2881 = vpop.f32.mrb[0].mxu0
        %2882 = vmatprep.mubr.bf16.mxu0 0
        %2883 = vmatmul.mubr.bf16.gmra.mrb[0].mxu0 %v2190
        %v2884 = vpop.f32.mrb[0].mxu0
        %v2885 = vadd.f32 0.0, %v2884
        %v2886 = vpop.f32.mrb[0].mxu0
        %v2887 = vpop.f32.mrb[0].mxu0
        %v2888 = vadd.f32 0.0, %v2887
        %v2889 = vpop.f32.mrb[0].mxu0
        %2890 = vmatprep.mubr.bf16.mxu0 0
        %2891 = vmatmul.mubr.bf16.gmra.mrb[0].mxu0 %v2193
        %v2892 = vpop.f32.mrb[0].mxu0
        %v2893 = vadd.f32 0.0, %v2892
        %v2894 = vpop.f32.mrb[0].mxu0
        %v2895 = vpop.f32.mrb[0].mxu0
        %v2896 = vadd.f32 0.0, %v2895
        %v2897 = vpop.f32.mrb[0].mxu0
        %2898 = vmatprep.mubr.bf16.mxu0 0
        %2899 = vmatmul.mubr.bf16.gmra.mrb[0].mxu0 %v2196
        %v2900 = vpop.f32.mrb[0].mxu0
        %v2901 = vadd.f32 0.0, %v2900
        %v2902 = vpop.f32.mrb[0].mxu0
        %v2903 = vpop.f32.mrb[0].mxu0
        %v2904 = vadd.f32 0.0, %v2903
        %v2905 = vpop.f32.mrb[0].mxu0
        %2906 = vmatprep.mubr.bf16.mxu0 0
        %2907 = vmatmul.mubr.bf16.gmra.mrb[0].mxu0 %v2199
        %v2908 = vpop.f32.mrb[0].mxu0
        %v2909 = vadd.f32 0.0, %v2908
        %v2910 = vpop.f32.mrb[0].mxu0
        %v2911 = vpop.f32.mrb[0].mxu0
        %v2912 = vadd.f32 0.0, %v2911
        %v2913 = vpop.f32.mrb[0].mxu0
        %2914 = vmatprep.mubr.bf16.mxu0 0
        %2915 = vmatmul.mubr.bf16.gmra.mrb[0].mxu0 %v2202
        %v2916 = vpop.f32.mrb[0].mxu0
        %v2917 = vadd.f32 0.0, %v2916
        %v2918 = vpop.f32.mrb[0].mxu0
        %v2919 = vpop.f32.mrb[0].mxu0
        %v2920 = vadd.f32 0.0, %v2919
        %v2921 = vpop.f32.mrb[0].mxu0
        %2922 = vdwg.mxu0
        %2931 = vrot.lane.b32.xlu0 %v2893, 64
        %v2932 = vpop.permute.xlu0 %2931
        %2933 = vrot.lane.b32.xlu0 %v2896, 64
        %v2934 = vpop.permute.xlu0 %2933
        %2935 = vrot.lane.b32.xlu0 %v2901, 64
        %v2936 = vpop.permute.xlu0 %2935
        %2937 = vrot.lane.b32.xlu0 %v2904, 64
        %v2938 = vpop.permute.xlu0 %2937
        %2939 = vrot.lane.b32.xlu0 %v2909, 64
        %v2940 = vpop.permute.xlu0 %2939
        %2941 = vrot.lane.b32.xlu0 %v2912, 64
        %v2942 = vpop.permute.xlu0 %2941
        %2943 = vrot.lane.b32.xlu0 %v2917, 64
        %v2944 = vpop.permute.xlu0 %2943
        %2945 = vrot.lane.b32.xlu0 %v2920, 64
        %v2946 = vpop.permute.xlu0 %2945
        %v2955 = vsub.f32 %v2861, %v2932
        %v2956 = vsub.f32 %v2864, %v2934
        %v2957 = vsub.f32 %v2869, %v2936
        %v2958 = vsub.f32 %v2872, %v2938
        %v2959 = vsub.f32 %v2877, %v2940
        %v2960 = vsub.f32 %v2880, %v2942
        %v2961 = vsub.f32 %v2885, %v2944
        %v2962 = vsub.f32 %v2888, %v2946
        %v2963 = vadd.f32 %v2861, %v2932
        %v2964 = vadd.f32 %v2864, %v2934
        %v2965 = vadd.f32 %v2869, %v2936
        %v2966 = vadd.f32 %v2872, %v2938
        %v2967 = vadd.f32 %v2877, %v2940
        %v2968 = vadd.f32 %v2880, %v2942
        %v2969 = vadd.f32 %v2885, %v2944
        %v2970 = vadd.f32 %v2888, %v2946
        %2979 = vrot.lane.b32.xlu0 %v2963, 64
        %v2980 = vpop.permute.xlu0 %2979
        %2981 = vrot.lane.b32.xlu0 %v2964, 64
        %v2982 = vpop.permute.xlu0 %2981
        %2983 = vrot.lane.b32.xlu0 %v2965, 64
        %v2984 = vpop.permute.xlu0 %2983
        %2985 = vrot.lane.b32.xlu0 %v2966, 64
        %v2986 = vpop.permute.xlu0 %2985
        %2987 = vrot.lane.b32.xlu0 %v2967, 64
        %v2988 = vpop.permute.xlu0 %2987
        %2989 = vrot.lane.b32.xlu0 %v2968, 64
        %v2990 = vpop.permute.xlu0 %2989
        %2991 = vrot.lane.b32.xlu0 %v2969, 64
        %v2992 = vpop.permute.xlu0 %2991
        %2993 = vrot.lane.b32.xlu0 %v2970, 64
        %v2994 = vpop.permute.xlu0 %2993
        %v3003 = vpack.c.bf16 %v2956, %v2955
        %v3004 = vpack.c.bf16 %v2958, %v2957
        %v3005 = vpack.c.bf16 %v2960, %v2959
        %v3006 = vpack.c.bf16 %v2962, %v2961
        %v3007 = vpack.c.bf16 %v2982, %v2980
        %v3008 = vpack.c.bf16 %v2986, %v2984
        %v3009 = vpack.c.bf16 %v2990, %v2988
        %v3010 = vpack.c.bf16 %v2994, %v2992
        %v3012 = vsel %vm2179, %v3003, 0
        %v3015 = vsel %vm2179, %v3004, 0
        %v3018 = vsel %vm2179, %v3005, 0
        %v3021 = vsel %vm2179, %v3006, 0
        %v3024 = vsel %vm2179, %v3007, 0
        %v3027 = vsel %vm2179, %v3008, 0
        %v3030 = vsel %vm2179, %v3009, 0
        %v3033 = vsel %vm2179, %v3010, 0
        %3035 = vmatprep.subr.bf16.mxu0 0
        %3036 = vmatpush1.bf16.msra.mxu0 %v2405
        %3037 = vmatprep.subr.bf16.mxu0 0
        %3038 = vmatpush1.bf16.msra.mxu0 %v2406
        %3039 = vmatprep.subr.bf16.mxu0 0
        %3040 = vmatpush1.bf16.msra.mxu0 %v2407
        %3041 = vmatprep.subr.bf16.mxu0 0
        %3042 = vmatpush1.bf16.msra.mxu0 %v2408
        %3043 = vmatprep.subr.bf16.mxu0 0
        %3044 = vmatpush1.bf16.msra.mxu0 0
        %3045 = vmatprep.subr.bf16.mxu0 0
        %3046 = vmatpush1.bf16.msra.mxu0 0
        %3047 = vmatprep.subr.bf16.mxu0 0
        %3048 = vmatpush1.bf16.msra.mxu0 0
        %3049 = vmatprep.subr.bf16.mxu0 0
        %3050 = vmatpush1.bf16.msra.mxu0 0
        %3051 = vmatprep.subr.bf16.mxu0 0
        %3052 = vmatpush1.bf16.msra.mxu0 0
        %3053 = vmatprep.subr.bf16.mxu0 0
        %3054 = vmatpush1.bf16.msra.mxu0 0
        %3055 = vmatprep.subr.bf16.mxu0 0
        %3056 = vmatpush1.bf16.msra.mxu0 0
        %3057 = vmatprep.subr.bf16.mxu0 0
        %3058 = vmatpush1.bf16.msra.mxu0 0
        %3059 = vmatprep.subr.bf16.mxu0 0
        %3060 = vmatpush1.bf16.msra.mxu0 0
        %3061 = vmatprep.subr.bf16.mxu0 0
        %3062 = vmatpush1.bf16.msra.mxu0 0
        %3063 = vmatprep.subr.bf16.mxu0 0
        %3064 = vmatpush1.bf16.msra.mxu0 0
        %3065 = vmatprep.subr.bf16.mxu0 0
        %3066 = vmatpush1.bf16.msra.mxu0 0
        %3067 = vmatprep.mubr.bf16.mxu0 0
        %3068 = vmatmul.mubr.bf16.gmra.mrb[0].mxu0 %v3012
        %v3069 = vpop.f32.mrb[0].mxu0
        %v3070 = vadd.f32 0.0, %v3069
        %v3071 = vpop.f32.mrb[0].mxu0
        %v3072 = vpop.f32.mrb[0].mxu0
        %v3073 = vadd.f32 0.0, %v3072
        %v3074 = vpop.f32.mrb[0].mxu0
        %3075 = vmatprep.mubr.bf16.mxu0 0
        %3076 = vmatmul.mubr.bf16.gmra.mrb[0].mxu0 %v3015
        %v3077 = vpop.f32.mrb[0].mxu0
        %v3078 = vadd.f32 0.0, %v3077
        %v3079 = vpop.f32.mrb[0].mxu0
        %v3080 = vpop.f32.mrb[0].mxu0
        %v3081 = vadd.f32 0.0, %v3080
        %v3082 = vpop.f32.mrb[0].mxu0
        %3083 = vmatprep.mubr.bf16.mxu0 0
        %3084 = vmatmul.mubr.bf16.gmra.mrb[0].mxu0 %v3018
        %v3085 = vpop.f32.mrb[0].mxu0
        %v3086 = vadd.f32 0.0, %v3085
        %v3087 = vpop.f32.mrb[0].mxu0
        %v3088 = vpop.f32.mrb[0].mxu0
        %v3089 = vadd.f32 0.0, %v3088
        %v3090 = vpop.f32.mrb[0].mxu0
        %3091 = vmatprep.mubr.bf16.mxu0 0
        %3092 = vmatmul.mubr.bf16.gmra.mrb[0].mxu0 %v3021
        %v3093 = vpop.f32.mrb[0].mxu0
        %v3094 = vadd.f32 0.0, %v3093
        %v3095 = vpop.f32.mrb[0].mxu0
        %v3096 = vpop.f32.mrb[0].mxu0
        %v3097 = vadd.f32 0.0, %v3096
        %v3098 = vpop.f32.mrb[0].mxu0
        %3099 = vmatprep.mubr.bf16.mxu0 0
        %3100 = vmatmul.mubr.bf16.gmra.mrb[0].mxu0 %v3024
        %v3101 = vpop.f32.mrb[0].mxu0
        %v3102 = vadd.f32 0.0, %v3101
        %v3103 = vpop.f32.mrb[0].mxu0
        %v3104 = vpop.f32.mrb[0].mxu0
        %v3105 = vadd.f32 0.0, %v3104
        %v3106 = vpop.f32.mrb[0].mxu0
        %3107 = vmatprep.mubr.bf16.mxu0 0
        %3108 = vmatmul.mubr.bf16.gmra.mrb[0].mxu0 %v3027
        %v3109 = vpop.f32.mrb[0].mxu0
        %v3110 = vadd.f32 0.0, %v3109
        %v3111 = vpop.f32.mrb[0].mxu0
        %v3112 = vpop.f32.mrb[0].mxu0
        %v3113 = vadd.f32 0.0, %v3112
        %v3114 = vpop.f32.mrb[0].mxu0
        %3115 = vmatprep.mubr.bf16.mxu0 0
        %3116 = vmatmul.mubr.bf16.gmra.mrb[0].mxu0 %v3030
        %v3117 = vpop.f32.mrb[0].mxu0
        %v3118 = vadd.f32 0.0, %v3117
        %v3119 = vpop.f32.mrb[0].mxu0
        %v3120 = vpop.f32.mrb[0].mxu0
        %v3121 = vadd.f32 0.0, %v3120
        %v3122 = vpop.f32.mrb[0].mxu0
        %3123 = vmatprep.mubr.bf16.mxu0 0
        %3124 = vmatmul.mubr.bf16.gmra.mrb[0].mxu0 %v3033
        %v3125 = vpop.f32.mrb[0].mxu0
        %v3126 = vadd.f32 0.0, %v3125
        %v3127 = vpop.f32.mrb[0].mxu0
        %v3128 = vpop.f32.mrb[0].mxu0
        %v3129 = vadd.f32 0.0, %v3128
        %v3130 = vpop.f32.mrb[0].mxu0
        %3131 = vdwg.mxu0
        %3140 = vrot.lane.b32.xlu0 %v3102, 64
        %v3141 = vpop.permute.xlu0 %3140
        %3142 = vrot.lane.b32.xlu0 %v3105, 64
        %v3143 = vpop.permute.xlu0 %3142
        %3144 = vrot.lane.b32.xlu0 %v3110, 64
        %v3145 = vpop.permute.xlu0 %3144
        %3146 = vrot.lane.b32.xlu0 %v3113, 64
        %v3147 = vpop.permute.xlu0 %3146
        %3148 = vrot.lane.b32.xlu0 %v3118, 64
        %v3149 = vpop.permute.xlu0 %3148
        %3150 = vrot.lane.b32.xlu0 %v3121, 64
        %v3151 = vpop.permute.xlu0 %3150
        %3152 = vrot.lane.b32.xlu0 %v3126, 64
        %v3153 = vpop.permute.xlu0 %3152
        %3154 = vrot.lane.b32.xlu0 %v3129, 64
        %v3155 = vpop.permute.xlu0 %3154
        %v3164 = vsub.f32 %v3070, %v3141
        %v3165 = vsub.f32 %v3073, %v3143
        %v3166 = vsub.f32 %v3078, %v3145
        %v3167 = vsub.f32 %v3081, %v3147
        %v3168 = vsub.f32 %v3086, %v3149
        %v3169 = vsub.f32 %v3089, %v3151
        %v3170 = vsub.f32 %v3094, %v3153
        %v3171 = vsub.f32 %v3097, %v3155
        %v3172 = vadd.f32 %v3070, %v3141
        %v3173 = vadd.f32 %v3073, %v3143
        %v3174 = vadd.f32 %v3078, %v3145
        %v3175 = vadd.f32 %v3081, %v3147
        %v3176 = vadd.f32 %v3086, %v3149
        %v3177 = vadd.f32 %v3089, %v3151
        %v3178 = vadd.f32 %v3094, %v3153
        %v3179 = vadd.f32 %v3097, %v3155
        %v3180 = vsub.f32 0.0, %v3172
        %v3181 = vsub.f32 0.0, %v3173
        %v3182 = vsub.f32 0.0, %v3174
        %v3183 = vsub.f32 0.0, %v3175
        %v3184 = vsub.f32 0.0, %v3176
        %v3185 = vsub.f32 0.0, %v3177
        %v3186 = vsub.f32 0.0, %v3178
        %v3187 = vsub.f32 0.0, %v3179
        %v3188 = vsel %vm2179, %v3164, %v3180
        %v3189 = vsel %vm2179, %v3165, %v3181
        %v3190 = vsel %vm2179, %v3166, %v3182
        %v3191 = vsel %vm2179, %v3167, %v3183
        %v3192 = vsel %vm2179, %v3168, %v3184
        %v3193 = vsel %vm2179, %v3169, %v3185
        %v3194 = vsel %vm2179, %v3170, %v3186
        %v3195 = vsel %vm2179, %v3171, %v3187
        %3196 = vst [vmem:[%s326] sm:$0xff] %v3188
        %3197 = vst [vmem:[%s326 + $0x8] sm:$0xff] %v3189
        %3198 = vst [vmem:[%s326 + $0x10] sm:$0xff] %v3190
        %3199 = vst [vmem:[%s326 + $0x18] sm:$0xff] %v3191
        %3200 = vst [vmem:[%s326 + $0x20] sm:$0xff] %v3192
        %3201 = vst [vmem:[%s326 + $0x28] sm:$0xff] %v3193
        %3202 = vst [vmem:[%s326 + $0x30] sm:$0xff] %v3194
        %3203 = vst [vmem:[%s326 + $0x38] sm:$0xff] %v3195
        %s3204 = sand.u32 %s186, 1
        %s3205 = scalar_lea.sflag [#allocation5], %s3204
        %s3206 = sand.u32 %s186, 1
        %s3207 = smul.addr %s3206, 64
        %s3208 = scalar_lea.vmem [#allocation9], %s3207
        // Predicated region
        $region61: #{tpu_custom_call.1} parent=47 // pred_check
          %p3209 = pneg %p196
        $region62: #{tpu_custom_call.1} parent=47 // pred_check_branch
          %3211 = sbr.rel (%p3209) target = $region64
        $region63: #{tpu_custom_call.1} parent=47 // pred_region
          %s3213 = ssub.s32 1024, 1024
          %3214 = vsyncadd %s3205, %s3213
          %s3215 = smul.addr %s26, 8
          %s3216 = smul.addr %s3215, 128
          %s3217 = scalar_lea.hbm %s7, %s3216
          %s3218 = sshll.u32 %s3208, 4
          %s3219 = int_to_ptr.vmem [resolvable:$true] %s3218
          %3224 = dma.vmem_to_hbm [thread:$0]  %s3219, 1024, %s3217, %s3205, 128, 128, 8
        $region64: #{tpu_custom_call.1} parent=47 // pred_fallthru
          _
      $region48: #{tpu_custom_call.1} parent=5 // pred_fallthru
        _
      %p3225 = scmp.le.s32.totalorder 2, %s21
      // Predicated region
      $region65: #{tpu_custom_call.1} parent=5 // pred_check
        %p3226 = pneg %p3225
      $region66: #{tpu_custom_call.1} parent=5 // pred_check_branch
        %3228 = sbr.rel (%p3226) target = $region68
      $region67: #{tpu_custom_call.1} parent=5 // pred_region
        %s3229 = ssub.s32 %s21, 2
        // Predicated region
        $region69: #{tpu_custom_call.1} parent=67 // pred_check
          %p3230 = pneg %p202
        $region70: #{tpu_custom_call.1} parent=67 // pred_check_branch
          %3232 = sbr.rel (%p3230) target = $region72
        $region71: #{tpu_custom_call.1} parent=67 // pred_region
          %s3233 = sand.u32 %s187, 1
          %s3234 = scalar_lea.sflag [#allocation5], %s3233
          %s3235 = sand.u32 %s187, 1
          %s3236 = smul.addr %s3235, 64
          %s3237 = scalar_lea.vmem [#allocation9], %s3236
          %3238 = dma.done %s3234, 1024
        $region72: #{tpu_custom_call.1} parent=67 // pred_fallthru
          _
      $region68: #{tpu_custom_call.1} parent=5 // pred_fallthru
        _
    $region6: #{tpu_custom_call.1} parent=1 // loop_footer
      %s25 = sadd.s32 1, %s21
    $region7: #{tpu_custom_call.1} parent=1 // loop_footer_branch
      %20 = sbr.rel target = $region3
    $region8: #{tpu_custom_call.1} parent=1 // loop_exit
      _
    %3239 = vsyncpa [#allocation4], 1
    %s3240 = scalar_lea.sflag [#allocation4], 1
    %3241 = vsyncpa %s3240, 1
    %3242 = vsyncpa [#allocation7], 1
    %3243 = vsyncpa [#allocation5], 1
    %s3244 = scalar_lea.sflag [#allocation5], 1
    %3245 = vsyncpa %s3244, 1

</llo_original>
